<compile_context>
chip_gen: v7x
topology: tpu7x:2x2x1
jax: 0.10.0
libtpu: 0.0.40
codegen_flags: <defaults>
</compile_context>

<pallas_src>
import math
import functools

import jax
import jax.numpy as jnp
from jax import lax
from jax.experimental import pallas as pl
from jax.experimental.pallas import tpu as pltpu

LOGTWOPI = math.log(2.0 * math.pi)
_SQRT_2_OVER_PI = 0.7978845608028654


def _gelu_tanh(x):
    # tanh-approximate GELU (max abs err ~1e-3 vs exact); tanh lands on the EUP slot.
    return 0.5 * x * (1.0 + jnp.tanh(_SQRT_2_OVER_PI * (x + 0.044715 * x * x * x)))


def _bf16(x):
    return x.astype(jnp.bfloat16)


# --------------------------------------------------------------------------------------
# Pallas kernel: full GFN.get_trajectory_fwd trajectory in ONE invocation (no grid).
# --------------------------------------------------------------------------------------
def _gfn_traj_kernel(
    s0_ref, noise_ref, dts_ref, sqdts_ref, lpf_c_ref, bm_coef_ref, inv_sq_bv_ref, lpb_b_ref,
    temb_ref,
    wt1_ref, bt1_ref, wt2_ref, bt2_ref, wj1b_ref, bfold_ref,
    ws1_ref, bs1_ref, wsj_ref, wj2_ref, bj2_ref, wj3_ref, bj3_ref,
    packed_ref,
    tproj_ref,
    *, T, BP, dim, log_var_range, log_pf_std2, unroll_threshold=64,
):
    f32 = jnp.float32

    # ---- prologue (state-independent, off the serial chain): TimeEncoding MLP for all
    # T steps at once, pre-folded into the JointPolicy first layer:
    #   tproj = t_emb @ wj1_bot + (bs2 @ wj1_top + bj1)
    th = _gelu_tanh(jnp.dot(temb_ref[...], wt1_ref[...], preferred_element_type=f32)
                    + bt1_ref[...])
    temb = jnp.dot(_bf16(th), wt2_ref[...], preferred_element_type=f32) + bt2_ref[...]
    tproj_ref[...] = (jnp.dot(_bf16(temb), wj1b_ref[...], preferred_element_type=f32)
                      + bfold_ref[...])

    def step(i, s, static_first=None):
        z = noise_ref[i]            # (BP, dim) pre-drawn standard normal
        dts = dts_ref[i]            # (BP, 1)
        start = i * BP if isinstance(i, int) else pl.multiple_of(i * BP, BP)
        tproj = tproj_ref[pl.ds(start, BP), :]

        # StateEncoding layer 1
        h = _gelu_tanh(jnp.dot(_bf16(s), ws1_ref[...], preferred_element_type=f32)
                       + bs1_ref[...])
        # StateEncoding layer 2 fused with JointPolicy layer 1 (no nonlinearity between):
        #   gelu((h @ ws2 + bs2) @ wj1_top + t_emb @ wj1_bot + bj1)
        #     == gelu(h @ (ws2 @ wj1_top) + tproj)
        h = _gelu_tanh(jnp.dot(_bf16(h), wsj_ref[...], preferred_element_type=f32) + tproj)
        h = _gelu_tanh(jnp.dot(_bf16(h), wj2_ref[...], preferred_element_type=f32)
                       + bj2_ref[...])
        # merged mean/logvar head, split by static lane slice
        pfs = jnp.dot(_bf16(h), wj3_ref[...], preferred_element_type=f32) + bj3_ref[...]
        pf_mean = pfs[:, :dim]
        pflogvars = jnp.tanh(pfs[:, dim:]) * log_var_range + log_pf_std2

        # forward SDE step (exploration_std=None, pis=False path)
        s_new = s + dts * pf_mean + sqdts_ref[i] * jnp.exp(0.5 * pflogvars) * z

        # the renormalized forward noise equals z analytically -> no divide on the chain
        logpf = lpf_c_ref[i] - 0.5 * jnp.sum(z * z + pflogvars, axis=-1, keepdims=True)

        if static_first:                            # step 0: logpb defined as zero
            logpb = jnp.zeros_like(logpf)
        else:
            nb = (s - s_new * bm_coef_ref[i]) * inv_sq_bv_ref[i]
            logpb = lpb_b_ref[i] - 0.5 * jnp.sum(nb * nb, axis=-1, keepdims=True)
            if static_first is None:                # rolled loop: mask step 0 at runtime
                logpb = jnp.where(i > 0, logpb, jnp.zeros_like(logpb))

        # pack the three per-step outputs into one lane-contiguous store
        packed_ref[i] = jnp.concatenate([s_new, logpf, logpb], axis=-1)
        return s_new

    s = s0_ref[...]
    if T <= unroll_threshold:
        # full unroll: static indices, full scheduler visibility across tiny step bodies
        for i in range(T):
            s = step(i, s, static_first=(i == 0))
    else:
        lax.fori_loop(0, T, lambda i, c: step(i, c), s, unroll=4)


# --------------------------------------------------------------------------------------
# Wrapper: pad batch, precompute time-grid coefficients, call pallas_call once.
# --------------------------------------------------------------------------------------
def gfn_forward_pallas(s, ts, noise, params, flow_param, *, dim, harmonics_dim,
                       log_var_range=4.0, t_scale=1.0):
    bsz = s.shape[0]
    T = ts.shape[1] - 1
    pf_std = math.sqrt(t_scale)
    hidden_dim = params["ws1"].shape[1]
    s_emb_dim = params["ws2"].shape[1]

    # ---- pad batch to the f32 sublane multiple (8) so all vector ops/stores are full ----
    BP = max(8, -(-bsz // 8) * 8)
    pad = BP - bsz
    s0_p = s.astype(jnp.float32)
    noise_p = noise.astype(jnp.float32)
    ts_p = ts.astype(jnp.float32)
    if pad:
        s0_p = jnp.concatenate([s0_p, jnp.zeros((pad, dim), jnp.float32)], axis=0)
        noise_p = jnp.concatenate(
            [noise_p, jnp.zeros((T, pad, dim), jnp.float32)], axis=1)
        ts_p = jnp.concatenate([ts_p, jnp.broadcast_to(ts_p[:1], (pad, T + 1))], axis=0)

    t_cur = jnp.transpose(ts_p[:, :-1])          # (T, BP)
    t_next = jnp.transpose(ts_p[:, 1:])          # (T, BP)

    # ---- time-grid-only per-step coefficients (off the serial path) ----
    dts = (t_next - t_cur)[:, :, None]           # (T, BP, 1)
    t_c = t_cur[:, :, None]
    t_n = t_next[:, :, None]
    sqdts = jnp.sqrt(dts)
    lpf_c = -0.5 * dim * (LOGTWOPI + jnp.log(dts))
    bm_coef = 1.0 - dts / t_n
    step_idx = jnp.arange(T)[:, None, None]
    back_var = jnp.where(step_idx == 0, 1.0,                 # guard step 0 (logpb==0)
                         (pf_std ** 2) * dts * t_c / t_n)
    inv_sq_bv = lax.rsqrt(back_var)
    lpb_b = -0.5 * dim * (LOGTWOPI + jnp.log(back_var))

    # ---- sinusoid time features (T*BP, 2H); the TimeEncoding MLP runs in-kernel ----
    pe = jnp.arange(1, harmonics_dim + 1, dtype=jnp.float32)[None, :] * (2.0 * math.pi)
    arg = t_cur.reshape(T * BP, 1) * pe
    temb_in = jnp.concatenate([jnp.sin(arg), jnp.cos(arg)], axis=-1).astype(jnp.bfloat16)

    # ---- weight prep: fuse ws2@wj1_top, cast matmul operands to bf16 (biases stay f32) ----
    wj1_top = params["wj1"][:s_emb_dim]                                  # (s_emb, hidden)
    wsj = (params["ws2"] @ wj1_top).astype(jnp.bfloat16)                 # (hidden, hidden)
    bfold = (params["bs2"] @ wj1_top + params["bj1"]).astype(jnp.float32)
    wj1b = params["wj1"][s_emb_dim:].astype(jnp.bfloat16)                # (t_dim, hidden)

    operands = (
        s0_p, noise_p, dts, sqdts, lpf_c, bm_coef, inv_sq_bv, lpb_b,
        temb_in,
        params["wt1"].astype(jnp.bfloat16), params["bt1"].astype(jnp.float32),
        params["wt2"].astype(jnp.bfloat16), params["bt2"].astype(jnp.float32),
        wj1b, bfold,
        params["ws1"].astype(jnp.bfloat16), params["bs1"].astype(jnp.float32),
        wsj, params["wj2"].astype(jnp.bfloat16), params["bj2"].astype(jnp.float32),
        params["wj3"].astype(jnp.bfloat16), params["bj3"].astype(jnp.float32),
    )

    kernel = functools.partial(
        _gfn_traj_kernel, T=T, BP=BP, dim=dim,
        log_var_range=log_var_range, log_pf_std2=2.0 * math.log(pf_std))

    # explicit VMEM budget (whole-array-resident, gridless): inputs + output + scratch
    vmem_bytes = sum(int(x.size) * x.dtype.itemsize for x in operands)
    vmem_bytes += 4 * (T * BP * (dim + 2) + T * BP * hidden_dim)
    vmem_limit = int(min(max(2 * vmem_bytes + (4 << 20), 16 << 20), 100 << 20))

    vmem = pl.BlockSpec(memory_space=pltpu.MemorySpace.VMEM)
    packed = pl.pallas_call(
        kernel,
        out_shape=jax.ShapeDtypeStruct((T, BP, dim + 2), jnp.float32),
        in_specs=[vmem] * len(operands),
        out_specs=vmem,
        scratch_shapes=[pltpu.VMEM((T * BP, hidden_dim), jnp.float32)],
        compiler_params=pltpu.CompilerParams(vmem_limit_bytes=vmem_limit),
    )(*operands)
    # TODO(synk): for non-trivial bsz on v7x, tile the batch axis with grid=(BP//TB,) and
    #             dimension_semantics=("parallel",) to use both TensorCores / bound VMEM.

    # unpack + glue to PyTorch layout; states[:, 0] stays zero, as in the reference.
    states_steps = packed[:, :bsz, :dim]                   # (T, bsz, dim)
    logpf = jnp.transpose(packed[:, :bsz, dim])            # (bsz, T)
    logpb = jnp.transpose(packed[:, :bsz, dim + 1])        # (bsz, T)
    states = jnp.concatenate(
        [jnp.zeros((bsz, 1, dim), jnp.float32), jnp.transpose(states_steps, (1, 0, 2))],
        axis=1)                                            # (bsz, T+1, dim)
    # flow_model is a scalar Parameter (conditional_flow_model=False): logf is
    # state-independent, so it is assembled here instead of T in-kernel stores.
    logf = jnp.concatenate(
        [jnp.full((bsz, T), flow_param, dtype=jnp.float32),
         jnp.zeros((bsz, 1), jnp.float32)], axis=1)        # (bsz, T+1)
    return states, logpf, logpb, logf


# --------------------------------------------------------------------------------------
# Pure-JAX reference (mirrors the PyTorch get_trajectory_fwd with default flags, exact GELU)
# --------------------------------------------------------------------------------------
def gfn_forward_ref(s, ts, noise, params, flow_param, *, dim, harmonics_dim,
                    log_var_range=4.0, t_scale=1.0):
    gelu = lambda x: jax.nn.gelu(x, approximate=False)
    bsz = s.shape[0]
    T = ts.shape[1] - 1
    pf_std = math.sqrt(t_scale)
    pe = (jnp.arange(1, harmonics_dim + 1, dtype=jnp.float32) * 2.0 * math.pi)[None, :]

    def t_model(t):
        arg = t[:, None] * pe
        x = jnp.concatenate([jnp.sin(arg), jnp.cos(arg)], axis=-1)
        h = gelu(x @ params["wt1"] + params["bt1"])
        return h @ params["wt2"] + params["bt2"]

    def s_model(x):
        h = gelu(x @ params["ws1"] + params["bs1"])
        return h @ params["ws2"] + params["bs2"]

    def joint_model(se, te):
        x = jnp.concatenate([se, te], axis=-1)
        h = gelu(x @ params["wj1"] + params["bj1"])
        h = gelu(h @ params["wj2"] + params["bj2"])
        return h @ params["wj3"] + params["bj3"]

    logpf = jnp.zeros((bsz, T))
    logpb = jnp.zeros((bsz, T))
    logf = jnp.zeros((bsz, T + 1))
    states = jnp.zeros((bsz, T + 1, dim))
    cur = s
    for i in range(T):
        dts = ts[:, i + 1] - ts[:, i]
        pfs = joint_model(s_model(cur), t_model(ts[:, i]))
        pf_mean, logvar = pfs[:, :dim], pfs[:, dim:]
        pflogvars = jnp.tanh(logvar) * log_var_range + 2.0 * math.log(pf_std)
        logf = logf.at[:, i].set(flow_param)
        z = noise[i]
        s_new = cur + dts[:, None] * pf_mean + jnp.sqrt(dts)[:, None] * jnp.exp(pflogvars / 2) * z
        nz = (s_new - cur - dts[:, None] * pf_mean) / (jnp.sqrt(dts)[:, None] * jnp.exp(pflogvars / 2))
        logpf = logpf.at[:, i].set(
            -0.5 * jnp.sum(nz ** 2 + LOGTWOPI + jnp.log(dts)[:, None] + pflogvars, axis=1))
        if i > 0:
            back_mean = s_new - s_new * (dts / ts[:, i + 1])[:, None]
            back_var = pf_std ** 2 * (dts * ts[:, i] / ts[:, i + 1])[:, None] * jnp.ones_like(s_new)
            nb = (cur - back_mean) / jnp.sqrt(back_var)
            logpb = logpb.at[:, i].set(
                -0.5 * jnp.sum(nb ** 2 + LOGTWOPI + jnp.log(back_var), axis=1))
        cur = s_new
        states = states.at[:, i + 1].set(cur)
    return states, logpf, logpb, logf


if __name__ == "__main__":
    # GFN(dim=4, s_emb_dim=32, hidden_dim=64, harmonics_dim=8, t_dim=32)
    dim, s_emb_dim, hidden_dim, harmonics_dim, t_dim = 4, 32, 64, 8, 32
    bsz, T = 2, 8

    key = jax.random.PRNGKey(0)
    keys = jax.random.split(key, 10)

    def linear(k, fin, fout):
        kw, kb = jax.random.split(k)
        bound = 1.0 / math.sqrt(fin)
        w = jax.random.uniform(kw, (fin, fout), jnp.float32, -bound, bound)
        b = jax.random.uniform(kb, (1, fout), jnp.float32, -bound, bound)
        return w, b

    params = {}
    params["wt1"], params["bt1"] = linear(keys[0], 2 * harmonics_dim, hidden_dim)   # TimeEncoding
    params["wt2"], params["bt2"] = linear(keys[1], hidden_dim, t_dim)
    params["ws1"], params["bs1"] = linear(keys[2], dim, hidden_dim)                 # StateEncoding
    params["ws2"], params["bs2"] = linear(keys[3], hidden_dim, s_emb_dim)
    params["wj1"], params["bj1"] = linear(keys[4], s_emb_dim + t_dim, hidden_dim)   # JointPolicy
    params["wj2"], params["bj2"] = linear(keys[5], hidden_dim, hidden_dim)
    params["wj3"], params["bj3"] = linear(keys[6], hidden_dim, 2 * dim)
    flow_param = 0.0    # torch.nn.Parameter(torch.tensor(0.0))

    s0 = jax.random.normal(keys[7], (bsz, dim), jnp.float32)
    # torch.randn_like per step -> pre-drawn deterministic noise (T, bsz, dim)
    noise = jax.random.normal(keys[8], (T, bsz, dim), jnp.float32)
    # discretizer(bsz): uniform time grid on [0, 1], shape (bsz, T+1)
    ts = jnp.broadcast_to(jnp.linspace(0.0, 1.0, T + 1, dtype=jnp.float32), (bsz, T + 1))

    out = gfn_forward_pallas(s0, ts, noise, params, flow_param,
                             dim=dim, harmonics_dim=harmonics_dim)
    out = jax.block_until_ready(out)

    ref = gfn_forward_ref(s0, ts, noise, params, flow_param,
                          dim=dim, harmonics_dim=harmonics_dim)
    for a, b in zip(out, ref):
        assert a.shape == b.shape, (a.shape, b.shape)
        assert bool(jnp.allclose(a, b, atol=5e-2, rtol=5e-2)), float(jnp.max(jnp.abs(a - b)))

    print("KERNEL_OK")
</pallas_src>

<mosaic_0001>
module attributes {stable_mosaic.version = 11 : i64} {
  func.func @_gfn_traj_kernel(%arg0: memref<8x4xf32, #tpu.memory_space<vmem>>, %arg1: memref<8x8x4xf32, #tpu.memory_space<vmem>>, %arg2: memref<8x8x1xf32, #tpu.memory_space<vmem>>, %arg3: memref<8x8x1xf32, #tpu.memory_space<vmem>>, %arg4: memref<8x8x1xf32, #tpu.memory_space<vmem>>, %arg5: memref<8x8x1xf32, #tpu.memory_space<vmem>>, %arg6: memref<8x8x1xf32, #tpu.memory_space<vmem>>, %arg7: memref<8x8x1xf32, #tpu.memory_space<vmem>>, %arg8: memref<64x16xbf16, #tpu.memory_space<vmem>>, %arg9: memref<16x64xbf16, #tpu.memory_space<vmem>>, %arg10: memref<1x64xf32, #tpu.memory_space<vmem>>, %arg11: memref<64x32xbf16, #tpu.memory_space<vmem>>, %arg12: memref<1x32xf32, #tpu.memory_space<vmem>>, %arg13: memref<32x64xbf16, #tpu.memory_space<vmem>>, %arg14: memref<1x64xf32, #tpu.memory_space<vmem>>, %arg15: memref<4x64xbf16, #tpu.memory_space<vmem>>, %arg16: memref<1x64xf32, #tpu.memory_space<vmem>>, %arg17: memref<64x64xbf16, #tpu.memory_space<vmem>>, %arg18: memref<64x64xbf16, #tpu.memory_space<vmem>>, %arg19: memref<1x64xf32, #tpu.memory_space<vmem>>, %arg20: memref<64x8xbf16, #tpu.memory_space<vmem>>, %arg21: memref<1x8xf32, #tpu.memory_space<vmem>>, %arg22: memref<8x8x6xf32, #tpu.memory_space<vmem>>, %arg23: memref<64x64xf32, #tpu.memory_space<vmem>>) attributes {dimension_semantics = [], scalar_prefetch = 0 : i64, scratch_operands = 1 : i64, tpu.core_type = #tpu.core_type<tc>} {
    %c0 = arith.constant 0 : index
    %c0_0 = arith.constant 0 : index
    %0 = vector.load %arg8[%c0, %c0_0] : memref<64x16xbf16, #tpu.memory_space<vmem>>, vector<64x16xbf16>
    %c0_1 = arith.constant 0 : index
    %c0_2 = arith.constant 0 : index
    %1 = vector.load %arg9[%c0_1, %c0_2] : memref<16x64xbf16, #tpu.memory_space<vmem>>, vector<16x64xbf16>
    %cst = arith.constant dense<0.000000e+00> : vector<64x64xf32>
    %2 = tpu.matmul %0, %1, %cst {dimension_numbers = #tpu.dot_dimension_numbers<[1], [0], [0], [1], [0, 0, 1, 1], [], []>} : vector<64x16xbf16>, vector<16x64xbf16>, vector<64x64xf32> -> vector<64x64xf32>
    %c0_3 = arith.constant 0 : index
    %c0_4 = arith.constant 0 : index
    %3 = vector.load %arg10[%c0_3, %c0_4] : memref<1x64xf32, #tpu.memory_space<vmem>>, vector<1x64xf32>
    %4 = vector.broadcast %3 : vector<1x64xf32> to vector<64x64xf32>
    %5 = arith.addf %2, %4 : vector<64x64xf32>
    %cst_5 = arith.constant 5.000000e-01 : f32
    %6 = vector.broadcast %cst_5 : f32 to vector<64x64xf32>
    %7 = arith.mulf %6, %5 : vector<64x64xf32>
    %cst_6 = arith.constant 4.471500e-02 : f32
    %8 = vector.broadcast %cst_6 : f32 to vector<64x64xf32>
    %9 = arith.mulf %8, %5 : vector<64x64xf32>
    %10 = arith.mulf %9, %5 : vector<64x64xf32>
    %11 = arith.mulf %10, %5 : vector<64x64xf32>
    %12 = arith.addf %5, %11 : vector<64x64xf32>
    %cst_7 = arith.constant 0.797884583 : f32
    %13 = vector.broadcast %cst_7 : f32 to vector<64x64xf32>
    %14 = arith.mulf %13, %12 : vector<64x64xf32>
    %15 = math.tanh %14 : vector<64x64xf32>
    %cst_8 = arith.constant 1.000000e+00 : f32
    %16 = vector.broadcast %cst_8 : f32 to vector<64x64xf32>
    %17 = arith.addf %16, %15 : vector<64x64xf32>
    %18 = arith.mulf %7, %17 : vector<64x64xf32>
    %19 = arith.truncf %18 : vector<64x64xf32> to vector<64x64xbf16>
    %c0_9 = arith.constant 0 : index
    %c0_10 = arith.constant 0 : index
    %20 = vector.load %arg11[%c0_9, %c0_10] : memref<64x32xbf16, #tpu.memory_space<vmem>>, vector<64x32xbf16>
    %cst_11 = arith.constant dense<0.000000e+00> : vector<64x32xf32>
    %21 = tpu.matmul %19, %20, %cst_11 {dimension_numbers = #tpu.dot_dimension_numbers<[1], [0], [0], [1], [0, 0, 1, 1], [], []>} : vector<64x64xbf16>, vector<64x32xbf16>, vector<64x32xf32> -> vector<64x32xf32>
    %c0_12 = arith.constant 0 : index
    %c0_13 = arith.constant 0 : index
    %22 = vector.load %arg12[%c0_12, %c0_13] : memref<1x32xf32, #tpu.memory_space<vmem>>, vector<1x32xf32>
    %23 = vector.broadcast %22 : vector<1x32xf32> to vector<64x32xf32>
    %24 = arith.addf %21, %23 : vector<64x32xf32>
    %25 = arith.truncf %24 : vector<64x32xf32> to vector<64x32xbf16>
    %c0_14 = arith.constant 0 : index
    %c0_15 = arith.constant 0 : index
    %26 = vector.load %arg13[%c0_14, %c0_15] : memref<32x64xbf16, #tpu.memory_space<vmem>>, vector<32x64xbf16>
    %cst_16 = arith.constant dense<0.000000e+00> : vector<64x64xf32>
    %27 = tpu.matmul %25, %26, %cst_16 {dimension_numbers = #tpu.dot_dimension_numbers<[1], [0], [0], [1], [0, 0, 1, 1], [], []>} : vector<64x32xbf16>, vector<32x64xbf16>, vector<64x64xf32> -> vector<64x64xf32>
    %c0_17 = arith.constant 0 : index
    %c0_18 = arith.constant 0 : index
    %28 = vector.load %arg14[%c0_17, %c0_18] : memref<1x64xf32, #tpu.memory_space<vmem>>, vector<1x64xf32>
    %29 = vector.broadcast %28 : vector<1x64xf32> to vector<64x64xf32>
    %30 = arith.addf %27, %29 : vector<64x64xf32>
    %c0_19 = arith.constant 0 : index
    %c0_20 = arith.constant 0 : index
    %31 = vector.load %arg23[%c0_19, %c0_20] : memref<64x64xf32, #tpu.memory_space<vmem>>, vector<64x64xf32>
    tpu.vector_store %arg23[%c0_19, %c0_20], %30 {strides = array<i32>} : memref<64x64xf32, #tpu.memory_space<vmem>>, vector<64x64xf32>,
    %c0_21 = arith.constant 0 : index
    %c0_22 = arith.constant 0 : index
    %32 = vector.load %arg0[%c0_21, %c0_22] : memref<8x4xf32, #tpu.memory_space<vmem>>, vector<8x4xf32>
    %c0_23 = arith.constant 0 : index
    %c0_24 = arith.constant 0 : index
    %c0_25 = arith.constant 0 : index
    %33 = vector.load %arg1[%c0_23, %c0_24, %c0_25] : memref<8x8x4xf32, #tpu.memory_space<vmem>>, vector<1x8x4xf32>
    %34 = vector.shape_cast %33 : vector<1x8x4xf32> to vector<8x4xf32>
    %c0_26 = arith.constant 0 : index
    %c0_27 = arith.constant 0 : index
    %c0_28 = arith.constant 0 : index
    %35 = vector.load %arg2[%c0_26, %c0_27, %c0_28] : memref<8x8x1xf32, #tpu.memory_space<vmem>>, vector<1x8x1xf32>
    %36 = vector.shape_cast %35 : vector<1x8x1xf32> to vector<8x1xf32>
    %c0_29 = arith.constant 0 : index
    %c0_30 = arith.constant 0 : index
    %37 = vector.load %arg23[%c0_29, %c0_30] : memref<64x64xf32, #tpu.memory_space<vmem>>, vector<8x64xf32>
    %38 = arith.truncf %32 : vector<8x4xf32> to vector<8x4xbf16>
    %c0_31 = arith.constant 0 : index
    %c0_32 = arith.constant 0 : index
    %39 = vector.load %arg15[%c0_31, %c0_32] : memref<4x64xbf16, #tpu.memory_space<vmem>>, vector<4x64xbf16>
    %cst_33 = arith.constant dense<0.000000e+00> : vector<8x64xf32>
    %40 = tpu.matmul %38, %39, %cst_33 {dimension_numbers = #tpu.dot_dimension_numbers<[1], [0], [0], [1], [0, 0, 1, 1], [], []>} : vector<8x4xbf16>, vector<4x64xbf16>, vector<8x64xf32> -> vector<8x64xf32>
    %c0_34 = arith.constant 0 : index
    %c0_35 = arith.constant 0 : index
    %41 = vector.load %arg16[%c0_34, %c0_35] : memref<1x64xf32, #tpu.memory_space<vmem>>, vector<1x64xf32>
    %42 = vector.broadcast %41 : vector<1x64xf32> to vector<8x64xf32>
    %43 = arith.addf %40, %42 : vector<8x64xf32>
    %cst_36 = arith.constant 5.000000e-01 : f32
    %44 = vector.broadcast %cst_36 : f32 to vector<8x64xf32>
    %45 = arith.mulf %44, %43 : vector<8x64xf32>
    %cst_37 = arith.constant 4.471500e-02 : f32
    %46 = vector.broadcast %cst_37 : f32 to vector<8x64xf32>
    %47 = arith.mulf %46, %43 : vector<8x64xf32>
    %48 = arith.mulf %47, %43 : vector<8x64xf32>
    %49 = arith.mulf %48, %43 : vector<8x64xf32>
    %50 = arith.addf %43, %49 : vector<8x64xf32>
    %cst_38 = arith.constant 0.797884583 : f32
    %51 = vector.broadcast %cst_38 : f32 to vector<8x64xf32>
    %52 = arith.mulf %51, %50 : vector<8x64xf32>
    %53 = math.tanh %52 : vector<8x64xf32>
    %cst_39 = arith.constant 1.000000e+00 : f32
    %54 = vector.broadcast %cst_39 : f32 to vector<8x64xf32>
    %55 = arith.addf %54, %53 : vector<8x64xf32>
    %56 = arith.mulf %45, %55 : vector<8x64xf32>
    %57 = arith.truncf %56 : vector<8x64xf32> to vector<8x64xbf16>
    %c0_40 = arith.constant 0 : index
    %c0_41 = arith.constant 0 : index
    %58 = vector.load %arg17[%c0_40, %c0_41] : memref<64x64xbf16, #tpu.memory_space<vmem>>, vector<64x64xbf16>
    %cst_42 = arith.constant dense<0.000000e+00> : vector<8x64xf32>
    %59 = tpu.matmul %57, %58, %cst_42 {dimension_numbers = #tpu.dot_dimension_numbers<[1], [0], [0], [1], [0, 0, 1, 1], [], []>} : vector<8x64xbf16>, vector<64x64xbf16>, vector<8x64xf32> -> vector<8x64xf32>
    %60 = arith.addf %59, %37 : vector<8x64xf32>
    %cst_43 = arith.constant 5.000000e-01 : f32
    %61 = vector.broadcast %cst_43 : f32 to vector<8x64xf32>
    %62 = arith.mulf %61, %60 : vector<8x64xf32>
    %cst_44 = arith.constant 4.471500e-02 : f32
    %63 = vector.broadcast %cst_44 : f32 to vector<8x64xf32>
    %64 = arith.mulf %63, %60 : vector<8x64xf32>
    %65 = arith.mulf %64, %60 : vector<8x64xf32>
    %66 = arith.mulf %65, %60 : vector<8x64xf32>
    %67 = arith.addf %60, %66 : vector<8x64xf32>
    %cst_45 = arith.constant 0.797884583 : f32
    %68 = vector.broadcast %cst_45 : f32 to vector<8x64xf32>
    %69 = arith.mulf %68, %67 : vector<8x64xf32>
    %70 = math.tanh %69 : vector<8x64xf32>
    %cst_46 = arith.constant 1.000000e+00 : f32
    %71 = vector.broadcast %cst_46 : f32 to vector<8x64xf32>
    %72 = arith.addf %71, %70 : vector<8x64xf32>
    %73 = arith.mulf %62, %72 : vector<8x64xf32>
    %74 = arith.truncf %73 : vector<8x64xf32> to vector<8x64xbf16>
    %c0_47 = arith.constant 0 : index
    %c0_48 = arith.constant 0 : index
    %75 = vector.load %arg18[%c0_47, %c0_48] : memref<64x64xbf16, #tpu.memory_space<vmem>>, vector<64x64xbf16>
    %cst_49 = arith.constant dense<0.000000e+00> : vector<8x64xf32>
    %76 = tpu.matmul %74, %75, %cst_49 {dimension_numbers = #tpu.dot_dimension_numbers<[1], [0], [0], [1], [0, 0, 1, 1], [], []>} : vector<8x64xbf16>, vector<64x64xbf16>, vector<8x64xf32> -> vector<8x64xf32>
    %c0_50 = arith.constant 0 : index
    %c0_51 = arith.constant 0 : index
    %77 = vector.load %arg19[%c0_50, %c0_51] : memref<1x64xf32, #tpu.memory_space<vmem>>, vector<1x64xf32>
    %78 = vector.broadcast %77 : vector<1x64xf32> to vector<8x64xf32>
    %79 = arith.addf %76, %78 : vector<8x64xf32>
    %cst_52 = arith.constant 5.000000e-01 : f32
    %80 = vector.broadcast %cst_52 : f32 to vector<8x64xf32>
    %81 = arith.mulf %80, %79 : vector<8x64xf32>
    %cst_53 = arith.constant 4.471500e-02 : f32
    %82 = vector.broadcast %cst_53 : f32 to vector<8x64xf32>
    %83 = arith.mulf %82, %79 : vector<8x64xf32>
    %84 = arith.mulf %83, %79 : vector<8x64xf32>
    %85 = arith.mulf %84, %79 : vector<8x64xf32>
    %86 = arith.addf %79, %85 : vector<8x64xf32>
    %cst_54 = arith.constant 0.797884583 : f32
    %87 = vector.broadcast %cst_54 : f32 to vector<8x64xf32>
    %88 = arith.mulf %87, %86 : vector<8x64xf32>
    %89 = math.tanh %88 : vector<8x64xf32>
    %cst_55 = arith.constant 1.000000e+00 : f32
    %90 = vector.broadcast %cst_55 : f32 to vector<8x64xf32>
    %91 = arith.addf %90, %89 : vector<8x64xf32>
    %92 = arith.mulf %81, %91 : vector<8x64xf32>
    %93 = arith.truncf %92 : vector<8x64xf32> to vector<8x64xbf16>
    %c0_56 = arith.constant 0 : index
    %c0_57 = arith.constant 0 : index
    %94 = vector.load %arg20[%c0_56, %c0_57] : memref<64x8xbf16, #tpu.memory_space<vmem>>, vector<64x8xbf16>
    %cst_58 = arith.constant dense<0.000000e+00> : vector<8x8xf32>
    %95 = tpu.matmul %93, %94, %cst_58 {dimension_numbers = #tpu.dot_dimension_numbers<[1], [0], [0], [1], [0, 0, 1, 1], [], []>} : vector<8x64xbf16>, vector<64x8xbf16>, vector<8x8xf32> -> vector<8x8xf32>
    %c0_59 = arith.constant 0 : index
    %c0_60 = arith.constant 0 : index
    %96 = vector.load %arg21[%c0_59, %c0_60] : memref<1x8xf32, #tpu.memory_space<vmem>>, vector<1x8xf32>
    %97 = vector.broadcast %96 : vector<1x8xf32> to vector<8x8xf32>
    %98 = arith.addf %95, %97 : vector<8x8xf32>
    %99 = vector.extract_strided_slice %98 {offsets = [0, 0], sizes = [8, 4], strides = [1, 1]} : vector<8x8xf32> to vector<8x4xf32>
    %100 = vector.extract_strided_slice %98 {offsets = [0, 4], sizes = [8, 4], strides = [1, 1]} : vector<8x8xf32> to vector<8x4xf32>
    %101 = math.tanh %100 : vector<8x4xf32>
    %cst_61 = arith.constant 4.000000e+00 : f32
    %102 = vector.broadcast %cst_61 : f32 to vector<8x4xf32>
    %103 = arith.mulf %101, %102 : vector<8x4xf32>
    %cst_62 = arith.constant 0.000000e+00 : f32
    %104 = vector.broadcast %cst_62 : f32 to vector<8x4xf32>
    %105 = arith.addf %103, %104 : vector<8x4xf32>
    %106 = vector.broadcast %36 : vector<8x1xf32> to vector<8x4xf32>
    %107 = arith.mulf %106, %99 : vector<8x4xf32>
    %108 = arith.addf %32, %107 : vector<8x4xf32>
    %c0_63 = arith.constant 0 : index
    %c0_64 = arith.constant 0 : index
    %c0_65 = arith.constant 0 : index
    %109 = vector.load %arg3[%c0_63, %c0_64, %c0_65] : memref<8x8x1xf32, #tpu.memory_space<vmem>>, vector<1x8x1xf32>
    %110 = vector.shape_cast %109 : vector<1x8x1xf32> to vector<8x1xf32>
    %cst_66 = arith.constant 5.000000e-01 : f32
    %111 = vector.broadcast %cst_66 : f32 to vector<8x4xf32>
    %112 = arith.mulf %111, %105 : vector<8x4xf32>
    %113 = math.exp %112 : vector<8x4xf32>
    %114 = vector.broadcast %110 : vector<8x1xf32> to vector<8x4xf32>
    %115 = arith.mulf %114, %113 : vector<8x4xf32>
    %116 = arith.mulf %115, %34 : vector<8x4xf32>
    %117 = arith.addf %108, %116 : vector<8x4xf32>
    %c0_67 = arith.constant 0 : index
    %c0_68 = arith.constant 0 : index
    %c0_69 = arith.constant 0 : index
    %118 = vector.load %arg4[%c0_67, %c0_68, %c0_69] : memref<8x8x1xf32, #tpu.memory_space<vmem>>, vector<1x8x1xf32>
    %119 = vector.shape_cast %118 : vector<1x8x1xf32> to vector<8x1xf32>
    %120 = arith.mulf %34, %34 : vector<8x4xf32>
    %121 = arith.addf %120, %105 : vector<8x4xf32>
    %cst_70 = arith.constant dense<0.000000e+00> : vector<8xf32>
    %122 = vector.multi_reduction <add>, %121, %cst_70 [1] : vector<8x4xf32> to vector<8xf32>
    %123 = vector.shape_cast %122 : vector<8xf32> to vector<8x1xf32>
    %cst_71 = arith.constant 5.000000e-01 : f32
    %124 = vector.broadcast %cst_71 : f32 to vector<8x1xf32>
    %125 = arith.mulf %124, %123 : vector<8x1xf32>
    %126 = arith.subf %119, %125 : vector<8x1xf32>
    %cst_72 = arith.constant 0.000000e+00 : f32
    %127 = vector.broadcast %cst_72 : f32 to vector<8x1xf32>
    %128 = tpu.concatenate %117, %126, %127 in 1 : vector<8x4xf32>, vector<8x1xf32>, vector<8x1xf32> -> vector<8x6xf32>
    %c0_73 = arith.constant 0 : index
    %c0_74 = arith.constant 0 : index
    %c0_75 = arith.constant 0 : index
    %129 = vector.load %arg22[%c0_73, %c0_74, %c0_75] : memref<8x8x6xf32, #tpu.memory_space<vmem>>, vector<1x8x6xf32>
    %130 = vector.shape_cast %129 : vector<1x8x6xf32> to vector<8x6xf32>
    %131 = vector.shape_cast %128 : vector<8x6xf32> to vector<1x8x6xf32>
    tpu.vector_store %arg22[%c0_73, %c0_74, %c0_75], %131 {strides = array<i32>} : memref<8x8x6xf32, #tpu.memory_space<vmem>>, vector<1x8x6xf32>,
    %c1 = arith.constant 1 : index
    %c0_76 = arith.constant 0 : index
    %c0_77 = arith.constant 0 : index
    %132 = vector.load %arg1[%c1, %c0_76, %c0_77] : memref<8x8x4xf32, #tpu.memory_space<vmem>>, vector<1x8x4xf32>
    %133 = vector.shape_cast %132 : vector<1x8x4xf32> to vector<8x4xf32>
    %c1_78 = arith.constant 1 : index
    %c0_79 = arith.constant 0 : index
    %c0_80 = arith.constant 0 : index
    %134 = vector.load %arg2[%c1_78, %c0_79, %c0_80] : memref<8x8x1xf32, #tpu.memory_space<vmem>>, vector<1x8x1xf32>
    %135 = vector.shape_cast %134 : vector<1x8x1xf32> to vector<8x1xf32>
    %c8 = arith.constant 8 : index
    %c0_81 = arith.constant 0 : index
    %136 = vector.load %arg23[%c8, %c0_81] : memref<64x64xf32, #tpu.memory_space<vmem>>, vector<8x64xf32>
    %137 = arith.truncf %117 : vector<8x4xf32> to vector<8x4xbf16>
    %c0_82 = arith.constant 0 : index
    %c0_83 = arith.constant 0 : index
    %138 = vector.load %arg15[%c0_82, %c0_83] : memref<4x64xbf16, #tpu.memory_space<vmem>>, vector<4x64xbf16>
    %cst_84 = arith.constant dense<0.000000e+00> : vector<8x64xf32>
    %139 = tpu.matmul %137, %138, %cst_84 {dimension_numbers = #tpu.dot_dimension_numbers<[1], [0], [0], [1], [0, 0, 1, 1], [], []>} : vector<8x4xbf16>, vector<4x64xbf16>, vector<8x64xf32> -> vector<8x64xf32>
    %c0_85 = arith.constant 0 : index
    %c0_86 = arith.constant 0 : index
    %140 = vector.load %arg16[%c0_85, %c0_86] : memref<1x64xf32, #tpu.memory_space<vmem>>, vector<1x64xf32>
    %141 = vector.broadcast %140 : vector<1x64xf32> to vector<8x64xf32>
    %142 = arith.addf %139, %141 : vector<8x64xf32>
    %cst_87 = arith.constant 5.000000e-01 : f32
    %143 = vector.broadcast %cst_87 : f32 to vector<8x64xf32>
    %144 = arith.mulf %143, %142 : vector<8x64xf32>
    %cst_88 = arith.constant 4.471500e-02 : f32
    %145 = vector.broadcast %cst_88 : f32 to vector<8x64xf32>
    %146 = arith.mulf %145, %142 : vector<8x64xf32>
    %147 = arith.mulf %146, %142 : vector<8x64xf32>
    %148 = arith.mulf %147, %142 : vector<8x64xf32>
    %149 = arith.addf %142, %148 : vector<8x64xf32>
    %cst_89 = arith.constant 0.797884583 : f32
    %150 = vector.broadcast %cst_89 : f32 to vector<8x64xf32>
    %151 = arith.mulf %150, %149 : vector<8x64xf32>
    %152 = math.tanh %151 : vector<8x64xf32>
    %cst_90 = arith.constant 1.000000e+00 : f32
    %153 = vector.broadcast %cst_90 : f32 to vector<8x64xf32>
    %154 = arith.addf %153, %152 : vector<8x64xf32>
    %155 = arith.mulf %144, %154 : vector<8x64xf32>
    %156 = arith.truncf %155 : vector<8x64xf32> to vector<8x64xbf16>
    %c0_91 = arith.constant 0 : index
    %c0_92 = arith.constant 0 : index
    %157 = vector.load %arg17[%c0_91, %c0_92] : memref<64x64xbf16, #tpu.memory_space<vmem>>, vector<64x64xbf16>
    %cst_93 = arith.constant dense<0.000000e+00> : vector<8x64xf32>
    %158 = tpu.matmul %156, %157, %cst_93 {dimension_numbers = #tpu.dot_dimension_numbers<[1], [0], [0], [1], [0, 0, 1, 1], [], []>} : vector<8x64xbf16>, vector<64x64xbf16>, vector<8x64xf32> -> vector<8x64xf32>
    %159 = arith.addf %158, %136 : vector<8x64xf32>
    %cst_94 = arith.constant 5.000000e-01 : f32
    %160 = vector.broadcast %cst_94 : f32 to vector<8x64xf32>
    %161 = arith.mulf %160, %159 : vector<8x64xf32>
    %cst_95 = arith.constant 4.471500e-02 : f32
    %162 = vector.broadcast %cst_95 : f32 to vector<8x64xf32>
    %163 = arith.mulf %162, %159 : vector<8x64xf32>
    %164 = arith.mulf %163, %159 : vector<8x64xf32>
    %165 = arith.mulf %164, %159 : vector<8x64xf32>
    %166 = arith.addf %159, %165 : vector<8x64xf32>
    %cst_96 = arith.constant 0.797884583 : f32
    %167 = vector.broadcast %cst_96 : f32 to vector<8x64xf32>
    %168 = arith.mulf %167, %166 : vector<8x64xf32>
    %169 = math.tanh %168 : vector<8x64xf32>
    %cst_97 = arith.constant 1.000000e+00 : f32
    %170 = vector.broadcast %cst_97 : f32 to vector<8x64xf32>
    %171 = arith.addf %170, %169 : vector<8x64xf32>
    %172 = arith.mulf %161, %171 : vector<8x64xf32>
    %173 = arith.truncf %172 : vector<8x64xf32> to vector<8x64xbf16>
    %c0_98 = arith.constant 0 : index
    %c0_99 = arith.constant 0 : index
    %174 = vector.load %arg18[%c0_98, %c0_99] : memref<64x64xbf16, #tpu.memory_space<vmem>>, vector<64x64xbf16>
    %cst_100 = arith.constant dense<0.000000e+00> : vector<8x64xf32>
    %175 = tpu.matmul %173, %174, %cst_100 {dimension_numbers = #tpu.dot_dimension_numbers<[1], [0], [0], [1], [0, 0, 1, 1], [], []>} : vector<8x64xbf16>, vector<64x64xbf16>, vector<8x64xf32> -> vector<8x64xf32>
    %c0_101 = arith.constant 0 : index
    %c0_102 = arith.constant 0 : index
    %176 = vector.load %arg19[%c0_101, %c0_102] : memref<1x64xf32, #tpu.memory_space<vmem>>, vector<1x64xf32>
    %177 = vector.broadcast %176 : vector<1x64xf32> to vector<8x64xf32>
    %178 = arith.addf %175, %177 : vector<8x64xf32>
    %cst_103 = arith.constant 5.000000e-01 : f32
    %179 = vector.broadcast %cst_103 : f32 to vector<8x64xf32>
    %180 = arith.mulf %179, %178 : vector<8x64xf32>
    %cst_104 = arith.constant 4.471500e-02 : f32
    %181 = vector.broadcast %cst_104 : f32 to vector<8x64xf32>
    %182 = arith.mulf %181, %178 : vector<8x64xf32>
    %183 = arith.mulf %182, %178 : vector<8x64xf32>
    %184 = arith.mulf %183, %178 : vector<8x64xf32>
    %185 = arith.addf %178, %184 : vector<8x64xf32>
    %cst_105 = arith.constant 0.797884583 : f32
    %186 = vector.broadcast %cst_105 : f32 to vector<8x64xf32>
    %187 = arith.mulf %186, %185 : vector<8x64xf32>
    %188 = math.tanh %187 : vector<8x64xf32>
    %cst_106 = arith.constant 1.000000e+00 : f32
    %189 = vector.broadcast %cst_106 : f32 to vector<8x64xf32>
    %190 = arith.addf %189, %188 : vector<8x64xf32>
    %191 = arith.mulf %180, %190 : vector<8x64xf32>
    %192 = arith.truncf %191 : vector<8x64xf32> to vector<8x64xbf16>
    %c0_107 = arith.constant 0 : index
    %c0_108 = arith.constant 0 : index
    %193 = vector.load %arg20[%c0_107, %c0_108] : memref<64x8xbf16, #tpu.memory_space<vmem>>, vector<64x8xbf16>
    %cst_109 = arith.constant dense<0.000000e+00> : vector<8x8xf32>
    %194 = tpu.matmul %192, %193, %cst_109 {dimension_numbers = #tpu.dot_dimension_numbers<[1], [0], [0], [1], [0, 0, 1, 1], [], []>} : vector<8x64xbf16>, vector<64x8xbf16>, vector<8x8xf32> -> vector<8x8xf32>
    %c0_110 = arith.constant 0 : index
    %c0_111 = arith.constant 0 : index
    %195 = vector.load %arg21[%c0_110, %c0_111] : memref<1x8xf32, #tpu.memory_space<vmem>>, vector<1x8xf32>
    %196 = vector.broadcast %195 : vector<1x8xf32> to vector<8x8xf32>
    %197 = arith.addf %194, %196 : vector<8x8xf32>
    %198 = vector.extract_strided_slice %197 {offsets = [0, 0], sizes = [8, 4], strides = [1, 1]} : vector<8x8xf32> to vector<8x4xf32>
    %199 = vector.extract_strided_slice %197 {offsets = [0, 4], sizes = [8, 4], strides = [1, 1]} : vector<8x8xf32> to vector<8x4xf32>
    %200 = math.tanh %199 : vector<8x4xf32>
    %cst_112 = arith.constant 4.000000e+00 : f32
    %201 = vector.broadcast %cst_112 : f32 to vector<8x4xf32>
    %202 = arith.mulf %200, %201 : vector<8x4xf32>
    %cst_113 = arith.constant 0.000000e+00 : f32
    %203 = vector.broadcast %cst_113 : f32 to vector<8x4xf32>
    %204 = arith.addf %202, %203 : vector<8x4xf32>
    %205 = vector.broadcast %135 : vector<8x1xf32> to vector<8x4xf32>
    %206 = arith.mulf %205, %198 : vector<8x4xf32>
    %207 = arith.addf %117, %206 : vector<8x4xf32>
    %c1_114 = arith.constant 1 : index
    %c0_115 = arith.constant 0 : index
    %c0_116 = arith.constant 0 : index
    %208 = vector.load %arg3[%c1_114, %c0_115, %c0_116] : memref<8x8x1xf32, #tpu.memory_space<vmem>>, vector<1x8x1xf32>
    %209 = vector.shape_cast %208 : vector<1x8x1xf32> to vector<8x1xf32>
    %cst_117 = arith.constant 5.000000e-01 : f32
    %210 = vector.broadcast %cst_117 : f32 to vector<8x4xf32>
    %211 = arith.mulf %210, %204 : vector<8x4xf32>
    %212 = math.exp %211 : vector<8x4xf32>
    %213 = vector.broadcast %209 : vector<8x1xf32> to vector<8x4xf32>
    %214 = arith.mulf %213, %212 : vector<8x4xf32>
    %215 = arith.mulf %214, %133 : vector<8x4xf32>
    %216 = arith.addf %207, %215 : vector<8x4xf32>
    %c1_118 = arith.constant 1 : index
    %c0_119 = arith.constant 0 : index
    %c0_120 = arith.constant 0 : index
    %217 = vector.load %arg4[%c1_118, %c0_119, %c0_120] : memref<8x8x1xf32, #tpu.memory_space<vmem>>, vector<1x8x1xf32>
    %218 = vector.shape_cast %217 : vector<1x8x1xf32> to vector<8x1xf32>
    %219 = arith.mulf %133, %133 : vector<8x4xf32>
    %220 = arith.addf %219, %204 : vector<8x4xf32>
    %cst_121 = arith.constant dense<0.000000e+00> : vector<8xf32>
    %221 = vector.multi_reduction <add>, %220, %cst_121 [1] : vector<8x4xf32> to vector<8xf32>
    %222 = vector.shape_cast %221 : vector<8xf32> to vector<8x1xf32>
    %cst_122 = arith.constant 5.000000e-01 : f32
    %223 = vector.broadcast %cst_122 : f32 to vector<8x1xf32>
    %224 = arith.mulf %223, %222 : vector<8x1xf32>
    %225 = arith.subf %218, %224 : vector<8x1xf32>
    %c1_123 = arith.constant 1 : index
    %c0_124 = arith.constant 0 : index
    %c0_125 = arith.constant 0 : index
    %226 = vector.load %arg5[%c1_123, %c0_124, %c0_125] : memref<8x8x1xf32, #tpu.memory_space<vmem>>, vector<1x8x1xf32>
    %227 = vector.shape_cast %226 : vector<1x8x1xf32> to vector<8x1xf32>
    %228 = vector.broadcast %227 : vector<8x1xf32> to vector<8x4xf32>
    %229 = arith.mulf %216, %228 : vector<8x4xf32>
    %230 = arith.subf %117, %229 : vector<8x4xf32>
    %c1_126 = arith.constant 1 : index
    %c0_127 = arith.constant 0 : index
    %c0_128 = arith.constant 0 : index
    %231 = vector.load %arg6[%c1_126, %c0_127, %c0_128] : memref<8x8x1xf32, #tpu.memory_space<vmem>>, vector<1x8x1xf32>
    %232 = vector.shape_cast %231 : vector<1x8x1xf32> to vector<8x1xf32>
    %233 = vector.broadcast %232 : vector<8x1xf32> to vector<8x4xf32>
    %234 = arith.mulf %230, %233 : vector<8x4xf32>
    %c1_129 = arith.constant 1 : index
    %c0_130 = arith.constant 0 : index
    %c0_131 = arith.constant 0 : index
    %235 = vector.load %arg7[%c1_129, %c0_130, %c0_131] : memref<8x8x1xf32, #tpu.memory_space<vmem>>, vector<1x8x1xf32>
    %236 = vector.shape_cast %235 : vector<1x8x1xf32> to vector<8x1xf32>
    %237 = arith.mulf %234, %234 : vector<8x4xf32>
    %cst_132 = arith.constant dense<0.000000e+00> : vector<8xf32>
    %238 = vector.multi_reduction <add>, %237, %cst_132 [1] : vector<8x4xf32> to vector<8xf32>
    %239 = vector.shape_cast %238 : vector<8xf32> to vector<8x1xf32>
    %cst_133 = arith.constant 5.000000e-01 : f32
    %240 = vector.broadcast %cst_133 : f32 to vector<8x1xf32>
    %241 = arith.mulf %240, %239 : vector<8x1xf32>
    %242 = arith.subf %236, %241 : vector<8x1xf32>
    %243 = tpu.concatenate %216, %225, %242 in 1 : vector<8x4xf32>, vector<8x1xf32>, vector<8x1xf32> -> vector<8x6xf32>
    %c1_134 = arith.constant 1 : index
    %c0_135 = arith.constant 0 : index
    %c0_136 = arith.constant 0 : index
    %244 = vector.load %arg22[%c1_134, %c0_135, %c0_136] : memref<8x8x6xf32, #tpu.memory_space<vmem>>, vector<1x8x6xf32>
    %245 = vector.shape_cast %244 : vector<1x8x6xf32> to vector<8x6xf32>
    %246 = vector.shape_cast %243 : vector<8x6xf32> to vector<1x8x6xf32>
    tpu.vector_store %arg22[%c1_134, %c0_135, %c0_136], %246 {strides = array<i32>} : memref<8x8x6xf32, #tpu.memory_space<vmem>>, vector<1x8x6xf32>,
    %c2 = arith.constant 2 : index
    %c0_137 = arith.constant 0 : index
    %c0_138 = arith.constant 0 : index
    %247 = vector.load %arg1[%c2, %c0_137, %c0_138] : memref<8x8x4xf32, #tpu.memory_space<vmem>>, vector<1x8x4xf32>
    %248 = vector.shape_cast %247 : vector<1x8x4xf32> to vector<8x4xf32>
    %c2_139 = arith.constant 2 : index
    %c0_140 = arith.constant 0 : index
    %c0_141 = arith.constant 0 : index
    %249 = vector.load %arg2[%c2_139, %c0_140, %c0_141] : memref<8x8x1xf32, #tpu.memory_space<vmem>>, vector<1x8x1xf32>
    %250 = vector.shape_cast %249 : vector<1x8x1xf32> to vector<8x1xf32>
    %c16 = arith.constant 16 : index
    %c0_142 = arith.constant 0 : index
    %251 = vector.load %arg23[%c16, %c0_142] : memref<64x64xf32, #tpu.memory_space<vmem>>, vector<8x64xf32>
    %252 = arith.truncf %216 : vector<8x4xf32> to vector<8x4xbf16>
    %c0_143 = arith.constant 0 : index
    %c0_144 = arith.constant 0 : index
    %253 = vector.load %arg15[%c0_143, %c0_144] : memref<4x64xbf16, #tpu.memory_space<vmem>>, vector<4x64xbf16>
    %cst_145 = arith.constant dense<0.000000e+00> : vector<8x64xf32>
    %254 = tpu.matmul %252, %253, %cst_145 {dimension_numbers = #tpu.dot_dimension_numbers<[1], [0], [0], [1], [0, 0, 1, 1], [], []>} : vector<8x4xbf16>, vector<4x64xbf16>, vector<8x64xf32> -> vector<8x64xf32>
    %c0_146 = arith.constant 0 : index
    %c0_147 = arith.constant 0 : index
    %255 = vector.load %arg16[%c0_146, %c0_147] : memref<1x64xf32, #tpu.memory_space<vmem>>, vector<1x64xf32>
    %256 = vector.broadcast %255 : vector<1x64xf32> to vector<8x64xf32>
    %257 = arith.addf %254, %256 : vector<8x64xf32>
    %cst_148 = arith.constant 5.000000e-01 : f32
    %258 = vector.broadcast %cst_148 : f32 to vector<8x64xf32>
    %259 = arith.mulf %258, %257 : vector<8x64xf32>
    %cst_149 = arith.constant 4.471500e-02 : f32
    %260 = vector.broadcast %cst_149 : f32 to vector<8x64xf32>
    %261 = arith.mulf %260, %257 : vector<8x64xf32>
    %262 = arith.mulf %261, %257 : vector<8x64xf32>
    %263 = arith.mulf %262, %257 : vector<8x64xf32>
    %264 = arith.addf %257, %263 : vector<8x64xf32>
    %cst_150 = arith.constant 0.797884583 : f32
    %265 = vector.broadcast %cst_150 : f32 to vector<8x64xf32>
    %266 = arith.mulf %265, %264 : vector<8x64xf32>
    %267 = math.tanh %266 : vector<8x64xf32>
    %cst_151 = arith.constant 1.000000e+00 : f32
    %268 = vector.broadcast %cst_151 : f32 to vector<8x64xf32>
    %269 = arith.addf %268, %267 : vector<8x64xf32>
    %270 = arith.mulf %259, %269 : vector<8x64xf32>
    %271 = arith.truncf %270 : vector<8x64xf32> to vector<8x64xbf16>
    %c0_152 = arith.constant 0 : index
    %c0_153 = arith.constant 0 : index
    %272 = vector.load %arg17[%c0_152, %c0_153] : memref<64x64xbf16, #tpu.memory_space<vmem>>, vector<64x64xbf16>
    %cst_154 = arith.constant dense<0.000000e+00> : vector<8x64xf32>
    %273 = tpu.matmul %271, %272, %cst_154 {dimension_numbers = #tpu.dot_dimension_numbers<[1], [0], [0], [1], [0, 0, 1, 1], [], []>} : vector<8x64xbf16>, vector<64x64xbf16>, vector<8x64xf32> -> vector<8x64xf32>
    %274 = arith.addf %273, %251 : vector<8x64xf32>
    %cst_155 = arith.constant 5.000000e-01 : f32
    %275 = vector.broadcast %cst_155 : f32 to vector<8x64xf32>
    %276 = arith.mulf %275, %274 : vector<8x64xf32>
    %cst_156 = arith.constant 4.471500e-02 : f32
    %277 = vector.broadcast %cst_156 : f32 to vector<8x64xf32>
    %278 = arith.mulf %277, %274 : vector<8x64xf32>
    %279 = arith.mulf %278, %274 : vector<8x64xf32>
    %280 = arith.mulf %279, %274 : vector<8x64xf32>
    %281 = arith.addf %274, %280 : vector<8x64xf32>
    %cst_157 = arith.constant 0.797884583 : f32
    %282 = vector.broadcast %cst_157 : f32 to vector<8x64xf32>
    %283 = arith.mulf %282, %281 : vector<8x64xf32>
    %284 = math.tanh %283 : vector<8x64xf32>
    %cst_158 = arith.constant 1.000000e+00 : f32
    %285 = vector.broadcast %cst_158 : f32 to vector<8x64xf32>
    %286 = arith.addf %285, %284 : vector<8x64xf32>
    %287 = arith.mulf %276, %286 : vector<8x64xf32>
    %288 = arith.truncf %287 : vector<8x64xf32> to vector<8x64xbf16>
    %c0_159 = arith.constant 0 : index
    %c0_160 = arith.constant 0 : index
    %289 = vector.load %arg18[%c0_159, %c0_160] : memref<64x64xbf16, #tpu.memory_space<vmem>>, vector<64x64xbf16>
    %cst_161 = arith.constant dense<0.000000e+00> : vector<8x64xf32>
    %290 = tpu.matmul %288, %289, %cst_161 {dimension_numbers = #tpu.dot_dimension_numbers<[1], [0], [0], [1], [0, 0, 1, 1], [], []>} : vector<8x64xbf16>, vector<64x64xbf16>, vector<8x64xf32> -> vector<8x64xf32>
    %c0_162 = arith.constant 0 : index
    %c0_163 = arith.constant 0 : index
    %291 = vector.load %arg19[%c0_162, %c0_163] : memref<1x64xf32, #tpu.memory_space<vmem>>, vector<1x64xf32>
    %292 = vector.broadcast %291 : vector<1x64xf32> to vector<8x64xf32>
    %293 = arith.addf %290, %292 : vector<8x64xf32>
    %cst_164 = arith.constant 5.000000e-01 : f32
    %294 = vector.broadcast %cst_164 : f32 to vector<8x64xf32>
    %295 = arith.mulf %294, %293 : vector<8x64xf32>
    %cst_165 = arith.constant 4.471500e-02 : f32
    %296 = vector.broadcast %cst_165 : f32 to vector<8x64xf32>
    %297 = arith.mulf %296, %293 : vector<8x64xf32>
    %298 = arith.mulf %297, %293 : vector<8x64xf32>
    %299 = arith.mulf %298, %293 : vector<8x64xf32>
    %300 = arith.addf %293, %299 : vector<8x64xf32>
    %cst_166 = arith.constant 0.797884583 : f32
    %301 = vector.broadcast %cst_166 : f32 to vector<8x64xf32>
    %302 = arith.mulf %301, %300 : vector<8x64xf32>
    %303 = math.tanh %302 : vector<8x64xf32>
    %cst_167 = arith.constant 1.000000e+00 : f32
    %304 = vector.broadcast %cst_167 : f32 to vector<8x64xf32>
    %305 = arith.addf %304, %303 : vector<8x64xf32>
    %306 = arith.mulf %295, %305 : vector<8x64xf32>
    %307 = arith.truncf %306 : vector<8x64xf32> to vector<8x64xbf16>
    %c0_168 = arith.constant 0 : index
    %c0_169 = arith.constant 0 : index
    %308 = vector.load %arg20[%c0_168, %c0_169] : memref<64x8xbf16, #tpu.memory_space<vmem>>, vector<64x8xbf16>
    %cst_170 = arith.constant dense<0.000000e+00> : vector<8x8xf32>
    %309 = tpu.matmul %307, %308, %cst_170 {dimension_numbers = #tpu.dot_dimension_numbers<[1], [0], [0], [1], [0, 0, 1, 1], [], []>} : vector<8x64xbf16>, vector<64x8xbf16>, vector<8x8xf32> -> vector<8x8xf32>
    %c0_171 = arith.constant 0 : index
    %c0_172 = arith.constant 0 : index
    %310 = vector.load %arg21[%c0_171, %c0_172] : memref<1x8xf32, #tpu.memory_space<vmem>>, vector<1x8xf32>
    %311 = vector.broadcast %310 : vector<1x8xf32> to vector<8x8xf32>
    %312 = arith.addf %309, %311 : vector<8x8xf32>
    %313 = vector.extract_strided_slice %312 {offsets = [0, 0], sizes = [8, 4], strides = [1, 1]} : vector<8x8xf32> to vector<8x4xf32>
    %314 = vector.extract_strided_slice %312 {offsets = [0, 4], sizes = [8, 4], strides = [1, 1]} : vector<8x8xf32> to vector<8x4xf32>
    %315 = math.tanh %314 : vector<8x4xf32>
    %cst_173 = arith.constant 4.000000e+00 : f32
    %316 = vector.broadcast %cst_173 : f32 to vector<8x4xf32>
    %317 = arith.mulf %315, %316 : vector<8x4xf32>
    %cst_174 = arith.constant 0.000000e+00 : f32
    %318 = vector.broadcast %cst_174 : f32 to vector<8x4xf32>
    %319 = arith.addf %317, %318 : vector<8x4xf32>
    %320 = vector.broadcast %250 : vector<8x1xf32> to vector<8x4xf32>
    %321 = arith.mulf %320, %313 : vector<8x4xf32>
    %322 = arith.addf %216, %321 : vector<8x4xf32>
    %c2_175 = arith.constant 2 : index
    %c0_176 = arith.constant 0 : index
    %c0_177 = arith.constant 0 : index
    %323 = vector.load %arg3[%c2_175, %c0_176, %c0_177] : memref<8x8x1xf32, #tpu.memory_space<vmem>>, vector<1x8x1xf32>
    %324 = vector.shape_cast %323 : vector<1x8x1xf32> to vector<8x1xf32>
    %cst_178 = arith.constant 5.000000e-01 : f32
    %325 = vector.broadcast %cst_178 : f32 to vector<8x4xf32>
    %326 = arith.mulf %325, %319 : vector<8x4xf32>
    %327 = math.exp %326 : vector<8x4xf32>
    %328 = vector.broadcast %324 : vector<8x1xf32> to vector<8x4xf32>
    %329 = arith.mulf %328, %327 : vector<8x4xf32>
    %330 = arith.mulf %329, %248 : vector<8x4xf32>
    %331 = arith.addf %322, %330 : vector<8x4xf32>
    %c2_179 = arith.constant 2 : index
    %c0_180 = arith.constant 0 : index
    %c0_181 = arith.constant 0 : index
    %332 = vector.load %arg4[%c2_179, %c0_180, %c0_181] : memref<8x8x1xf32, #tpu.memory_space<vmem>>, vector<1x8x1xf32>
    %333 = vector.shape_cast %332 : vector<1x8x1xf32> to vector<8x1xf32>
    %334 = arith.mulf %248, %248 : vector<8x4xf32>
    %335 = arith.addf %334, %319 : vector<8x4xf32>
    %cst_182 = arith.constant dense<0.000000e+00> : vector<8xf32>
    %336 = vector.multi_reduction <add>, %335, %cst_182 [1] : vector<8x4xf32> to vector<8xf32>
    %337 = vector.shape_cast %336 : vector<8xf32> to vector<8x1xf32>
    %cst_183 = arith.constant 5.000000e-01 : f32
    %338 = vector.broadcast %cst_183 : f32 to vector<8x1xf32>
    %339 = arith.mulf %338, %337 : vector<8x1xf32>
    %340 = arith.subf %333, %339 : vector<8x1xf32>
    %c2_184 = arith.constant 2 : index
    %c0_185 = arith.constant 0 : index
    %c0_186 = arith.constant 0 : index
    %341 = vector.load %arg5[%c2_184, %c0_185, %c0_186] : memref<8x8x1xf32, #tpu.memory_space<vmem>>, vector<1x8x1xf32>
    %342 = vector.shape_cast %341 : vector<1x8x1xf32> to vector<8x1xf32>
    %343 = vector.broadcast %342 : vector<8x1xf32> to vector<8x4xf32>
    %344 = arith.mulf %331, %343 : vector<8x4xf32>
    %345 = arith.subf %216, %344 : vector<8x4xf32>
    %c2_187 = arith.constant 2 : index
    %c0_188 = arith.constant 0 : index
    %c0_189 = arith.constant 0 : index
    %346 = vector.load %arg6[%c2_187, %c0_188, %c0_189] : memref<8x8x1xf32, #tpu.memory_space<vmem>>, vector<1x8x1xf32>
    %347 = vector.shape_cast %346 : vector<1x8x1xf32> to vector<8x1xf32>
    %348 = vector.broadcast %347 : vector<8x1xf32> to vector<8x4xf32>
    %349 = arith.mulf %345, %348 : vector<8x4xf32>
    %c2_190 = arith.constant 2 : index
    %c0_191 = arith.constant 0 : index
    %c0_192 = arith.constant 0 : index
    %350 = vector.load %arg7[%c2_190, %c0_191, %c0_192] : memref<8x8x1xf32, #tpu.memory_space<vmem>>, vector<1x8x1xf32>
    %351 = vector.shape_cast %350 : vector<1x8x1xf32> to vector<8x1xf32>
    %352 = arith.mulf %349, %349 : vector<8x4xf32>
    %cst_193 = arith.constant dense<0.000000e+00> : vector<8xf32>
    %353 = vector.multi_reduction <add>, %352, %cst_193 [1] : vector<8x4xf32> to vector<8xf32>
    %354 = vector.shape_cast %353 : vector<8xf32> to vector<8x1xf32>
    %cst_194 = arith.constant 5.000000e-01 : f32
    %355 = vector.broadcast %cst_194 : f32 to vector<8x1xf32>
    %356 = arith.mulf %355, %354 : vector<8x1xf32>
    %357 = arith.subf %351, %356 : vector<8x1xf32>
    %358 = tpu.concatenate %331, %340, %357 in 1 : vector<8x4xf32>, vector<8x1xf32>, vector<8x1xf32> -> vector<8x6xf32>
    %c2_195 = arith.constant 2 : index
    %c0_196 = arith.constant 0 : index
    %c0_197 = arith.constant 0 : index
    %359 = vector.load %arg22[%c2_195, %c0_196, %c0_197] : memref<8x8x6xf32, #tpu.memory_space<vmem>>, vector<1x8x6xf32>
    %360 = vector.shape_cast %359 : vector<1x8x6xf32> to vector<8x6xf32>
    %361 = vector.shape_cast %358 : vector<8x6xf32> to vector<1x8x6xf32>
    tpu.vector_store %arg22[%c2_195, %c0_196, %c0_197], %361 {strides = array<i32>} : memref<8x8x6xf32, #tpu.memory_space<vmem>>, vector<1x8x6xf32>,
    %c3 = arith.constant 3 : index
    %c0_198 = arith.constant 0 : index
    %c0_199 = arith.constant 0 : index
    %362 = vector.load %arg1[%c3, %c0_198, %c0_199] : memref<8x8x4xf32, #tpu.memory_space<vmem>>, vector<1x8x4xf32>
    %363 = vector.shape_cast %362 : vector<1x8x4xf32> to vector<8x4xf32>
    %c3_200 = arith.constant 3 : index
    %c0_201 = arith.constant 0 : index
    %c0_202 = arith.constant 0 : index
    %364 = vector.load %arg2[%c3_200, %c0_201, %c0_202] : memref<8x8x1xf32, #tpu.memory_space<vmem>>, vector<1x8x1xf32>
    %365 = vector.shape_cast %364 : vector<1x8x1xf32> to vector<8x1xf32>
    %c24 = arith.constant 24 : index
    %c0_203 = arith.constant 0 : index
    %366 = vector.load %arg23[%c24, %c0_203] : memref<64x64xf32, #tpu.memory_space<vmem>>, vector<8x64xf32>
    %367 = arith.truncf %331 : vector<8x4xf32> to vector<8x4xbf16>
    %c0_204 = arith.constant 0 : index
    %c0_205 = arith.constant 0 : index
    %368 = vector.load %arg15[%c0_204, %c0_205] : memref<4x64xbf16, #tpu.memory_space<vmem>>, vector<4x64xbf16>
    %cst_206 = arith.constant dense<0.000000e+00> : vector<8x64xf32>
    %369 = tpu.matmul %367, %368, %cst_206 {dimension_numbers = #tpu.dot_dimension_numbers<[1], [0], [0], [1], [0, 0, 1, 1], [], []>} : vector<8x4xbf16>, vector<4x64xbf16>, vector<8x64xf32> -> vector<8x64xf32>
    %c0_207 = arith.constant 0 : index
    %c0_208 = arith.constant 0 : index
    %370 = vector.load %arg16[%c0_207, %c0_208] : memref<1x64xf32, #tpu.memory_space<vmem>>, vector<1x64xf32>
    %371 = vector.broadcast %370 : vector<1x64xf32> to vector<8x64xf32>
    %372 = arith.addf %369, %371 : vector<8x64xf32>
    %cst_209 = arith.constant 5.000000e-01 : f32
    %373 = vector.broadcast %cst_209 : f32 to vector<8x64xf32>
    %374 = arith.mulf %373, %372 : vector<8x64xf32>
    %cst_210 = arith.constant 4.471500e-02 : f32
    %375 = vector.broadcast %cst_210 : f32 to vector<8x64xf32>
    %376 = arith.mulf %375, %372 : vector<8x64xf32>
    %377 = arith.mulf %376, %372 : vector<8x64xf32>
    %378 = arith.mulf %377, %372 : vector<8x64xf32>
    %379 = arith.addf %372, %378 : vector<8x64xf32>
    %cst_211 = arith.constant 0.797884583 : f32
    %380 = vector.broadcast %cst_211 : f32 to vector<8x64xf32>
    %381 = arith.mulf %380, %379 : vector<8x64xf32>
    %382 = math.tanh %381 : vector<8x64xf32>
    %cst_212 = arith.constant 1.000000e+00 : f32
    %383 = vector.broadcast %cst_212 : f32 to vector<8x64xf32>
    %384 = arith.addf %383, %382 : vector<8x64xf32>
    %385 = arith.mulf %374, %384 : vector<8x64xf32>
    %386 = arith.truncf %385 : vector<8x64xf32> to vector<8x64xbf16>
    %c0_213 = arith.constant 0 : index
    %c0_214 = arith.constant 0 : index
    %387 = vector.load %arg17[%c0_213, %c0_214] : memref<64x64xbf16, #tpu.memory_space<vmem>>, vector<64x64xbf16>
    %cst_215 = arith.constant dense<0.000000e+00> : vector<8x64xf32>
    %388 = tpu.matmul %386, %387, %cst_215 {dimension_numbers = #tpu.dot_dimension_numbers<[1], [0], [0], [1], [0, 0, 1, 1], [], []>} : vector<8x64xbf16>, vector<64x64xbf16>, vector<8x64xf32> -> vector<8x64xf32>
    %389 = arith.addf %388, %366 : vector<8x64xf32>
    %cst_216 = arith.constant 5.000000e-01 : f32
    %390 = vector.broadcast %cst_216 : f32 to vector<8x64xf32>
    %391 = arith.mulf %390, %389 : vector<8x64xf32>
    %cst_217 = arith.constant 4.471500e-02 : f32
    %392 = vector.broadcast %cst_217 : f32 to vector<8x64xf32>
    %393 = arith.mulf %392, %389 : vector<8x64xf32>
    %394 = arith.mulf %393, %389 : vector<8x64xf32>
    %395 = arith.mulf %394, %389 : vector<8x64xf32>
    %396 = arith.addf %389, %395 : vector<8x64xf32>
    %cst_218 = arith.constant 0.797884583 : f32
    %397 = vector.broadcast %cst_218 : f32 to vector<8x64xf32>
    %398 = arith.mulf %397, %396 : vector<8x64xf32>
    %399 = math.tanh %398 : vector<8x64xf32>
    %cst_219 = arith.constant 1.000000e+00 : f32
    %400 = vector.broadcast %cst_219 : f32 to vector<8x64xf32>
    %401 = arith.addf %400, %399 : vector<8x64xf32>
    %402 = arith.mulf %391, %401 : vector<8x64xf32>
    %403 = arith.truncf %402 : vector<8x64xf32> to vector<8x64xbf16>
    %c0_220 = arith.constant 0 : index
    %c0_221 = arith.constant 0 : index
    %404 = vector.load %arg18[%c0_220, %c0_221] : memref<64x64xbf16, #tpu.memory_space<vmem>>, vector<64x64xbf16>
    %cst_222 = arith.constant dense<0.000000e+00> : vector<8x64xf32>
    %405 = tpu.matmul %403, %404, %cst_222 {dimension_numbers = #tpu.dot_dimension_numbers<[1], [0], [0], [1], [0, 0, 1, 1], [], []>} : vector<8x64xbf16>, vector<64x64xbf16>, vector<8x64xf32> -> vector<8x64xf32>
    %c0_223 = arith.constant 0 : index
    %c0_224 = arith.constant 0 : index
    %406 = vector.load %arg19[%c0_223, %c0_224] : memref<1x64xf32, #tpu.memory_space<vmem>>, vector<1x64xf32>
    %407 = vector.broadcast %406 : vector<1x64xf32> to vector<8x64xf32>
    %408 = arith.addf %405, %407 : vector<8x64xf32>
    %cst_225 = arith.constant 5.000000e-01 : f32
    %409 = vector.broadcast %cst_225 : f32 to vector<8x64xf32>
    %410 = arith.mulf %409, %408 : vector<8x64xf32>
    %cst_226 = arith.constant 4.471500e-02 : f32
    %411 = vector.broadcast %cst_226 : f32 to vector<8x64xf32>
    %412 = arith.mulf %411, %408 : vector<8x64xf32>
    %413 = arith.mulf %412, %408 : vector<8x64xf32>
    %414 = arith.mulf %413, %408 : vector<8x64xf32>
    %415 = arith.addf %408, %414 : vector<8x64xf32>
    %cst_227 = arith.constant 0.797884583 : f32
    %416 = vector.broadcast %cst_227 : f32 to vector<8x64xf32>
    %417 = arith.mulf %416, %415 : vector<8x64xf32>
    %418 = math.tanh %417 : vector<8x64xf32>
    %cst_228 = arith.constant 1.000000e+00 : f32
    %419 = vector.broadcast %cst_228 : f32 to vector<8x64xf32>
    %420 = arith.addf %419, %418 : vector<8x64xf32>
    %421 = arith.mulf %410, %420 : vector<8x64xf32>
    %422 = arith.truncf %421 : vector<8x64xf32> to vector<8x64xbf16>
    %c0_229 = arith.constant 0 : index
    %c0_230 = arith.constant 0 : index
    %423 = vector.load %arg20[%c0_229, %c0_230] : memref<64x8xbf16, #tpu.memory_space<vmem>>, vector<64x8xbf16>
    %cst_231 = arith.constant dense<0.000000e+00> : vector<8x8xf32>
    %424 = tpu.matmul %422, %423, %cst_231 {dimension_numbers = #tpu.dot_dimension_numbers<[1], [0], [0], [1], [0, 0, 1, 1], [], []>} : vector<8x64xbf16>, vector<64x8xbf16>, vector<8x8xf32> -> vector<8x8xf32>
    %c0_232 = arith.constant 0 : index
    %c0_233 = arith.constant 0 : index
    %425 = vector.load %arg21[%c0_232, %c0_233] : memref<1x8xf32, #tpu.memory_space<vmem>>, vector<1x8xf32>
    %426 = vector.broadcast %425 : vector<1x8xf32> to vector<8x8xf32>
    %427 = arith.addf %424, %426 : vector<8x8xf32>
    %428 = vector.extract_strided_slice %427 {offsets = [0, 0], sizes = [8, 4], strides = [1, 1]} : vector<8x8xf32> to vector<8x4xf32>
    %429 = vector.extract_strided_slice %427 {offsets = [0, 4], sizes = [8, 4], strides = [1, 1]} : vector<8x8xf32> to vector<8x4xf32>
    %430 = math.tanh %429 : vector<8x4xf32>
    %cst_234 = arith.constant 4.000000e+00 : f32
    %431 = vector.broadcast %cst_234 : f32 to vector<8x4xf32>
    %432 = arith.mulf %430, %431 : vector<8x4xf32>
    %cst_235 = arith.constant 0.000000e+00 : f32
    %433 = vector.broadcast %cst_235 : f32 to vector<8x4xf32>
    %434 = arith.addf %432, %433 : vector<8x4xf32>
    %435 = vector.broadcast %365 : vector<8x1xf32> to vector<8x4xf32>
    %436 = arith.mulf %435, %428 : vector<8x4xf32>
    %437 = arith.addf %331, %436 : vector<8x4xf32>
    %c3_236 = arith.constant 3 : index
    %c0_237 = arith.constant 0 : index
    %c0_238 = arith.constant 0 : index
    %438 = vector.load %arg3[%c3_236, %c0_237, %c0_238] : memref<8x8x1xf32, #tpu.memory_space<vmem>>, vector<1x8x1xf32>
    %439 = vector.shape_cast %438 : vector<1x8x1xf32> to vector<8x1xf32>
    %cst_239 = arith.constant 5.000000e-01 : f32
    %440 = vector.broadcast %cst_239 : f32 to vector<8x4xf32>
    %441 = arith.mulf %440, %434 : vector<8x4xf32>
    %442 = math.exp %441 : vector<8x4xf32>
    %443 = vector.broadcast %439 : vector<8x1xf32> to vector<8x4xf32>
    %444 = arith.mulf %443, %442 : vector<8x4xf32>
    %445 = arith.mulf %444, %363 : vector<8x4xf32>
    %446 = arith.addf %437, %445 : vector<8x4xf32>
    %c3_240 = arith.constant 3 : index
    %c0_241 = arith.constant 0 : index
    %c0_242 = arith.constant 0 : index
    %447 = vector.load %arg4[%c3_240, %c0_241, %c0_242] : memref<8x8x1xf32, #tpu.memory_space<vmem>>, vector<1x8x1xf32>
    %448 = vector.shape_cast %447 : vector<1x8x1xf32> to vector<8x1xf32>
    %449 = arith.mulf %363, %363 : vector<8x4xf32>
    %450 = arith.addf %449, %434 : vector<8x4xf32>
    %cst_243 = arith.constant dense<0.000000e+00> : vector<8xf32>
    %451 = vector.multi_reduction <add>, %450, %cst_243 [1] : vector<8x4xf32> to vector<8xf32>
    %452 = vector.shape_cast %451 : vector<8xf32> to vector<8x1xf32>
    %cst_244 = arith.constant 5.000000e-01 : f32
    %453 = vector.broadcast %cst_244 : f32 to vector<8x1xf32>
    %454 = arith.mulf %453, %452 : vector<8x1xf32>
    %455 = arith.subf %448, %454 : vector<8x1xf32>
    %c3_245 = arith.constant 3 : index
    %c0_246 = arith.constant 0 : index
    %c0_247 = arith.constant 0 : index
    %456 = vector.load %arg5[%c3_245, %c0_246, %c0_247] : memref<8x8x1xf32, #tpu.memory_space<vmem>>, vector<1x8x1xf32>
    %457 = vector.shape_cast %456 : vector<1x8x1xf32> to vector<8x1xf32>
    %458 = vector.broadcast %457 : vector<8x1xf32> to vector<8x4xf32>
    %459 = arith.mulf %446, %458 : vector<8x4xf32>
    %460 = arith.subf %331, %459 : vector<8x4xf32>
    %c3_248 = arith.constant 3 : index
    %c0_249 = arith.constant 0 : index
    %c0_250 = arith.constant 0 : index
    %461 = vector.load %arg6[%c3_248, %c0_249, %c0_250] : memref<8x8x1xf32, #tpu.memory_space<vmem>>, vector<1x8x1xf32>
    %462 = vector.shape_cast %461 : vector<1x8x1xf32> to vector<8x1xf32>
    %463 = vector.broadcast %462 : vector<8x1xf32> to vector<8x4xf32>
    %464 = arith.mulf %460, %463 : vector<8x4xf32>
    %c3_251 = arith.constant 3 : index
    %c0_252 = arith.constant 0 : index
    %c0_253 = arith.constant 0 : index
    %465 = vector.load %arg7[%c3_251, %c0_252, %c0_253] : memref<8x8x1xf32, #tpu.memory_space<vmem>>, vector<1x8x1xf32>
    %466 = vector.shape_cast %465 : vector<1x8x1xf32> to vector<8x1xf32>
    %467 = arith.mulf %464, %464 : vector<8x4xf32>
    %cst_254 = arith.constant dense<0.000000e+00> : vector<8xf32>
    %468 = vector.multi_reduction <add>, %467, %cst_254 [1] : vector<8x4xf32> to vector<8xf32>
    %469 = vector.shape_cast %468 : vector<8xf32> to vector<8x1xf32>
    %cst_255 = arith.constant 5.000000e-01 : f32
    %470 = vector.broadcast %cst_255 : f32 to vector<8x1xf32>
    %471 = arith.mulf %470, %469 : vector<8x1xf32>
    %472 = arith.subf %466, %471 : vector<8x1xf32>
    %473 = tpu.concatenate %446, %455, %472 in 1 : vector<8x4xf32>, vector<8x1xf32>, vector<8x1xf32> -> vector<8x6xf32>
    %c3_256 = arith.constant 3 : index
    %c0_257 = arith.constant 0 : index
    %c0_258 = arith.constant 0 : index
    %474 = vector.load %arg22[%c3_256, %c0_257, %c0_258] : memref<8x8x6xf32, #tpu.memory_space<vmem>>, vector<1x8x6xf32>
    %475 = vector.shape_cast %474 : vector<1x8x6xf32> to vector<8x6xf32>
    %476 = vector.shape_cast %473 : vector<8x6xf32> to vector<1x8x6xf32>
    tpu.vector_store %arg22[%c3_256, %c0_257, %c0_258], %476 {strides = array<i32>} : memref<8x8x6xf32, #tpu.memory_space<vmem>>, vector<1x8x6xf32>,
    %c4 = arith.constant 4 : index
    %c0_259 = arith.constant 0 : index
    %c0_260 = arith.constant 0 : index
    %477 = vector.load %arg1[%c4, %c0_259, %c0_260] : memref<8x8x4xf32, #tpu.memory_space<vmem>>, vector<1x8x4xf32>
    %478 = vector.shape_cast %477 : vector<1x8x4xf32> to vector<8x4xf32>
    %c4_261 = arith.constant 4 : index
    %c0_262 = arith.constant 0 : index
    %c0_263 = arith.constant 0 : index
    %479 = vector.load %arg2[%c4_261, %c0_262, %c0_263] : memref<8x8x1xf32, #tpu.memory_space<vmem>>, vector<1x8x1xf32>
    %480 = vector.shape_cast %479 : vector<1x8x1xf32> to vector<8x1xf32>
    %c32 = arith.constant 32 : index
    %c0_264 = arith.constant 0 : index
    %481 = vector.load %arg23[%c32, %c0_264] : memref<64x64xf32, #tpu.memory_space<vmem>>, vector<8x64xf32>
    %482 = arith.truncf %446 : vector<8x4xf32> to vector<8x4xbf16>
    %c0_265 = arith.constant 0 : index
    %c0_266 = arith.constant 0 : index
    %483 = vector.load %arg15[%c0_265, %c0_266] : memref<4x64xbf16, #tpu.memory_space<vmem>>, vector<4x64xbf16>
    %cst_267 = arith.constant dense<0.000000e+00> : vector<8x64xf32>
    %484 = tpu.matmul %482, %483, %cst_267 {dimension_numbers = #tpu.dot_dimension_numbers<[1], [0], [0], [1], [0, 0, 1, 1], [], []>} : vector<8x4xbf16>, vector<4x64xbf16>, vector<8x64xf32> -> vector<8x64xf32>
    %c0_268 = arith.constant 0 : index
    %c0_269 = arith.constant 0 : index
    %485 = vector.load %arg16[%c0_268, %c0_269] : memref<1x64xf32, #tpu.memory_space<vmem>>, vector<1x64xf32>
    %486 = vector.broadcast %485 : vector<1x64xf32> to vector<8x64xf32>
    %487 = arith.addf %484, %486 : vector<8x64xf32>
    %cst_270 = arith.constant 5.000000e-01 : f32
    %488 = vector.broadcast %cst_270 : f32 to vector<8x64xf32>
    %489 = arith.mulf %488, %487 : vector<8x64xf32>
    %cst_271 = arith.constant 4.471500e-02 : f32
    %490 = vector.broadcast %cst_271 : f32 to vector<8x64xf32>
    %491 = arith.mulf %490, %487 : vector<8x64xf32>
    %492 = arith.mulf %491, %487 : vector<8x64xf32>
    %493 = arith.mulf %492, %487 : vector<8x64xf32>
    %494 = arith.addf %487, %493 : vector<8x64xf32>
    %cst_272 = arith.constant 0.797884583 : f32
    %495 = vector.broadcast %cst_272 : f32 to vector<8x64xf32>
    %496 = arith.mulf %495, %494 : vector<8x64xf32>
    %497 = math.tanh %496 : vector<8x64xf32>
    %cst_273 = arith.constant 1.000000e+00 : f32
    %498 = vector.broadcast %cst_273 : f32 to vector<8x64xf32>
    %499 = arith.addf %498, %497 : vector<8x64xf32>
    %500 = arith.mulf %489, %499 : vector<8x64xf32>
    %501 = arith.truncf %500 : vector<8x64xf32> to vector<8x64xbf16>
    %c0_274 = arith.constant 0 : index
    %c0_275 = arith.constant 0 : index
    %502 = vector.load %arg17[%c0_274, %c0_275] : memref<64x64xbf16, #tpu.memory_space<vmem>>, vector<64x64xbf16>
    %cst_276 = arith.constant dense<0.000000e+00> : vector<8x64xf32>
    %503 = tpu.matmul %501, %502, %cst_276 {dimension_numbers = #tpu.dot_dimension_numbers<[1], [0], [0], [1], [0, 0, 1, 1], [], []>} : vector<8x64xbf16>, vector<64x64xbf16>, vector<8x64xf32> -> vector<8x64xf32>
    %504 = arith.addf %503, %481 : vector<8x64xf32>
    %cst_277 = arith.constant 5.000000e-01 : f32
    %505 = vector.broadcast %cst_277 : f32 to vector<8x64xf32>
    %506 = arith.mulf %505, %504 : vector<8x64xf32>
    %cst_278 = arith.constant 4.471500e-02 : f32
    %507 = vector.broadcast %cst_278 : f32 to vector<8x64xf32>
    %508 = arith.mulf %507, %504 : vector<8x64xf32>
    %509 = arith.mulf %508, %504 : vector<8x64xf32>
    %510 = arith.mulf %509, %504 : vector<8x64xf32>
    %511 = arith.addf %504, %510 : vector<8x64xf32>
    %cst_279 = arith.constant 0.797884583 : f32
    %512 = vector.broadcast %cst_279 : f32 to vector<8x64xf32>
    %513 = arith.mulf %512, %511 : vector<8x64xf32>
    %514 = math.tanh %513 : vector<8x64xf32>
    %cst_280 = arith.constant 1.000000e+00 : f32
    %515 = vector.broadcast %cst_280 : f32 to vector<8x64xf32>
    %516 = arith.addf %515, %514 : vector<8x64xf32>
    %517 = arith.mulf %506, %516 : vector<8x64xf32>
    %518 = arith.truncf %517 : vector<8x64xf32> to vector<8x64xbf16>
    %c0_281 = arith.constant 0 : index
    %c0_282 = arith.constant 0 : index
    %519 = vector.load %arg18[%c0_281, %c0_282] : memref<64x64xbf16, #tpu.memory_space<vmem>>, vector<64x64xbf16>
    %cst_283 = arith.constant dense<0.000000e+00> : vector<8x64xf32>
    %520 = tpu.matmul %518, %519, %cst_283 {dimension_numbers = #tpu.dot_dimension_numbers<[1], [0], [0], [1], [0, 0, 1, 1], [], []>} : vector<8x64xbf16>, vector<64x64xbf16>, vector<8x64xf32> -> vector<8x64xf32>
    %c0_284 = arith.constant 0 : index
    %c0_285 = arith.constant 0 : index
    %521 = vector.load %arg19[%c0_284, %c0_285] : memref<1x64xf32, #tpu.memory_space<vmem>>, vector<1x64xf32>
    %522 = vector.broadcast %521 : vector<1x64xf32> to vector<8x64xf32>
    %523 = arith.addf %520, %522 : vector<8x64xf32>
    %cst_286 = arith.constant 5.000000e-01 : f32
    %524 = vector.broadcast %cst_286 : f32 to vector<8x64xf32>
    %525 = arith.mulf %524, %523 : vector<8x64xf32>
    %cst_287 = arith.constant 4.471500e-02 : f32
    %526 = vector.broadcast %cst_287 : f32 to vector<8x64xf32>
    %527 = arith.mulf %526, %523 : vector<8x64xf32>
    %528 = arith.mulf %527, %523 : vector<8x64xf32>
    %529 = arith.mulf %528, %523 : vector<8x64xf32>
    %530 = arith.addf %523, %529 : vector<8x64xf32>
    %cst_288 = arith.constant 0.797884583 : f32
    %531 = vector.broadcast %cst_288 : f32 to vector<8x64xf32>
    %532 = arith.mulf %531, %530 : vector<8x64xf32>
    %533 = math.tanh %532 : vector<8x64xf32>
    %cst_289 = arith.constant 1.000000e+00 : f32
    %534 = vector.broadcast %cst_289 : f32 to vector<8x64xf32>
    %535 = arith.addf %534, %533 : vector<8x64xf32>
    %536 = arith.mulf %525, %535 : vector<8x64xf32>
    %537 = arith.truncf %536 : vector<8x64xf32> to vector<8x64xbf16>
    %c0_290 = arith.constant 0 : index
    %c0_291 = arith.constant 0 : index
    %538 = vector.load %arg20[%c0_290, %c0_291] : memref<64x8xbf16, #tpu.memory_space<vmem>>, vector<64x8xbf16>
    %cst_292 = arith.constant dense<0.000000e+00> : vector<8x8xf32>
    %539 = tpu.matmul %537, %538, %cst_292 {dimension_numbers = #tpu.dot_dimension_numbers<[1], [0], [0], [1], [0, 0, 1, 1], [], []>} : vector<8x64xbf16>, vector<64x8xbf16>, vector<8x8xf32> -> vector<8x8xf32>
    %c0_293 = arith.constant 0 : index
    %c0_294 = arith.constant 0 : index
    %540 = vector.load %arg21[%c0_293, %c0_294] : memref<1x8xf32, #tpu.memory_space<vmem>>, vector<1x8xf32>
    %541 = vector.broadcast %540 : vector<1x8xf32> to vector<8x8xf32>
    %542 = arith.addf %539, %541 : vector<8x8xf32>
    %543 = vector.extract_strided_slice %542 {offsets = [0, 0], sizes = [8, 4], strides = [1, 1]} : vector<8x8xf32> to vector<8x4xf32>
    %544 = vector.extract_strided_slice %542 {offsets = [0, 4], sizes = [8, 4], strides = [1, 1]} : vector<8x8xf32> to vector<8x4xf32>
    %545 = math.tanh %544 : vector<8x4xf32>
    %cst_295 = arith.constant 4.000000e+00 : f32
    %546 = vector.broadcast %cst_295 : f32 to vector<8x4xf32>
    %547 = arith.mulf %545, %546 : vector<8x4xf32>
    %cst_296 = arith.constant 0.000000e+00 : f32
    %548 = vector.broadcast %cst_296 : f32 to vector<8x4xf32>
    %549 = arith.addf %547, %548 : vector<8x4xf32>
    %550 = vector.broadcast %480 : vector<8x1xf32> to vector<8x4xf32>
    %551 = arith.mulf %550, %543 : vector<8x4xf32>
    %552 = arith.addf %446, %551 : vector<8x4xf32>
    %c4_297 = arith.constant 4 : index
    %c0_298 = arith.constant 0 : index
    %c0_299 = arith.constant 0 : index
    %553 = vector.load %arg3[%c4_297, %c0_298, %c0_299] : memref<8x8x1xf32, #tpu.memory_space<vmem>>, vector<1x8x1xf32>
    %554 = vector.shape_cast %553 : vector<1x8x1xf32> to vector<8x1xf32>
    %cst_300 = arith.constant 5.000000e-01 : f32
    %555 = vector.broadcast %cst_300 : f32 to vector<8x4xf32>
    %556 = arith.mulf %555, %549 : vector<8x4xf32>
    %557 = math.exp %556 : vector<8x4xf32>
    %558 = vector.broadcast %554 : vector<8x1xf32> to vector<8x4xf32>
    %559 = arith.mulf %558, %557 : vector<8x4xf32>
    %560 = arith.mulf %559, %478 : vector<8x4xf32>
    %561 = arith.addf %552, %560 : vector<8x4xf32>
    %c4_301 = arith.constant 4 : index
    %c0_302 = arith.constant 0 : index
    %c0_303 = arith.constant 0 : index
    %562 = vector.load %arg4[%c4_301, %c0_302, %c0_303] : memref<8x8x1xf32, #tpu.memory_space<vmem>>, vector<1x8x1xf32>
    %563 = vector.shape_cast %562 : vector<1x8x1xf32> to vector<8x1xf32>
    %564 = arith.mulf %478, %478 : vector<8x4xf32>
    %565 = arith.addf %564, %549 : vector<8x4xf32>
    %cst_304 = arith.constant dense<0.000000e+00> : vector<8xf32>
    %566 = vector.multi_reduction <add>, %565, %cst_304 [1] : vector<8x4xf32> to vector<8xf32>
    %567 = vector.shape_cast %566 : vector<8xf32> to vector<8x1xf32>
    %cst_305 = arith.constant 5.000000e-01 : f32
    %568 = vector.broadcast %cst_305 : f32 to vector<8x1xf32>
    %569 = arith.mulf %568, %567 : vector<8x1xf32>
    %570 = arith.subf %563, %569 : vector<8x1xf32>
    %c4_306 = arith.constant 4 : index
    %c0_307 = arith.constant 0 : index
    %c0_308 = arith.constant 0 : index
    %571 = vector.load %arg5[%c4_306, %c0_307, %c0_308] : memref<8x8x1xf32, #tpu.memory_space<vmem>>, vector<1x8x1xf32>
    %572 = vector.shape_cast %571 : vector<1x8x1xf32> to vector<8x1xf32>
    %573 = vector.broadcast %572 : vector<8x1xf32> to vector<8x4xf32>
    %574 = arith.mulf %561, %573 : vector<8x4xf32>
    %575 = arith.subf %446, %574 : vector<8x4xf32>
    %c4_309 = arith.constant 4 : index
    %c0_310 = arith.constant 0 : index
    %c0_311 = arith.constant 0 : index
    %576 = vector.load %arg6[%c4_309, %c0_310, %c0_311] : memref<8x8x1xf32, #tpu.memory_space<vmem>>, vector<1x8x1xf32>
    %577 = vector.shape_cast %576 : vector<1x8x1xf32> to vector<8x1xf32>
    %578 = vector.broadcast %577 : vector<8x1xf32> to vector<8x4xf32>
    %579 = arith.mulf %575, %578 : vector<8x4xf32>
    %c4_312 = arith.constant 4 : index
    %c0_313 = arith.constant 0 : index
    %c0_314 = arith.constant 0 : index
    %580 = vector.load %arg7[%c4_312, %c0_313, %c0_314] : memref<8x8x1xf32, #tpu.memory_space<vmem>>, vector<1x8x1xf32>
    %581 = vector.shape_cast %580 : vector<1x8x1xf32> to vector<8x1xf32>
    %582 = arith.mulf %579, %579 : vector<8x4xf32>
    %cst_315 = arith.constant dense<0.000000e+00> : vector<8xf32>
    %583 = vector.multi_reduction <add>, %582, %cst_315 [1] : vector<8x4xf32> to vector<8xf32>
    %584 = vector.shape_cast %583 : vector<8xf32> to vector<8x1xf32>
    %cst_316 = arith.constant 5.000000e-01 : f32
    %585 = vector.broadcast %cst_316 : f32 to vector<8x1xf32>
    %586 = arith.mulf %585, %584 : vector<8x1xf32>
    %587 = arith.subf %581, %586 : vector<8x1xf32>
    %588 = tpu.concatenate %561, %570, %587 in 1 : vector<8x4xf32>, vector<8x1xf32>, vector<8x1xf32> -> vector<8x6xf32>
    %c4_317 = arith.constant 4 : index
    %c0_318 = arith.constant 0 : index
    %c0_319 = arith.constant 0 : index
    %589 = vector.load %arg22[%c4_317, %c0_318, %c0_319] : memref<8x8x6xf32, #tpu.memory_space<vmem>>, vector<1x8x6xf32>
    %590 = vector.shape_cast %589 : vector<1x8x6xf32> to vector<8x6xf32>
    %591 = vector.shape_cast %588 : vector<8x6xf32> to vector<1x8x6xf32>
    tpu.vector_store %arg22[%c4_317, %c0_318, %c0_319], %591 {strides = array<i32>} : memref<8x8x6xf32, #tpu.memory_space<vmem>>, vector<1x8x6xf32>,
    %c5 = arith.constant 5 : index
    %c0_320 = arith.constant 0 : index
    %c0_321 = arith.constant 0 : index
    %592 = vector.load %arg1[%c5, %c0_320, %c0_321] : memref<8x8x4xf32, #tpu.memory_space<vmem>>, vector<1x8x4xf32>
    %593 = vector.shape_cast %592 : vector<1x8x4xf32> to vector<8x4xf32>
    %c5_322 = arith.constant 5 : index
    %c0_323 = arith.constant 0 : index
    %c0_324 = arith.constant 0 : index
    %594 = vector.load %arg2[%c5_322, %c0_323, %c0_324] : memref<8x8x1xf32, #tpu.memory_space<vmem>>, vector<1x8x1xf32>
    %595 = vector.shape_cast %594 : vector<1x8x1xf32> to vector<8x1xf32>
    %c40 = arith.constant 40 : index
    %c0_325 = arith.constant 0 : index
    %596 = vector.load %arg23[%c40, %c0_325] : memref<64x64xf32, #tpu.memory_space<vmem>>, vector<8x64xf32>
    %597 = arith.truncf %561 : vector<8x4xf32> to vector<8x4xbf16>
    %c0_326 = arith.constant 0 : index
    %c0_327 = arith.constant 0 : index
    %598 = vector.load %arg15[%c0_326, %c0_327] : memref<4x64xbf16, #tpu.memory_space<vmem>>, vector<4x64xbf16>
    %cst_328 = arith.constant dense<0.000000e+00> : vector<8x64xf32>
    %599 = tpu.matmul %597, %598, %cst_328 {dimension_numbers = #tpu.dot_dimension_numbers<[1], [0], [0], [1], [0, 0, 1, 1], [], []>} : vector<8x4xbf16>, vector<4x64xbf16>, vector<8x64xf32> -> vector<8x64xf32>
    %c0_329 = arith.constant 0 : index
    %c0_330 = arith.constant 0 : index
    %600 = vector.load %arg16[%c0_329, %c0_330] : memref<1x64xf32, #tpu.memory_space<vmem>>, vector<1x64xf32>
    %601 = vector.broadcast %600 : vector<1x64xf32> to vector<8x64xf32>
    %602 = arith.addf %599, %601 : vector<8x64xf32>
    %cst_331 = arith.constant 5.000000e-01 : f32
    %603 = vector.broadcast %cst_331 : f32 to vector<8x64xf32>
    %604 = arith.mulf %603, %602 : vector<8x64xf32>
    %cst_332 = arith.constant 4.471500e-02 : f32
    %605 = vector.broadcast %cst_332 : f32 to vector<8x64xf32>
    %606 = arith.mulf %605, %602 : vector<8x64xf32>
    %607 = arith.mulf %606, %602 : vector<8x64xf32>
    %608 = arith.mulf %607, %602 : vector<8x64xf32>
    %609 = arith.addf %602, %608 : vector<8x64xf32>
    %cst_333 = arith.constant 0.797884583 : f32
    %610 = vector.broadcast %cst_333 : f32 to vector<8x64xf32>
    %611 = arith.mulf %610, %609 : vector<8x64xf32>
    %612 = math.tanh %611 : vector<8x64xf32>
    %cst_334 = arith.constant 1.000000e+00 : f32
    %613 = vector.broadcast %cst_334 : f32 to vector<8x64xf32>
    %614 = arith.addf %613, %612 : vector<8x64xf32>
    %615 = arith.mulf %604, %614 : vector<8x64xf32>
    %616 = arith.truncf %615 : vector<8x64xf32> to vector<8x64xbf16>
    %c0_335 = arith.constant 0 : index
    %c0_336 = arith.constant 0 : index
    %617 = vector.load %arg17[%c0_335, %c0_336] : memref<64x64xbf16, #tpu.memory_space<vmem>>, vector<64x64xbf16>
    %cst_337 = arith.constant dense<0.000000e+00> : vector<8x64xf32>
    %618 = tpu.matmul %616, %617, %cst_337 {dimension_numbers = #tpu.dot_dimension_numbers<[1], [0], [0], [1], [0, 0, 1, 1], [], []>} : vector<8x64xbf16>, vector<64x64xbf16>, vector<8x64xf32> -> vector<8x64xf32>
    %619 = arith.addf %618, %596 : vector<8x64xf32>
    %cst_338 = arith.constant 5.000000e-01 : f32
    %620 = vector.broadcast %cst_338 : f32 to vector<8x64xf32>
    %621 = arith.mulf %620, %619 : vector<8x64xf32>
    %cst_339 = arith.constant 4.471500e-02 : f32
    %622 = vector.broadcast %cst_339 : f32 to vector<8x64xf32>
    %623 = arith.mulf %622, %619 : vector<8x64xf32>
    %624 = arith.mulf %623, %619 : vector<8x64xf32>
    %625 = arith.mulf %624, %619 : vector<8x64xf32>
    %626 = arith.addf %619, %625 : vector<8x64xf32>
    %cst_340 = arith.constant 0.797884583 : f32
    %627 = vector.broadcast %cst_340 : f32 to vector<8x64xf32>
    %628 = arith.mulf %627, %626 : vector<8x64xf32>
    %629 = math.tanh %628 : vector<8x64xf32>
    %cst_341 = arith.constant 1.000000e+00 : f32
    %630 = vector.broadcast %cst_341 : f32 to vector<8x64xf32>
    %631 = arith.addf %630, %629 : vector<8x64xf32>
    %632 = arith.mulf %621, %631 : vector<8x64xf32>
    %633 = arith.truncf %632 : vector<8x64xf32> to vector<8x64xbf16>
    %c0_342 = arith.constant 0 : index
    %c0_343 = arith.constant 0 : index
    %634 = vector.load %arg18[%c0_342, %c0_343] : memref<64x64xbf16, #tpu.memory_space<vmem>>, vector<64x64xbf16>
    %cst_344 = arith.constant dense<0.000000e+00> : vector<8x64xf32>
    %635 = tpu.matmul %633, %634, %cst_344 {dimension_numbers = #tpu.dot_dimension_numbers<[1], [0], [0], [1], [0, 0, 1, 1], [], []>} : vector<8x64xbf16>, vector<64x64xbf16>, vector<8x64xf32> -> vector<8x64xf32>
    %c0_345 = arith.constant 0 : index
    %c0_346 = arith.constant 0 : index
    %636 = vector.load %arg19[%c0_345, %c0_346] : memref<1x64xf32, #tpu.memory_space<vmem>>, vector<1x64xf32>
    %637 = vector.broadcast %636 : vector<1x64xf32> to vector<8x64xf32>
    %638 = arith.addf %635, %637 : vector<8x64xf32>
    %cst_347 = arith.constant 5.000000e-01 : f32
    %639 = vector.broadcast %cst_347 : f32 to vector<8x64xf32>
    %640 = arith.mulf %639, %638 : vector<8x64xf32>
    %cst_348 = arith.constant 4.471500e-02 : f32
    %641 = vector.broadcast %cst_348 : f32 to vector<8x64xf32>
    %642 = arith.mulf %641, %638 : vector<8x64xf32>
    %643 = arith.mulf %642, %638 : vector<8x64xf32>
    %644 = arith.mulf %643, %638 : vector<8x64xf32>
    %645 = arith.addf %638, %644 : vector<8x64xf32>
    %cst_349 = arith.constant 0.797884583 : f32
    %646 = vector.broadcast %cst_349 : f32 to vector<8x64xf32>
    %647 = arith.mulf %646, %645 : vector<8x64xf32>
    %648 = math.tanh %647 : vector<8x64xf32>
    %cst_350 = arith.constant 1.000000e+00 : f32
    %649 = vector.broadcast %cst_350 : f32 to vector<8x64xf32>
    %650 = arith.addf %649, %648 : vector<8x64xf32>
    %651 = arith.mulf %640, %650 : vector<8x64xf32>
    %652 = arith.truncf %651 : vector<8x64xf32> to vector<8x64xbf16>
    %c0_351 = arith.constant 0 : index
    %c0_352 = arith.constant 0 : index
    %653 = vector.load %arg20[%c0_351, %c0_352] : memref<64x8xbf16, #tpu.memory_space<vmem>>, vector<64x8xbf16>
    %cst_353 = arith.constant dense<0.000000e+00> : vector<8x8xf32>
    %654 = tpu.matmul %652, %653, %cst_353 {dimension_numbers = #tpu.dot_dimension_numbers<[1], [0], [0], [1], [0, 0, 1, 1], [], []>} : vector<8x64xbf16>, vector<64x8xbf16>, vector<8x8xf32> -> vector<8x8xf32>
    %c0_354 = arith.constant 0 : index
    %c0_355 = arith.constant 0 : index
    %655 = vector.load %arg21[%c0_354, %c0_355] : memref<1x8xf32, #tpu.memory_space<vmem>>, vector<1x8xf32>
    %656 = vector.broadcast %655 : vector<1x8xf32> to vector<8x8xf32>
    %657 = arith.addf %654, %656 : vector<8x8xf32>
    %658 = vector.extract_strided_slice %657 {offsets = [0, 0], sizes = [8, 4], strides = [1, 1]} : vector<8x8xf32> to vector<8x4xf32>
    %659 = vector.extract_strided_slice %657 {offsets = [0, 4], sizes = [8, 4], strides = [1, 1]} : vector<8x8xf32> to vector<8x4xf32>
    %660 = math.tanh %659 : vector<8x4xf32>
    %cst_356 = arith.constant 4.000000e+00 : f32
    %661 = vector.broadcast %cst_356 : f32 to vector<8x4xf32>
    %662 = arith.mulf %660, %661 : vector<8x4xf32>
    %cst_357 = arith.constant 0.000000e+00 : f32
    %663 = vector.broadcast %cst_357 : f32 to vector<8x4xf32>
    %664 = arith.addf %662, %663 : vector<8x4xf32>
    %665 = vector.broadcast %595 : vector<8x1xf32> to vector<8x4xf32>
    %666 = arith.mulf %665, %658 : vector<8x4xf32>
    %667 = arith.addf %561, %666 : vector<8x4xf32>
    %c5_358 = arith.constant 5 : index
    %c0_359 = arith.constant 0 : index
    %c0_360 = arith.constant 0 : index
    %668 = vector.load %arg3[%c5_358, %c0_359, %c0_360] : memref<8x8x1xf32, #tpu.memory_space<vmem>>, vector<1x8x1xf32>
    %669 = vector.shape_cast %668 : vector<1x8x1xf32> to vector<8x1xf32>
    %cst_361 = arith.constant 5.000000e-01 : f32
    %670 = vector.broadcast %cst_361 : f32 to vector<8x4xf32>
    %671 = arith.mulf %670, %664 : vector<8x4xf32>
    %672 = math.exp %671 : vector<8x4xf32>
    %673 = vector.broadcast %669 : vector<8x1xf32> to vector<8x4xf32>
    %674 = arith.mulf %673, %672 : vector<8x4xf32>
    %675 = arith.mulf %674, %593 : vector<8x4xf32>
    %676 = arith.addf %667, %675 : vector<8x4xf32>
    %c5_362 = arith.constant 5 : index
    %c0_363 = arith.constant 0 : index
    %c0_364 = arith.constant 0 : index
    %677 = vector.load %arg4[%c5_362, %c0_363, %c0_364] : memref<8x8x1xf32, #tpu.memory_space<vmem>>, vector<1x8x1xf32>
    %678 = vector.shape_cast %677 : vector<1x8x1xf32> to vector<8x1xf32>
    %679 = arith.mulf %593, %593 : vector<8x4xf32>
    %680 = arith.addf %679, %664 : vector<8x4xf32>
    %cst_365 = arith.constant dense<0.000000e+00> : vector<8xf32>
    %681 = vector.multi_reduction <add>, %680, %cst_365 [1] : vector<8x4xf32> to vector<8xf32>
    %682 = vector.shape_cast %681 : vector<8xf32> to vector<8x1xf32>
    %cst_366 = arith.constant 5.000000e-01 : f32
    %683 = vector.broadcast %cst_366 : f32 to vector<8x1xf32>
    %684 = arith.mulf %683, %682 : vector<8x1xf32>
    %685 = arith.subf %678, %684 : vector<8x1xf32>
    %c5_367 = arith.constant 5 : index
    %c0_368 = arith.constant 0 : index
    %c0_369 = arith.constant 0 : index
    %686 = vector.load %arg5[%c5_367, %c0_368, %c0_369] : memref<8x8x1xf32, #tpu.memory_space<vmem>>, vector<1x8x1xf32>
    %687 = vector.shape_cast %686 : vector<1x8x1xf32> to vector<8x1xf32>
    %688 = vector.broadcast %687 : vector<8x1xf32> to vector<8x4xf32>
    %689 = arith.mulf %676, %688 : vector<8x4xf32>
    %690 = arith.subf %561, %689 : vector<8x4xf32>
    %c5_370 = arith.constant 5 : index
    %c0_371 = arith.constant 0 : index
    %c0_372 = arith.constant 0 : index
    %691 = vector.load %arg6[%c5_370, %c0_371, %c0_372] : memref<8x8x1xf32, #tpu.memory_space<vmem>>, vector<1x8x1xf32>
    %692 = vector.shape_cast %691 : vector<1x8x1xf32> to vector<8x1xf32>
    %693 = vector.broadcast %692 : vector<8x1xf32> to vector<8x4xf32>
    %694 = arith.mulf %690, %693 : vector<8x4xf32>
    %c5_373 = arith.constant 5 : index
    %c0_374 = arith.constant 0 : index
    %c0_375 = arith.constant 0 : index
    %695 = vector.load %arg7[%c5_373, %c0_374, %c0_375] : memref<8x8x1xf32, #tpu.memory_space<vmem>>, vector<1x8x1xf32>
    %696 = vector.shape_cast %695 : vector<1x8x1xf32> to vector<8x1xf32>
    %697 = arith.mulf %694, %694 : vector<8x4xf32>
    %cst_376 = arith.constant dense<0.000000e+00> : vector<8xf32>
    %698 = vector.multi_reduction <add>, %697, %cst_376 [1] : vector<8x4xf32> to vector<8xf32>
    %699 = vector.shape_cast %698 : vector<8xf32> to vector<8x1xf32>
    %cst_377 = arith.constant 5.000000e-01 : f32
    %700 = vector.broadcast %cst_377 : f32 to vector<8x1xf32>
    %701 = arith.mulf %700, %699 : vector<8x1xf32>
    %702 = arith.subf %696, %701 : vector<8x1xf32>
    %703 = tpu.concatenate %676, %685, %702 in 1 : vector<8x4xf32>, vector<8x1xf32>, vector<8x1xf32> -> vector<8x6xf32>
    %c5_378 = arith.constant 5 : index
    %c0_379 = arith.constant 0 : index
    %c0_380 = arith.constant 0 : index
    %704 = vector.load %arg22[%c5_378, %c0_379, %c0_380] : memref<8x8x6xf32, #tpu.memory_space<vmem>>, vector<1x8x6xf32>
    %705 = vector.shape_cast %704 : vector<1x8x6xf32> to vector<8x6xf32>
    %706 = vector.shape_cast %703 : vector<8x6xf32> to vector<1x8x6xf32>
    tpu.vector_store %arg22[%c5_378, %c0_379, %c0_380], %706 {strides = array<i32>} : memref<8x8x6xf32, #tpu.memory_space<vmem>>, vector<1x8x6xf32>,
    %c6 = arith.constant 6 : index
    %c0_381 = arith.constant 0 : index
    %c0_382 = arith.constant 0 : index
    %707 = vector.load %arg1[%c6, %c0_381, %c0_382] : memref<8x8x4xf32, #tpu.memory_space<vmem>>, vector<1x8x4xf32>
    %708 = vector.shape_cast %707 : vector<1x8x4xf32> to vector<8x4xf32>
    %c6_383 = arith.constant 6 : index
    %c0_384 = arith.constant 0 : index
    %c0_385 = arith.constant 0 : index
    %709 = vector.load %arg2[%c6_383, %c0_384, %c0_385] : memref<8x8x1xf32, #tpu.memory_space<vmem>>, vector<1x8x1xf32>
    %710 = vector.shape_cast %709 : vector<1x8x1xf32> to vector<8x1xf32>
    %c48 = arith.constant 48 : index
    %c0_386 = arith.constant 0 : index
    %711 = vector.load %arg23[%c48, %c0_386] : memref<64x64xf32, #tpu.memory_space<vmem>>, vector<8x64xf32>
    %712 = arith.truncf %676 : vector<8x4xf32> to vector<8x4xbf16>
    %c0_387 = arith.constant 0 : index
    %c0_388 = arith.constant 0 : index
    %713 = vector.load %arg15[%c0_387, %c0_388] : memref<4x64xbf16, #tpu.memory_space<vmem>>, vector<4x64xbf16>
    %cst_389 = arith.constant dense<0.000000e+00> : vector<8x64xf32>
    %714 = tpu.matmul %712, %713, %cst_389 {dimension_numbers = #tpu.dot_dimension_numbers<[1], [0], [0], [1], [0, 0, 1, 1], [], []>} : vector<8x4xbf16>, vector<4x64xbf16>, vector<8x64xf32> -> vector<8x64xf32>
    %c0_390 = arith.constant 0 : index
    %c0_391 = arith.constant 0 : index
    %715 = vector.load %arg16[%c0_390, %c0_391] : memref<1x64xf32, #tpu.memory_space<vmem>>, vector<1x64xf32>
    %716 = vector.broadcast %715 : vector<1x64xf32> to vector<8x64xf32>
    %717 = arith.addf %714, %716 : vector<8x64xf32>
    %cst_392 = arith.constant 5.000000e-01 : f32
    %718 = vector.broadcast %cst_392 : f32 to vector<8x64xf32>
    %719 = arith.mulf %718, %717 : vector<8x64xf32>
    %cst_393 = arith.constant 4.471500e-02 : f32
    %720 = vector.broadcast %cst_393 : f32 to vector<8x64xf32>
    %721 = arith.mulf %720, %717 : vector<8x64xf32>
    %722 = arith.mulf %721, %717 : vector<8x64xf32>
    %723 = arith.mulf %722, %717 : vector<8x64xf32>
    %724 = arith.addf %717, %723 : vector<8x64xf32>
    %cst_394 = arith.constant 0.797884583 : f32
    %725 = vector.broadcast %cst_394 : f32 to vector<8x64xf32>
    %726 = arith.mulf %725, %724 : vector<8x64xf32>
    %727 = math.tanh %726 : vector<8x64xf32>
    %cst_395 = arith.constant 1.000000e+00 : f32
    %728 = vector.broadcast %cst_395 : f32 to vector<8x64xf32>
    %729 = arith.addf %728, %727 : vector<8x64xf32>
    %730 = arith.mulf %719, %729 : vector<8x64xf32>
    %731 = arith.truncf %730 : vector<8x64xf32> to vector<8x64xbf16>
    %c0_396 = arith.constant 0 : index
    %c0_397 = arith.constant 0 : index
    %732 = vector.load %arg17[%c0_396, %c0_397] : memref<64x64xbf16, #tpu.memory_space<vmem>>, vector<64x64xbf16>
    %cst_398 = arith.constant dense<0.000000e+00> : vector<8x64xf32>
    %733 = tpu.matmul %731, %732, %cst_398 {dimension_numbers = #tpu.dot_dimension_numbers<[1], [0], [0], [1], [0, 0, 1, 1], [], []>} : vector<8x64xbf16>, vector<64x64xbf16>, vector<8x64xf32> -> vector<8x64xf32>
    %734 = arith.addf %733, %711 : vector<8x64xf32>
    %cst_399 = arith.constant 5.000000e-01 : f32
    %735 = vector.broadcast %cst_399 : f32 to vector<8x64xf32>
    %736 = arith.mulf %735, %734 : vector<8x64xf32>
    %cst_400 = arith.constant 4.471500e-02 : f32
    %737 = vector.broadcast %cst_400 : f32 to vector<8x64xf32>
    %738 = arith.mulf %737, %734 : vector<8x64xf32>
    %739 = arith.mulf %738, %734 : vector<8x64xf32>
    %740 = arith.mulf %739, %734 : vector<8x64xf32>
    %741 = arith.addf %734, %740 : vector<8x64xf32>
    %cst_401 = arith.constant 0.797884583 : f32
    %742 = vector.broadcast %cst_401 : f32 to vector<8x64xf32>
    %743 = arith.mulf %742, %741 : vector<8x64xf32>
    %744 = math.tanh %743 : vector<8x64xf32>
    %cst_402 = arith.constant 1.000000e+00 : f32
    %745 = vector.broadcast %cst_402 : f32 to vector<8x64xf32>
    %746 = arith.addf %745, %744 : vector<8x64xf32>
    %747 = arith.mulf %736, %746 : vector<8x64xf32>
    %748 = arith.truncf %747 : vector<8x64xf32> to vector<8x64xbf16>
    %c0_403 = arith.constant 0 : index
    %c0_404 = arith.constant 0 : index
    %749 = vector.load %arg18[%c0_403, %c0_404] : memref<64x64xbf16, #tpu.memory_space<vmem>>, vector<64x64xbf16>
    %cst_405 = arith.constant dense<0.000000e+00> : vector<8x64xf32>
    %750 = tpu.matmul %748, %749, %cst_405 {dimension_numbers = #tpu.dot_dimension_numbers<[1], [0], [0], [1], [0, 0, 1, 1], [], []>} : vector<8x64xbf16>, vector<64x64xbf16>, vector<8x64xf32> -> vector<8x64xf32>
    %c0_406 = arith.constant 0 : index
    %c0_407 = arith.constant 0 : index
    %751 = vector.load %arg19[%c0_406, %c0_407] : memref<1x64xf32, #tpu.memory_space<vmem>>, vector<1x64xf32>
    %752 = vector.broadcast %751 : vector<1x64xf32> to vector<8x64xf32>
    %753 = arith.addf %750, %752 : vector<8x64xf32>
    %cst_408 = arith.constant 5.000000e-01 : f32
    %754 = vector.broadcast %cst_408 : f32 to vector<8x64xf32>
    %755 = arith.mulf %754, %753 : vector<8x64xf32>
    %cst_409 = arith.constant 4.471500e-02 : f32
    %756 = vector.broadcast %cst_409 : f32 to vector<8x64xf32>
    %757 = arith.mulf %756, %753 : vector<8x64xf32>
    %758 = arith.mulf %757, %753 : vector<8x64xf32>
    %759 = arith.mulf %758, %753 : vector<8x64xf32>
    %760 = arith.addf %753, %759 : vector<8x64xf32>
    %cst_410 = arith.constant 0.797884583 : f32
    %761 = vector.broadcast %cst_410 : f32 to vector<8x64xf32>
    %762 = arith.mulf %761, %760 : vector<8x64xf32>
    %763 = math.tanh %762 : vector<8x64xf32>
    %cst_411 = arith.constant 1.000000e+00 : f32
    %764 = vector.broadcast %cst_411 : f32 to vector<8x64xf32>
    %765 = arith.addf %764, %763 : vector<8x64xf32>
    %766 = arith.mulf %755, %765 : vector<8x64xf32>
    %767 = arith.truncf %766 : vector<8x64xf32> to vector<8x64xbf16>
    %c0_412 = arith.constant 0 : index
    %c0_413 = arith.constant 0 : index
    %768 = vector.load %arg20[%c0_412, %c0_413] : memref<64x8xbf16, #tpu.memory_space<vmem>>, vector<64x8xbf16>
    %cst_414 = arith.constant dense<0.000000e+00> : vector<8x8xf32>
    %769 = tpu.matmul %767, %768, %cst_414 {dimension_numbers = #tpu.dot_dimension_numbers<[1], [0], [0], [1], [0, 0, 1, 1], [], []>} : vector<8x64xbf16>, vector<64x8xbf16>, vector<8x8xf32> -> vector<8x8xf32>
    %c0_415 = arith.constant 0 : index
    %c0_416 = arith.constant 0 : index
    %770 = vector.load %arg21[%c0_415, %c0_416] : memref<1x8xf32, #tpu.memory_space<vmem>>, vector<1x8xf32>
    %771 = vector.broadcast %770 : vector<1x8xf32> to vector<8x8xf32>
    %772 = arith.addf %769, %771 : vector<8x8xf32>
    %773 = vector.extract_strided_slice %772 {offsets = [0, 0], sizes = [8, 4], strides = [1, 1]} : vector<8x8xf32> to vector<8x4xf32>
    %774 = vector.extract_strided_slice %772 {offsets = [0, 4], sizes = [8, 4], strides = [1, 1]} : vector<8x8xf32> to vector<8x4xf32>
    %775 = math.tanh %774 : vector<8x4xf32>
    %cst_417 = arith.constant 4.000000e+00 : f32
    %776 = vector.broadcast %cst_417 : f32 to vector<8x4xf32>
    %777 = arith.mulf %775, %776 : vector<8x4xf32>
    %cst_418 = arith.constant 0.000000e+00 : f32
    %778 = vector.broadcast %cst_418 : f32 to vector<8x4xf32>
    %779 = arith.addf %777, %778 : vector<8x4xf32>
    %780 = vector.broadcast %710 : vector<8x1xf32> to vector<8x4xf32>
    %781 = arith.mulf %780, %773 : vector<8x4xf32>
    %782 = arith.addf %676, %781 : vector<8x4xf32>
    %c6_419 = arith.constant 6 : index
    %c0_420 = arith.constant 0 : index
    %c0_421 = arith.constant 0 : index
    %783 = vector.load %arg3[%c6_419, %c0_420, %c0_421] : memref<8x8x1xf32, #tpu.memory_space<vmem>>, vector<1x8x1xf32>
    %784 = vector.shape_cast %783 : vector<1x8x1xf32> to vector<8x1xf32>
    %cst_422 = arith.constant 5.000000e-01 : f32
    %785 = vector.broadcast %cst_422 : f32 to vector<8x4xf32>
    %786 = arith.mulf %785, %779 : vector<8x4xf32>
    %787 = math.exp %786 : vector<8x4xf32>
    %788 = vector.broadcast %784 : vector<8x1xf32> to vector<8x4xf32>
    %789 = arith.mulf %788, %787 : vector<8x4xf32>
    %790 = arith.mulf %789, %708 : vector<8x4xf32>
    %791 = arith.addf %782, %790 : vector<8x4xf32>
    %c6_423 = arith.constant 6 : index
    %c0_424 = arith.constant 0 : index
    %c0_425 = arith.constant 0 : index
    %792 = vector.load %arg4[%c6_423, %c0_424, %c0_425] : memref<8x8x1xf32, #tpu.memory_space<vmem>>, vector<1x8x1xf32>
    %793 = vector.shape_cast %792 : vector<1x8x1xf32> to vector<8x1xf32>
    %794 = arith.mulf %708, %708 : vector<8x4xf32>
    %795 = arith.addf %794, %779 : vector<8x4xf32>
    %cst_426 = arith.constant dense<0.000000e+00> : vector<8xf32>
    %796 = vector.multi_reduction <add>, %795, %cst_426 [1] : vector<8x4xf32> to vector<8xf32>
    %797 = vector.shape_cast %796 : vector<8xf32> to vector<8x1xf32>
    %cst_427 = arith.constant 5.000000e-01 : f32
    %798 = vector.broadcast %cst_427 : f32 to vector<8x1xf32>
    %799 = arith.mulf %798, %797 : vector<8x1xf32>
    %800 = arith.subf %793, %799 : vector<8x1xf32>
    %c6_428 = arith.constant 6 : index
    %c0_429 = arith.constant 0 : index
    %c0_430 = arith.constant 0 : index
    %801 = vector.load %arg5[%c6_428, %c0_429, %c0_430] : memref<8x8x1xf32, #tpu.memory_space<vmem>>, vector<1x8x1xf32>
    %802 = vector.shape_cast %801 : vector<1x8x1xf32> to vector<8x1xf32>
    %803 = vector.broadcast %802 : vector<8x1xf32> to vector<8x4xf32>
    %804 = arith.mulf %791, %803 : vector<8x4xf32>
    %805 = arith.subf %676, %804 : vector<8x4xf32>
    %c6_431 = arith.constant 6 : index
    %c0_432 = arith.constant 0 : index
    %c0_433 = arith.constant 0 : index
    %806 = vector.load %arg6[%c6_431, %c0_432, %c0_433] : memref<8x8x1xf32, #tpu.memory_space<vmem>>, vector<1x8x1xf32>
    %807 = vector.shape_cast %806 : vector<1x8x1xf32> to vector<8x1xf32>
    %808 = vector.broadcast %807 : vector<8x1xf32> to vector<8x4xf32>
    %809 = arith.mulf %805, %808 : vector<8x4xf32>
    %c6_434 = arith.constant 6 : index
    %c0_435 = arith.constant 0 : index
    %c0_436 = arith.constant 0 : index
    %810 = vector.load %arg7[%c6_434, %c0_435, %c0_436] : memref<8x8x1xf32, #tpu.memory_space<vmem>>, vector<1x8x1xf32>
    %811 = vector.shape_cast %810 : vector<1x8x1xf32> to vector<8x1xf32>
    %812 = arith.mulf %809, %809 : vector<8x4xf32>
    %cst_437 = arith.constant dense<0.000000e+00> : vector<8xf32>
    %813 = vector.multi_reduction <add>, %812, %cst_437 [1] : vector<8x4xf32> to vector<8xf32>
    %814 = vector.shape_cast %813 : vector<8xf32> to vector<8x1xf32>
    %cst_438 = arith.constant 5.000000e-01 : f32
    %815 = vector.broadcast %cst_438 : f32 to vector<8x1xf32>
    %816 = arith.mulf %815, %814 : vector<8x1xf32>
    %817 = arith.subf %811, %816 : vector<8x1xf32>
    %818 = tpu.concatenate %791, %800, %817 in 1 : vector<8x4xf32>, vector<8x1xf32>, vector<8x1xf32> -> vector<8x6xf32>
    %c6_439 = arith.constant 6 : index
    %c0_440 = arith.constant 0 : index
    %c0_441 = arith.constant 0 : index
    %819 = vector.load %arg22[%c6_439, %c0_440, %c0_441] : memref<8x8x6xf32, #tpu.memory_space<vmem>>, vector<1x8x6xf32>
    %820 = vector.shape_cast %819 : vector<1x8x6xf32> to vector<8x6xf32>
    %821 = vector.shape_cast %818 : vector<8x6xf32> to vector<1x8x6xf32>
    tpu.vector_store %arg22[%c6_439, %c0_440, %c0_441], %821 {strides = array<i32>} : memref<8x8x6xf32, #tpu.memory_space<vmem>>, vector<1x8x6xf32>,
    %c7 = arith.constant 7 : index
    %c0_442 = arith.constant 0 : index
    %c0_443 = arith.constant 0 : index
    %822 = vector.load %arg1[%c7, %c0_442, %c0_443] : memref<8x8x4xf32, #tpu.memory_space<vmem>>, vector<1x8x4xf32>
    %823 = vector.shape_cast %822 : vector<1x8x4xf32> to vector<8x4xf32>
    %c7_444 = arith.constant 7 : index
    %c0_445 = arith.constant 0 : index
    %c0_446 = arith.constant 0 : index
    %824 = vector.load %arg2[%c7_444, %c0_445, %c0_446] : memref<8x8x1xf32, #tpu.memory_space<vmem>>, vector<1x8x1xf32>
    %825 = vector.shape_cast %824 : vector<1x8x1xf32> to vector<8x1xf32>
    %c56 = arith.constant 56 : index
    %c0_447 = arith.constant 0 : index
    %826 = vector.load %arg23[%c56, %c0_447] : memref<64x64xf32, #tpu.memory_space<vmem>>, vector<8x64xf32>
    %827 = arith.truncf %791 : vector<8x4xf32> to vector<8x4xbf16>
    %c0_448 = arith.constant 0 : index
    %c0_449 = arith.constant 0 : index
    %828 = vector.load %arg15[%c0_448, %c0_449] : memref<4x64xbf16, #tpu.memory_space<vmem>>, vector<4x64xbf16>
    %cst_450 = arith.constant dense<0.000000e+00> : vector<8x64xf32>
    %829 = tpu.matmul %827, %828, %cst_450 {dimension_numbers = #tpu.dot_dimension_numbers<[1], [0], [0], [1], [0, 0, 1, 1], [], []>} : vector<8x4xbf16>, vector<4x64xbf16>, vector<8x64xf32> -> vector<8x64xf32>
    %c0_451 = arith.constant 0 : index
    %c0_452 = arith.constant 0 : index
    %830 = vector.load %arg16[%c0_451, %c0_452] : memref<1x64xf32, #tpu.memory_space<vmem>>, vector<1x64xf32>
    %831 = vector.broadcast %830 : vector<1x64xf32> to vector<8x64xf32>
    %832 = arith.addf %829, %831 : vector<8x64xf32>
    %cst_453 = arith.constant 5.000000e-01 : f32
    %833 = vector.broadcast %cst_453 : f32 to vector<8x64xf32>
    %834 = arith.mulf %833, %832 : vector<8x64xf32>
    %cst_454 = arith.constant 4.471500e-02 : f32
    %835 = vector.broadcast %cst_454 : f32 to vector<8x64xf32>
    %836 = arith.mulf %835, %832 : vector<8x64xf32>
    %837 = arith.mulf %836, %832 : vector<8x64xf32>
    %838 = arith.mulf %837, %832 : vector<8x64xf32>
    %839 = arith.addf %832, %838 : vector<8x64xf32>
    %cst_455 = arith.constant 0.797884583 : f32
    %840 = vector.broadcast %cst_455 : f32 to vector<8x64xf32>
    %841 = arith.mulf %840, %839 : vector<8x64xf32>
    %842 = math.tanh %841 : vector<8x64xf32>
    %cst_456 = arith.constant 1.000000e+00 : f32
    %843 = vector.broadcast %cst_456 : f32 to vector<8x64xf32>
    %844 = arith.addf %843, %842 : vector<8x64xf32>
    %845 = arith.mulf %834, %844 : vector<8x64xf32>
    %846 = arith.truncf %845 : vector<8x64xf32> to vector<8x64xbf16>
    %c0_457 = arith.constant 0 : index
    %c0_458 = arith.constant 0 : index
    %847 = vector.load %arg17[%c0_457, %c0_458] : memref<64x64xbf16, #tpu.memory_space<vmem>>, vector<64x64xbf16>
    %cst_459 = arith.constant dense<0.000000e+00> : vector<8x64xf32>
    %848 = tpu.matmul %846, %847, %cst_459 {dimension_numbers = #tpu.dot_dimension_numbers<[1], [0], [0], [1], [0, 0, 1, 1], [], []>} : vector<8x64xbf16>, vector<64x64xbf16>, vector<8x64xf32> -> vector<8x64xf32>
    %849 = arith.addf %848, %826 : vector<8x64xf32>
    %cst_460 = arith.constant 5.000000e-01 : f32
    %850 = vector.broadcast %cst_460 : f32 to vector<8x64xf32>
    %851 = arith.mulf %850, %849 : vector<8x64xf32>
    %cst_461 = arith.constant 4.471500e-02 : f32
    %852 = vector.broadcast %cst_461 : f32 to vector<8x64xf32>
    %853 = arith.mulf %852, %849 : vector<8x64xf32>
    %854 = arith.mulf %853, %849 : vector<8x64xf32>
    %855 = arith.mulf %854, %849 : vector<8x64xf32>
    %856 = arith.addf %849, %855 : vector<8x64xf32>
    %cst_462 = arith.constant 0.797884583 : f32
    %857 = vector.broadcast %cst_462 : f32 to vector<8x64xf32>
    %858 = arith.mulf %857, %856 : vector<8x64xf32>
    %859 = math.tanh %858 : vector<8x64xf32>
    %cst_463 = arith.constant 1.000000e+00 : f32
    %860 = vector.broadcast %cst_463 : f32 to vector<8x64xf32>
    %861 = arith.addf %860, %859 : vector<8x64xf32>
    %862 = arith.mulf %851, %861 : vector<8x64xf32>
    %863 = arith.truncf %862 : vector<8x64xf32> to vector<8x64xbf16>
    %c0_464 = arith.constant 0 : index
    %c0_465 = arith.constant 0 : index
    %864 = vector.load %arg18[%c0_464, %c0_465] : memref<64x64xbf16, #tpu.memory_space<vmem>>, vector<64x64xbf16>
    %cst_466 = arith.constant dense<0.000000e+00> : vector<8x64xf32>
    %865 = tpu.matmul %863, %864, %cst_466 {dimension_numbers = #tpu.dot_dimension_numbers<[1], [0], [0], [1], [0, 0, 1, 1], [], []>} : vector<8x64xbf16>, vector<64x64xbf16>, vector<8x64xf32> -> vector<8x64xf32>
    %c0_467 = arith.constant 0 : index
    %c0_468 = arith.constant 0 : index
    %866 = vector.load %arg19[%c0_467, %c0_468] : memref<1x64xf32, #tpu.memory_space<vmem>>, vector<1x64xf32>
    %867 = vector.broadcast %866 : vector<1x64xf32> to vector<8x64xf32>
    %868 = arith.addf %865, %867 : vector<8x64xf32>
    %cst_469 = arith.constant 5.000000e-01 : f32
    %869 = vector.broadcast %cst_469 : f32 to vector<8x64xf32>
    %870 = arith.mulf %869, %868 : vector<8x64xf32>
    %cst_470 = arith.constant 4.471500e-02 : f32
    %871 = vector.broadcast %cst_470 : f32 to vector<8x64xf32>
    %872 = arith.mulf %871, %868 : vector<8x64xf32>
    %873 = arith.mulf %872, %868 : vector<8x64xf32>
    %874 = arith.mulf %873, %868 : vector<8x64xf32>
    %875 = arith.addf %868, %874 : vector<8x64xf32>
    %cst_471 = arith.constant 0.797884583 : f32
    %876 = vector.broadcast %cst_471 : f32 to vector<8x64xf32>
    %877 = arith.mulf %876, %875 : vector<8x64xf32>
    %878 = math.tanh %877 : vector<8x64xf32>
    %cst_472 = arith.constant 1.000000e+00 : f32
    %879 = vector.broadcast %cst_472 : f32 to vector<8x64xf32>
    %880 = arith.addf %879, %878 : vector<8x64xf32>
    %881 = arith.mulf %870, %880 : vector<8x64xf32>
    %882 = arith.truncf %881 : vector<8x64xf32> to vector<8x64xbf16>
    %c0_473 = arith.constant 0 : index
    %c0_474 = arith.constant 0 : index
    %883 = vector.load %arg20[%c0_473, %c0_474] : memref<64x8xbf16, #tpu.memory_space<vmem>>, vector<64x8xbf16>
    %cst_475 = arith.constant dense<0.000000e+00> : vector<8x8xf32>
    %884 = tpu.matmul %882, %883, %cst_475 {dimension_numbers = #tpu.dot_dimension_numbers<[1], [0], [0], [1], [0, 0, 1, 1], [], []>} : vector<8x64xbf16>, vector<64x8xbf16>, vector<8x8xf32> -> vector<8x8xf32>
    %c0_476 = arith.constant 0 : index
    %c0_477 = arith.constant 0 : index
    %885 = vector.load %arg21[%c0_476, %c0_477] : memref<1x8xf32, #tpu.memory_space<vmem>>, vector<1x8xf32>
    %886 = vector.broadcast %885 : vector<1x8xf32> to vector<8x8xf32>
    %887 = arith.addf %884, %886 : vector<8x8xf32>
    %888 = vector.extract_strided_slice %887 {offsets = [0, 0], sizes = [8, 4], strides = [1, 1]} : vector<8x8xf32> to vector<8x4xf32>
    %889 = vector.extract_strided_slice %887 {offsets = [0, 4], sizes = [8, 4], strides = [1, 1]} : vector<8x8xf32> to vector<8x4xf32>
    %890 = math.tanh %889 : vector<8x4xf32>
    %cst_478 = arith.constant 4.000000e+00 : f32
    %891 = vector.broadcast %cst_478 : f32 to vector<8x4xf32>
    %892 = arith.mulf %890, %891 : vector<8x4xf32>
    %cst_479 = arith.constant 0.000000e+00 : f32
    %893 = vector.broadcast %cst_479 : f32 to vector<8x4xf32>
    %894 = arith.addf %892, %893 : vector<8x4xf32>
    %895 = vector.broadcast %825 : vector<8x1xf32> to vector<8x4xf32>
    %896 = arith.mulf %895, %888 : vector<8x4xf32>
    %897 = arith.addf %791, %896 : vector<8x4xf32>
    %c7_480 = arith.constant 7 : index
    %c0_481 = arith.constant 0 : index
    %c0_482 = arith.constant 0 : index
    %898 = vector.load %arg3[%c7_480, %c0_481, %c0_482] : memref<8x8x1xf32, #tpu.memory_space<vmem>>, vector<1x8x1xf32>
    %899 = vector.shape_cast %898 : vector<1x8x1xf32> to vector<8x1xf32>
    %cst_483 = arith.constant 5.000000e-01 : f32
    %900 = vector.broadcast %cst_483 : f32 to vector<8x4xf32>
    %901 = arith.mulf %900, %894 : vector<8x4xf32>
    %902 = math.exp %901 : vector<8x4xf32>
    %903 = vector.broadcast %899 : vector<8x1xf32> to vector<8x4xf32>
    %904 = arith.mulf %903, %902 : vector<8x4xf32>
    %905 = arith.mulf %904, %823 : vector<8x4xf32>
    %906 = arith.addf %897, %905 : vector<8x4xf32>
    %c7_484 = arith.constant 7 : index
    %c0_485 = arith.constant 0 : index
    %c0_486 = arith.constant 0 : index
    %907 = vector.load %arg4[%c7_484, %c0_485, %c0_486] : memref<8x8x1xf32, #tpu.memory_space<vmem>>, vector<1x8x1xf32>
    %908 = vector.shape_cast %907 : vector<1x8x1xf32> to vector<8x1xf32>
    %909 = arith.mulf %823, %823 : vector<8x4xf32>
    %910 = arith.addf %909, %894 : vector<8x4xf32>
    %cst_487 = arith.constant dense<0.000000e+00> : vector<8xf32>
    %911 = vector.multi_reduction <add>, %910, %cst_487 [1] : vector<8x4xf32> to vector<8xf32>
    %912 = vector.shape_cast %911 : vector<8xf32> to vector<8x1xf32>
    %cst_488 = arith.constant 5.000000e-01 : f32
    %913 = vector.broadcast %cst_488 : f32 to vector<8x1xf32>
    %914 = arith.mulf %913, %912 : vector<8x1xf32>
    %915 = arith.subf %908, %914 : vector<8x1xf32>
    %c7_489 = arith.constant 7 : index
    %c0_490 = arith.constant 0 : index
    %c0_491 = arith.constant 0 : index
    %916 = vector.load %arg5[%c7_489, %c0_490, %c0_491] : memref<8x8x1xf32, #tpu.memory_space<vmem>>, vector<1x8x1xf32>
    %917 = vector.shape_cast %916 : vector<1x8x1xf32> to vector<8x1xf32>
    %918 = vector.broadcast %917 : vector<8x1xf32> to vector<8x4xf32>
    %919 = arith.mulf %906, %918 : vector<8x4xf32>
    %920 = arith.subf %791, %919 : vector<8x4xf32>
    %c7_492 = arith.constant 7 : index
    %c0_493 = arith.constant 0 : index
    %c0_494 = arith.constant 0 : index
    %921 = vector.load %arg6[%c7_492, %c0_493, %c0_494] : memref<8x8x1xf32, #tpu.memory_space<vmem>>, vector<1x8x1xf32>
    %922 = vector.shape_cast %921 : vector<1x8x1xf32> to vector<8x1xf32>
    %923 = vector.broadcast %922 : vector<8x1xf32> to vector<8x4xf32>
    %924 = arith.mulf %920, %923 : vector<8x4xf32>
    %c7_495 = arith.constant 7 : index
    %c0_496 = arith.constant 0 : index
    %c0_497 = arith.constant 0 : index
    %925 = vector.load %arg7[%c7_495, %c0_496, %c0_497] : memref<8x8x1xf32, #tpu.memory_space<vmem>>, vector<1x8x1xf32>
    %926 = vector.shape_cast %925 : vector<1x8x1xf32> to vector<8x1xf32>
    %927 = arith.mulf %924, %924 : vector<8x4xf32>
    %cst_498 = arith.constant dense<0.000000e+00> : vector<8xf32>
    %928 = vector.multi_reduction <add>, %927, %cst_498 [1] : vector<8x4xf32> to vector<8xf32>
    %929 = vector.shape_cast %928 : vector<8xf32> to vector<8x1xf32>
    %cst_499 = arith.constant 5.000000e-01 : f32
    %930 = vector.broadcast %cst_499 : f32 to vector<8x1xf32>
    %931 = arith.mulf %930, %929 : vector<8x1xf32>
    %932 = arith.subf %926, %931 : vector<8x1xf32>
    %933 = tpu.concatenate %906, %915, %932 in 1 : vector<8x4xf32>, vector<8x1xf32>, vector<8x1xf32> -> vector<8x6xf32>
    %c7_500 = arith.constant 7 : index
    %c0_501 = arith.constant 0 : index
    %c0_502 = arith.constant 0 : index
    %934 = vector.load %arg22[%c7_500, %c0_501, %c0_502] : memref<8x8x6xf32, #tpu.memory_space<vmem>>, vector<1x8x6xf32>
    %935 = vector.shape_cast %934 : vector<1x8x6xf32> to vector<8x6xf32>
    %936 = vector.shape_cast %933 : vector<8x6xf32> to vector<1x8x6xf32>
    tpu.vector_store %arg22[%c7_500, %c0_501, %c0_502], %936 {strides = array<i32>} : memref<8x8x6xf32, #tpu.memory_space<vmem>>, vector<1x8x6xf32>,
    return
  }
}

</mosaic_0001>

<llo_original>
// kernel: tpu_custom_call.1
$region0: #{tpu_custom_call.1}
  #allocation0 [shape = 'u32[]', space=smem, size = 0x4, offset = 0x4, fixed_abs, tag = 'smem constant byte address 0x4 - core index']
  #allocation1 [shape = 'u32[144,128]{1,0:T(1,128)}', space=vmem, size = 0x12000, scoped, tag = 'internal scratch']
  #allocation2 [shape = 'f32[64,64]{1,0:T(8,128)}', space=vmem, size = 0x8000, scoped, tag = 'scratch operand']
  %s0 = inlined_call_operand.vmem [shape: f32[8,4], index: 0, kind: input, shape index: {}]
  %s1 = inlined_call_operand.vmem [shape: f32[8,8,4], index: 1, kind: input, shape index: {}]
  %s2 = inlined_call_operand.vmem [shape: f32[8,8,1], index: 2, kind: input, shape index: {}]
  %s3 = inlined_call_operand.vmem [shape: f32[8,8,1], index: 3, kind: input, shape index: {}]
  %s4 = inlined_call_operand.vmem [shape: f32[8,8,1], index: 4, kind: input, shape index: {}]
  %s5 = inlined_call_operand.vmem [shape: f32[8,8,1], index: 5, kind: input, shape index: {}]
  %s6 = inlined_call_operand.vmem [shape: f32[8,8,1], index: 6, kind: input, shape index: {}]
  %s7 = inlined_call_operand.vmem [shape: f32[8,8,1], index: 7, kind: input, shape index: {}]
  %s8 = inlined_call_operand.vmem [shape: bf16[64,16], index: 8, kind: input, shape index: {}]
  %s9 = inlined_call_operand.vmem [shape: bf16[16,64], index: 9, kind: input, shape index: {}]
  %s10 = inlined_call_operand.vmem [shape: f32[1,64], index: 10, kind: input, shape index: {}]
  %s11 = inlined_call_operand.vmem [shape: bf16[64,32], index: 11, kind: input, shape index: {}]
  %s12 = inlined_call_operand.vmem [shape: f32[1,32], index: 12, kind: input, shape index: {}]
  %s13 = inlined_call_operand.vmem [shape: bf16[32,64], index: 13, kind: input, shape index: {}]
  %s14 = inlined_call_operand.vmem [shape: f32[1,64], index: 14, kind: input, shape index: {}]
  %s15 = inlined_call_operand.vmem [shape: bf16[4,64], index: 15, kind: input, shape index: {}]
  %s16 = inlined_call_operand.vmem [shape: f32[1,64], index: 16, kind: input, shape index: {}]
  %s17 = inlined_call_operand.vmem [shape: bf16[64,64], index: 17, kind: input, shape index: {}]
  %s18 = inlined_call_operand.vmem [shape: bf16[64,64], index: 18, kind: input, shape index: {}]
  %s19 = inlined_call_operand.vmem [shape: f32[1,64], index: 19, kind: input, shape index: {}]
  %s20 = inlined_call_operand.vmem [shape: bf16[64,8], index: 20, kind: input, shape index: {}]
  %s21 = inlined_call_operand.vmem [shape: f32[1,8], index: 21, kind: input, shape index: {}]
  %s22 = inlined_call_operand.vmem [shape: f32[8,8,6], index: 22, kind: output, shape index: {}]
  %s23 = sld [smem:[#allocation0]]
  $region98: #{tpu_custom_call.1} parent=0
    _
  %s25 = ssub.s32 1, %s23
  %s26 = scalar_select 0, %s25, %s23
  // Predicated region
  $region2: #{tpu_custom_call.1} parent=0 // pred_check
    _
  $region3: #{tpu_custom_call.1} parent=0 // pred_check_branch
    %28 = sbr.rel (0) target = $region5
  $region4: #{tpu_custom_call.1} parent=0 // pred_region
    _
  $region5: #{tpu_custom_call.1} parent=0 // pred_fallthru
    _
  // Predicated region
  $region6: #{tpu_custom_call.1} parent=0 // pred_check
    _
  $region7: #{tpu_custom_call.1} parent=0 // pred_check_branch
    %30 = sbr.rel (0) target = $region9
  $region8: #{tpu_custom_call.1} parent=0 // pred_region
    _
  $region9: #{tpu_custom_call.1} parent=0 // pred_fallthru
    _
  // Predicated region
  $region10: #{tpu_custom_call.1} parent=0 // pred_check
    _
  $region11: #{tpu_custom_call.1} parent=0 // pred_check_branch
    %32 = sbr.rel (0) target = $region13
  $region12: #{tpu_custom_call.1} parent=0 // pred_region
    _
  $region13: #{tpu_custom_call.1} parent=0 // pred_fallthru
    _
  // Predicated region
  $region14: #{tpu_custom_call.1} parent=0 // pred_check
    _
  $region15: #{tpu_custom_call.1} parent=0 // pred_check_branch
    %34 = sbr.rel (0) target = $region17
  $region16: #{tpu_custom_call.1} parent=0 // pred_region
    _
  $region17: #{tpu_custom_call.1} parent=0 // pred_fallthru
    _
  // Predicated region
  $region18: #{tpu_custom_call.1} parent=0 // pred_check
    _
  $region19: #{tpu_custom_call.1} parent=0 // pred_check_branch
    %36 = sbr.rel (0) target = $region21
  $region20: #{tpu_custom_call.1} parent=0 // pred_region
    _
  $region21: #{tpu_custom_call.1} parent=0 // pred_fallthru
    _
  // Predicated region
  $region22: #{tpu_custom_call.1} parent=0 // pred_check
    _
  $region23: #{tpu_custom_call.1} parent=0 // pred_check_branch
    %38 = sbr.rel (0) target = $region25
  $region24: #{tpu_custom_call.1} parent=0 // pred_region
    _
  $region25: #{tpu_custom_call.1} parent=0 // pred_fallthru
    _
  // Predicated region
  $region26: #{tpu_custom_call.1} parent=0 // pred_check
    _
  $region27: #{tpu_custom_call.1} parent=0 // pred_check_branch
    %40 = sbr.rel (0) target = $region29
  $region28: #{tpu_custom_call.1} parent=0 // pred_region
    _
  $region29: #{tpu_custom_call.1} parent=0 // pred_fallthru
    _
  // Predicated region
  $region30: #{tpu_custom_call.1} parent=0 // pred_check
    _
  $region31: #{tpu_custom_call.1} parent=0 // pred_check_branch
    %42 = sbr.rel (0) target = $region33
  $region32: #{tpu_custom_call.1} parent=0 // pred_region
    _
  $region33: #{tpu_custom_call.1} parent=0 // pred_fallthru
    _
  // Predicated region
  $region34: #{tpu_custom_call.1} parent=0 // pred_check
    _
  $region35: #{tpu_custom_call.1} parent=0 // pred_check_branch
    %44 = sbr.rel (0) target = $region37
  $region36: #{tpu_custom_call.1} parent=0 // pred_region
    _
  $region37: #{tpu_custom_call.1} parent=0 // pred_fallthru
    _
  // Predicated region
  $region38: #{tpu_custom_call.1} parent=0 // pred_check
    _
  $region39: #{tpu_custom_call.1} parent=0 // pred_check_branch
    %46 = sbr.rel (0) target = $region41
  $region40: #{tpu_custom_call.1} parent=0 // pred_region
    _
  $region41: #{tpu_custom_call.1} parent=0 // pred_fallthru
    _
  // Predicated region
  $region42: #{tpu_custom_call.1} parent=0 // pred_check
    _
  $region43: #{tpu_custom_call.1} parent=0 // pred_check_branch
    %48 = sbr.rel (0) target = $region45
  $region44: #{tpu_custom_call.1} parent=0 // pred_region
    _
  $region45: #{tpu_custom_call.1} parent=0 // pred_fallthru
    _
  // Predicated region
  $region46: #{tpu_custom_call.1} parent=0 // pred_check
    _
  $region47: #{tpu_custom_call.1} parent=0 // pred_check_branch
    %50 = sbr.rel (0) target = $region49
  $region48: #{tpu_custom_call.1} parent=0 // pred_region
    _
  $region49: #{tpu_custom_call.1} parent=0 // pred_fallthru
    _
  // Predicated region
  $region50: #{tpu_custom_call.1} parent=0 // pred_check
    _
  $region51: #{tpu_custom_call.1} parent=0 // pred_check_branch
    %52 = sbr.rel (0) target = $region53
  $region52: #{tpu_custom_call.1} parent=0 // pred_region
    _
  $region53: #{tpu_custom_call.1} parent=0 // pred_fallthru
    _
  // Predicated region
  $region54: #{tpu_custom_call.1} parent=0 // pred_check
    _
  $region55: #{tpu_custom_call.1} parent=0 // pred_check_branch
    %54 = sbr.rel (0) target = $region57
  $region56: #{tpu_custom_call.1} parent=0 // pred_region
    _
  $region57: #{tpu_custom_call.1} parent=0 // pred_fallthru
    _
  // Predicated region
  $region58: #{tpu_custom_call.1} parent=0 // pred_check
    _
  $region59: #{tpu_custom_call.1} parent=0 // pred_check_branch
    %56 = sbr.rel (0) target = $region61
  $region60: #{tpu_custom_call.1} parent=0 // pred_region
    _
  $region61: #{tpu_custom_call.1} parent=0 // pred_fallthru
    _
  // Predicated region
  $region62: #{tpu_custom_call.1} parent=0 // pred_check
    _
  $region63: #{tpu_custom_call.1} parent=0 // pred_check_branch
    %58 = sbr.rel (0) target = $region65
  $region64: #{tpu_custom_call.1} parent=0 // pred_region
    _
  $region65: #{tpu_custom_call.1} parent=0 // pred_fallthru
    _
  // Predicated region
  $region66: #{tpu_custom_call.1} parent=0 // pred_check
    _
  $region67: #{tpu_custom_call.1} parent=0 // pred_check_branch
    %60 = sbr.rel (0) target = $region69
  $region68: #{tpu_custom_call.1} parent=0 // pred_region
    _
  $region69: #{tpu_custom_call.1} parent=0 // pred_fallthru
    _
  // Predicated region
  $region70: #{tpu_custom_call.1} parent=0 // pred_check
    _
  $region71: #{tpu_custom_call.1} parent=0 // pred_check_branch
    %62 = sbr.rel (0) target = $region73
  $region72: #{tpu_custom_call.1} parent=0 // pred_region
    _
  $region73: #{tpu_custom_call.1} parent=0 // pred_fallthru
    _
  // Predicated region
  $region74: #{tpu_custom_call.1} parent=0 // pred_check
    _
  $region75: #{tpu_custom_call.1} parent=0 // pred_check_branch
    %64 = sbr.rel (0) target = $region77
  $region76: #{tpu_custom_call.1} parent=0 // pred_region
    _
  $region77: #{tpu_custom_call.1} parent=0 // pred_fallthru
    _
  // Predicated region
  $region78: #{tpu_custom_call.1} parent=0 // pred_check
    _
  $region79: #{tpu_custom_call.1} parent=0 // pred_check_branch
    %66 = sbr.rel (0) target = $region81
  $region80: #{tpu_custom_call.1} parent=0 // pred_region
    _
  $region81: #{tpu_custom_call.1} parent=0 // pred_fallthru
    _
  // Predicated region
  $region82: #{tpu_custom_call.1} parent=0 // pred_check
    _
  $region83: #{tpu_custom_call.1} parent=0 // pred_check_branch
    %68 = sbr.rel (0) target = $region85
  $region84: #{tpu_custom_call.1} parent=0 // pred_region
    _
  $region85: #{tpu_custom_call.1} parent=0 // pred_fallthru
    _
  // Predicated region
  $region86: #{tpu_custom_call.1} parent=0 // pred_check
    _
  $region87: #{tpu_custom_call.1} parent=0 // pred_check_branch
    %70 = sbr.rel (0) target = $region89
  $region88: #{tpu_custom_call.1} parent=0 // pred_region
    _
  $region89: #{tpu_custom_call.1} parent=0 // pred_fallthru
    _
  %v72 = vld [vmem:[%s8] sm:$0xf]
  %v73 = vld [vmem:[%s8 + $0x4] sm:$0xf]
  %v74 = vld [vmem:[%s8 + $0x8] sm:$0xf]
  %v75 = vld [vmem:[%s8 + $0xc] sm:$0xf]
  %v76 = vld [vmem:[%s8 + $0x10] sm:$0xf]
  %v77 = vld [vmem:[%s8 + $0x14] sm:$0xf]
  %v78 = vld [vmem:[%s8 + $0x18] sm:$0xf]
  %v79 = vld [vmem:[%s8 + $0x1c] sm:$0xf]
  %v80 = vld [vmem:[%s9] sm:$0xf]
  %v81 = vld [vmem:[%s9 + $0x4] sm:$0xf]
  %v82 = vld [vmem:[%s10] sm:$0x1]
  %v84 = vlaneseq
  %v85 = vshrl.u32 %v84, 7
  %v86 = vsub.s32 0, %v85
  %v87 = vrot.slane %v82, %v86
  %v97 = vunpack.c.l.b16 %v72
  %v98 = vunpack.c.l.b16 %v73
  %v99 = vunpack.c.l.b16 %v74
  %v100 = vunpack.c.l.b16 %v75
  %v101 = vunpack.c.l.b16 %v76
  %v102 = vunpack.c.l.b16 %v77
  %v103 = vunpack.c.l.b16 %v78
  %v104 = vunpack.c.l.b16 %v79
  %v105 = vpack.c.b16 %v98, %v97
  %v106 = vpack.c.b16 %v100, %v99
  %v107 = vpack.c.b16 %v102, %v101
  %v108 = vpack.c.b16 %v104, %v103
  %v111 = vunpack.c.l.b16 %v80
  %v112 = vunpack.c.l.b16 %v81
  %v113 = vpack.c.b16 %v112, %v111
  %vm115 = vcmask 130048
  %v117 = vsel %vm115, %v105, 0
  %v120 = vsel %vm115, %v106, 0
  %v123 = vsel %vm115, %v107, 0
  %v126 = vsel %vm115, %v108, 0
  %128 = vmatprep.subr.bf16.mxu0 0
  %129 = vmatpush1.bf16.msra.mxu0 %v113
  %130 = vmatprep.subr.bf16.mxu0 0
  %131 = vmatpush1.bf16.msra.mxu0 0
  %132 = vmatprep.subr.bf16.mxu0 0
  %133 = vmatpush1.bf16.msra.mxu0 0
  %134 = vmatprep.subr.bf16.mxu0 0
  %135 = vmatpush1.bf16.msra.mxu0 0
  %136 = vmatprep.subr.bf16.mxu0 0
  %137 = vmatpush1.bf16.msra.mxu0 0
  %138 = vmatprep.subr.bf16.mxu0 0
  %139 = vmatpush1.bf16.msra.mxu0 0
  %140 = vmatprep.subr.bf16.mxu0 0
  %141 = vmatpush1.bf16.msra.mxu0 0
  %142 = vmatprep.subr.bf16.mxu0 0
  %143 = vmatpush1.bf16.msra.mxu0 0
  %144 = vmatprep.subr.bf16.mxu0 0
  %145 = vmatpush1.bf16.msra.mxu0 0
  %146 = vmatprep.subr.bf16.mxu0 0
  %147 = vmatpush1.bf16.msra.mxu0 0
  %148 = vmatprep.subr.bf16.mxu0 0
  %149 = vmatpush1.bf16.msra.mxu0 0
  %150 = vmatprep.subr.bf16.mxu0 0
  %151 = vmatpush1.bf16.msra.mxu0 0
  %152 = vmatprep.subr.bf16.mxu0 0
  %153 = vmatpush1.bf16.msra.mxu0 0
  %154 = vmatprep.subr.bf16.mxu0 0
  %155 = vmatpush1.bf16.msra.mxu0 0
  %156 = vmatprep.subr.bf16.mxu0 0
  %157 = vmatpush1.bf16.msra.mxu0 0
  %158 = vmatprep.subr.bf16.mxu0 0
  %159 = vmatpush1.bf16.msra.mxu0 0
  %160 = vmatprep.mubr.bf16.mxu0 0
  %161 = vmatmul.mubr.bf16.gmra.mrb[0].mxu0 %v117
  %v162 = vpop.f32.mrb[0].mxu0
  %v163 = vadd.f32 %v87, %v162
  %v164 = vpop.f32.mrb[0].mxu0
  %v165 = vpop.f32.mrb[0].mxu0
  %v166 = vadd.f32 %v87, %v165
  %v167 = vpop.f32.mrb[0].mxu0
  %168 = vmatprep.mubr.bf16.mxu0 0
  %169 = vmatmul.mubr.bf16.gmra.mrb[0].mxu0 %v120
  %v170 = vpop.f32.mrb[0].mxu0
  %v171 = vadd.f32 %v87, %v170
  %v172 = vpop.f32.mrb[0].mxu0
  %v173 = vpop.f32.mrb[0].mxu0
  %v174 = vadd.f32 %v87, %v173
  %v175 = vpop.f32.mrb[0].mxu0
  %176 = vmatprep.mubr.bf16.mxu0 0
  %177 = vmatmul.mubr.bf16.gmra.mrb[0].mxu0 %v123
  %v178 = vpop.f32.mrb[0].mxu0
  %v179 = vadd.f32 %v87, %v178
  %v180 = vpop.f32.mrb[0].mxu0
  %v181 = vpop.f32.mrb[0].mxu0
  %v182 = vadd.f32 %v87, %v181
  %v183 = vpop.f32.mrb[0].mxu0
  %184 = vmatprep.mubr.bf16.mxu0 0
  %185 = vmatmul.mubr.bf16.gmra.mrb[0].mxu0 %v126
  %v186 = vpop.f32.mrb[0].mxu0
  %v187 = vadd.f32 %v87, %v186
  %v188 = vpop.f32.mrb[0].mxu0
  %v189 = vpop.f32.mrb[0].mxu0
  %v190 = vadd.f32 %v87, %v189
  %v191 = vpop.f32.mrb[0].mxu0
  %192 = vdwg.mxu0
  %v193 = vmul.f32 %v163, 0.5
  %v194 = vmul.f32 %v166, 0.5
  %v195 = vmul.f32 %v171, 0.5
  %v196 = vmul.f32 %v174, 0.5
  %v197 = vmul.f32 %v179, 0.5
  %v198 = vmul.f32 %v182, 0.5
  %v199 = vmul.f32 %v187, 0.5
  %v200 = vmul.f32 %v190, 0.5
  %v201 = vmul.f32 %v163, 0.044715
  %v202 = vmul.f32 %v166, 0.044715
  %v203 = vmul.f32 %v171, 0.044715
  %v204 = vmul.f32 %v174, 0.044715
  %v205 = vmul.f32 %v179, 0.044715
  %v206 = vmul.f32 %v182, 0.044715
  %v207 = vmul.f32 %v187, 0.044715
  %v208 = vmul.f32 %v190, 0.044715
  %v209 = vmul.f32 %v201, %v163
  %v210 = vmul.f32 %v202, %v166
  %v211 = vmul.f32 %v203, %v171
  %v212 = vmul.f32 %v204, %v174
  %v213 = vmul.f32 %v205, %v179
  %v214 = vmul.f32 %v206, %v182
  %v215 = vmul.f32 %v207, %v187
  %v216 = vmul.f32 %v208, %v190
  %v217 = vmul.f32 %v209, %v163
  %v218 = vmul.f32 %v210, %v166
  %v219 = vmul.f32 %v211, %v171
  %v220 = vmul.f32 %v212, %v174
  %v221 = vmul.f32 %v213, %v179
  %v222 = vmul.f32 %v214, %v182
  %v223 = vmul.f32 %v215, %v187
  %v224 = vmul.f32 %v216, %v190
  %v225 = vadd.f32 %v163, %v217
  %v226 = vadd.f32 %v166, %v218
  %v227 = vadd.f32 %v171, %v219
  %v228 = vadd.f32 %v174, %v220
  %v229 = vadd.f32 %v179, %v221
  %v230 = vadd.f32 %v182, %v222
  %v231 = vadd.f32 %v187, %v223
  %v232 = vadd.f32 %v190, %v224
  %v233 = vmul.f32 %v225, 0.7978846
  %v234 = vmul.f32 %v226, 0.7978846
  %v235 = vmul.f32 %v227, 0.7978846
  %v236 = vmul.f32 %v228, 0.7978846
  %v237 = vmul.f32 %v229, 0.7978846
  %v238 = vmul.f32 %v230, 0.7978846
  %v239 = vmul.f32 %v231, 0.7978846
  %v240 = vmul.f32 %v232, 0.7978846
  %v241 = vtanh.pop %v233
  %v242 = vtanh.pop %v234
  %v243 = vtanh.pop %v235
  %v244 = vtanh.pop %v236
  %v245 = vtanh.pop %v237
  %v246 = vtanh.pop %v238
  %v247 = vtanh.pop %v239
  %v248 = vtanh.pop %v240
  %v249 = vadd.f32 %v241, 1.0
  %v250 = vadd.f32 %v242, 1.0
  %v251 = vadd.f32 %v243, 1.0
  %v252 = vadd.f32 %v244, 1.0
  %v253 = vadd.f32 %v245, 1.0
  %v254 = vadd.f32 %v246, 1.0
  %v255 = vadd.f32 %v247, 1.0
  %v256 = vadd.f32 %v248, 1.0
  %v257 = vmul.f32 %v193, %v249
  %v258 = vmul.f32 %v194, %v250
  %v259 = vmul.f32 %v195, %v251
  %v260 = vmul.f32 %v196, %v252
  %v261 = vmul.f32 %v197, %v253
  %v262 = vmul.f32 %v198, %v254
  %v263 = vmul.f32 %v199, %v255
  %v264 = vmul.f32 %v200, %v256
  %v265 = vpack.c.bf16 %v258, %v257
  %v266 = vpack.c.bf16 %v260, %v259
  %v267 = vpack.c.bf16 %v262, %v261
  %v268 = vpack.c.bf16 %v264, %v263
  %v269 = vld [vmem:[%s11] sm:$0xf]
  %v270 = vld [vmem:[%s11 + $0x4] sm:$0xf]
  %v271 = vld [vmem:[%s11 + $0x8] sm:$0xf]
  %v272 = vld [vmem:[%s11 + $0xc] sm:$0xf]
  %v273 = vld [vmem:[%s11 + $0x10] sm:$0xf]
  %v274 = vld [vmem:[%s11 + $0x14] sm:$0xf]
  %v275 = vld [vmem:[%s11 + $0x18] sm:$0xf]
  %v276 = vld [vmem:[%s11 + $0x1c] sm:$0xf]
  %v277 = vld [vmem:[%s12] sm:$0x1]
  %v279 = vlaneseq
  %v280 = vshrl.u32 %v279, 7
  %v281 = vsub.s32 0, %v280
  %v282 = vrot.slane %v277, %v281
  %v292 = vunpack.c.l.b16 %v269
  %v293 = vunpack.c.l.b16 %v270
  %v294 = vunpack.c.l.b16 %v271
  %v295 = vunpack.c.l.b16 %v272
  %v296 = vunpack.c.l.b16 %v273
  %v297 = vunpack.c.l.b16 %v274
  %v298 = vunpack.c.l.b16 %v275
  %v299 = vunpack.c.l.b16 %v276
  %v300 = vpack.c.b16 %v293, %v292
  %v301 = vpack.c.b16 %v295, %v294
  %v302 = vpack.c.b16 %v297, %v296
  %v303 = vpack.c.b16 %v299, %v298
  %vm308 = vcmask 523264
  %v310 = vsel %vm308, %v265, 0
  %v313 = vsel %vm308, %v266, 0
  %v316 = vsel %vm308, %v267, 0
  %v319 = vsel %vm308, %v268, 0
  %321 = vmatprep.subr.bf16.mxu0 0
  %322 = vmatpush1.bf16.msra.mxu0 %v300
  %323 = vmatprep.subr.bf16.mxu0 0
  %324 = vmatpush1.bf16.msra.mxu0 %v301
  %325 = vmatprep.subr.bf16.mxu0 0
  %326 = vmatpush1.bf16.msra.mxu0 %v302
  %327 = vmatprep.subr.bf16.mxu0 0
  %328 = vmatpush1.bf16.msra.mxu0 %v303
  %329 = vmatprep.subr.bf16.mxu0 0
  %330 = vmatpush1.bf16.msra.mxu0 0
  %331 = vmatprep.subr.bf16.mxu0 0
  %332 = vmatpush1.bf16.msra.mxu0 0
  %333 = vmatprep.subr.bf16.mxu0 0
  %334 = vmatpush1.bf16.msra.mxu0 0
  %335 = vmatprep.subr.bf16.mxu0 0
  %336 = vmatpush1.bf16.msra.mxu0 0
  %337 = vmatprep.subr.bf16.mxu0 0
  %338 = vmatpush1.bf16.msra.mxu0 0
  %339 = vmatprep.subr.bf16.mxu0 0
  %340 = vmatpush1.bf16.msra.mxu0 0
  %341 = vmatprep.subr.bf16.mxu0 0
  %342 = vmatpush1.bf16.msra.mxu0 0
  %343 = vmatprep.subr.bf16.mxu0 0
  %344 = vmatpush1.bf16.msra.mxu0 0
  %345 = vmatprep.subr.bf16.mxu0 0
  %346 = vmatpush1.bf16.msra.mxu0 0
  %347 = vmatprep.subr.bf16.mxu0 0
  %348 = vmatpush1.bf16.msra.mxu0 0
  %349 = vmatprep.subr.bf16.mxu0 0
  %350 = vmatpush1.bf16.msra.mxu0 0
  %351 = vmatprep.subr.bf16.mxu0 0
  %352 = vmatpush1.bf16.msra.mxu0 0
  %353 = vmatprep.mubr.bf16.mxu0 0
  %354 = vmatmul.mubr.bf16.gmra.mrb[0].mxu0 %v310
  %v355 = vpop.f32.mrb[0].mxu0
  %v356 = vadd.f32 %v282, %v355
  %v357 = vpop.f32.mrb[0].mxu0
  %v358 = vpop.f32.mrb[0].mxu0
  %v359 = vadd.f32 %v282, %v358
  %v360 = vpop.f32.mrb[0].mxu0
  %361 = vmatprep.mubr.bf16.mxu0 0
  %362 = vmatmul.mubr.bf16.gmra.mrb[0].mxu0 %v313
  %v363 = vpop.f32.mrb[0].mxu0
  %v364 = vadd.f32 %v282, %v363
  %v365 = vpop.f32.mrb[0].mxu0
  %v366 = vpop.f32.mrb[0].mxu0
  %v367 = vadd.f32 %v282, %v366
  %v368 = vpop.f32.mrb[0].mxu0
  %369 = vmatprep.mubr.bf16.mxu0 0
  %370 = vmatmul.mubr.bf16.gmra.mrb[0].mxu0 %v316
  %v371 = vpop.f32.mrb[0].mxu0
  %v372 = vadd.f32 %v282, %v371
  %v373 = vpop.f32.mrb[0].mxu0
  %v374 = vpop.f32.mrb[0].mxu0
  %v375 = vadd.f32 %v282, %v374
  %v376 = vpop.f32.mrb[0].mxu0
  %377 = vmatprep.mubr.bf16.mxu0 0
  %378 = vmatmul.mubr.bf16.gmra.mrb[0].mxu0 %v319
  %v379 = vpop.f32.mrb[0].mxu0
  %v380 = vadd.f32 %v282, %v379
  %v381 = vpop.f32.mrb[0].mxu0
  %v382 = vpop.f32.mrb[0].mxu0
  %v383 = vadd.f32 %v282, %v382
  %v384 = vpop.f32.mrb[0].mxu0
  %385 = vdwg.mxu0
  %v386 = vpack.c.bf16 %v359, %v356
  %v387 = vpack.c.bf16 %v367, %v364
  %v388 = vpack.c.bf16 %v375, %v372
  %v389 = vpack.c.bf16 %v383, %v380
  %v390 = vld [vmem:[%s13] sm:$0xf]
  %v391 = vld [vmem:[%s13 + $0x4] sm:$0xf]
  %v392 = vld [vmem:[%s13 + $0x8] sm:$0xf]
  %v393 = vld [vmem:[%s13 + $0xc] sm:$0xf]
  %v394 = vld [vmem:[%s14] sm:$0x1]
  %v396 = vlaneseq
  %v397 = vshrl.u32 %v396, 7
  %v398 = vsub.s32 0, %v397
  %v399 = vrot.slane %v394, %v398
  %v405 = vunpack.c.l.b16 %v390
  %v406 = vunpack.c.l.b16 %v391
  %v407 = vunpack.c.l.b16 %v392
  %v408 = vunpack.c.l.b16 %v393
  %v409 = vpack.c.b16 %v406, %v405
  %v410 = vpack.c.b16 %v408, %v407
  %vm413 = vcmask 261120
  %v415 = vsel %vm413, %v386, 0
  %v418 = vsel %vm413, %v387, 0
  %v421 = vsel %vm413, %v388, 0
  %v424 = vsel %vm413, %v389, 0
  %426 = vmatprep.subr.bf16.mxu0 0
  %427 = vmatpush1.bf16.msra.mxu0 %v409
  %428 = vmatprep.subr.bf16.mxu0 0
  %429 = vmatpush1.bf16.msra.mxu0 %v410
  %430 = vmatprep.subr.bf16.mxu0 0
  %431 = vmatpush1.bf16.msra.mxu0 0
  %432 = vmatprep.subr.bf16.mxu0 0
  %433 = vmatpush1.bf16.msra.mxu0 0
  %434 = vmatprep.subr.bf16.mxu0 0
  %435 = vmatpush1.bf16.msra.mxu0 0
  %436 = vmatprep.subr.bf16.mxu0 0
  %437 = vmatpush1.bf16.msra.mxu0 0
  %438 = vmatprep.subr.bf16.mxu0 0
  %439 = vmatpush1.bf16.msra.mxu0 0
  %440 = vmatprep.subr.bf16.mxu0 0
  %441 = vmatpush1.bf16.msra.mxu0 0
  %442 = vmatprep.subr.bf16.mxu0 0
  %443 = vmatpush1.bf16.msra.mxu0 0
  %444 = vmatprep.subr.bf16.mxu0 0
  %445 = vmatpush1.bf16.msra.mxu0 0
  %446 = vmatprep.subr.bf16.mxu0 0
  %447 = vmatpush1.bf16.msra.mxu0 0
  %448 = vmatprep.subr.bf16.mxu0 0
  %449 = vmatpush1.bf16.msra.mxu0 0
  %450 = vmatprep.subr.bf16.mxu0 0
  %451 = vmatpush1.bf16.msra.mxu0 0
  %452 = vmatprep.subr.bf16.mxu0 0
  %453 = vmatpush1.bf16.msra.mxu0 0
  %454 = vmatprep.subr.bf16.mxu0 0
  %455 = vmatpush1.bf16.msra.mxu0 0
  %456 = vmatprep.subr.bf16.mxu0 0
  %457 = vmatpush1.bf16.msra.mxu0 0
  %458 = vmatprep.mubr.bf16.mxu0 0
  %459 = vmatmul.mubr.bf16.gmra.mrb[0].mxu0 %v415
  %v460 = vpop.f32.mrb[0].mxu0
  %v461 = vadd.f32 %v399, %v460
  %v462 = vpop.f32.mrb[0].mxu0
  %v463 = vpop.f32.mrb[0].mxu0
  %v464 = vadd.f32 %v399, %v463
  %v465 = vpop.f32.mrb[0].mxu0
  %466 = vmatprep.mubr.bf16.mxu0 0
  %467 = vmatmul.mubr.bf16.gmra.mrb[0].mxu0 %v418
  %v468 = vpop.f32.mrb[0].mxu0
  %v469 = vadd.f32 %v399, %v468
  %v470 = vpop.f32.mrb[0].mxu0
  %v471 = vpop.f32.mrb[0].mxu0
  %v472 = vadd.f32 %v399, %v471
  %v473 = vpop.f32.mrb[0].mxu0
  %474 = vmatprep.mubr.bf16.mxu0 0
  %475 = vmatmul.mubr.bf16.gmra.mrb[0].mxu0 %v421
  %v476 = vpop.f32.mrb[0].mxu0
  %v477 = vadd.f32 %v399, %v476
  %v478 = vpop.f32.mrb[0].mxu0
  %v479 = vpop.f32.mrb[0].mxu0
  %v480 = vadd.f32 %v399, %v479
  %v481 = vpop.f32.mrb[0].mxu0
  %482 = vmatprep.mubr.bf16.mxu0 0
  %483 = vmatmul.mubr.bf16.gmra.mrb[0].mxu0 %v424
  %v484 = vpop.f32.mrb[0].mxu0
  %v485 = vadd.f32 %v399, %v484
  %v486 = vpop.f32.mrb[0].mxu0
  %v487 = vpop.f32.mrb[0].mxu0
  %v488 = vadd.f32 %v399, %v487
  %v489 = vpop.f32.mrb[0].mxu0
  %490 = vdwg.mxu0
  %491 = vst.msk [vmem:[#allocation2] sm:$0xff] %vm308, %v461
  %492 = vst.msk [vmem:[#allocation2 + $0x8] sm:$0xff] %vm308, %v464
  %493 = vst.msk [vmem:[#allocation2 + $0x10] sm:$0xff] %vm308, %v469
  %494 = vst.msk [vmem:[#allocation2 + $0x18] sm:$0xff] %vm308, %v472
  %495 = vst.msk [vmem:[#allocation2 + $0x20] sm:$0xff] %vm308, %v477
  %496 = vst.msk [vmem:[#allocation2 + $0x28] sm:$0xff] %vm308, %v480
  %497 = vst.msk [vmem:[#allocation2 + $0x30] sm:$0xff] %vm308, %v485
  %498 = vst.msk [vmem:[#allocation2 + $0x38] sm:$0xff] %vm308, %v488
  %v499 = vld [vmem:[%s0] sm:$0xff]
  %v500 = vld [vmem:[%s1] sm:$0xff]
  %v501 = vld [vmem:[%s2] sm:$0xff]
  %v502 = vld [vmem:[#allocation2] sm:$0xff]
  %v503 = vpack.c.bf16 %v499, %v499
  %v504 = vld [vmem:[%s15] sm:$0x3]
  %v505 = vld [vmem:[%s16] sm:$0x1]
  %v507 = vlaneseq
  %v508 = vshrl.u32 %v507, 7
  %v509 = vsub.s32 0, %v508
  %v510 = vrot.slane %v505, %v509
  %vm512 = vcmask 31744
  %v514 = vsel %vm512, %v503, 0
  %vm516 = vcmask 1041408
  %v518 = vsel %vm516, %v504, 0
  %520 = vmatprep.subr.bf16.mxu0 0
  %521 = vmatpush1.bf16.msra.mxu0 %v518
  %522 = vmatprep.subr.bf16.mxu0 0
  %523 = vmatpush1.bf16.msra.mxu0 0
  %524 = vmatprep.subr.bf16.mxu0 0
  %525 = vmatpush1.bf16.msra.mxu0 0
  %526 = vmatprep.subr.bf16.mxu0 0
  %527 = vmatpush1.bf16.msra.mxu0 0
  %528 = vmatprep.subr.bf16.mxu0 0
  %529 = vmatpush1.bf16.msra.mxu0 0
  %530 = vmatprep.subr.bf16.mxu0 0
  %531 = vmatpush1.bf16.msra.mxu0 0
  %532 = vmatprep.subr.bf16.mxu0 0
  %533 = vmatpush1.bf16.msra.mxu0 0
  %534 = vmatprep.subr.bf16.mxu0 0
  %535 = vmatpush1.bf16.msra.mxu0 0
  %536 = vmatprep.subr.bf16.mxu0 0
  %537 = vmatpush1.bf16.msra.mxu0 0
  %538 = vmatprep.subr.bf16.mxu0 0
  %539 = vmatpush1.bf16.msra.mxu0 0
  %540 = vmatprep.subr.bf16.mxu0 0
  %541 = vmatpush1.bf16.msra.mxu0 0
  %542 = vmatprep.subr.bf16.mxu0 0
  %543 = vmatpush1.bf16.msra.mxu0 0
  %544 = vmatprep.subr.bf16.mxu0 0
  %545 = vmatpush1.bf16.msra.mxu0 0
  %546 = vmatprep.subr.bf16.mxu0 0
  %547 = vmatpush1.bf16.msra.mxu0 0
  %548 = vmatprep.subr.bf16.mxu0 0
  %549 = vmatpush1.bf16.msra.mxu0 0
  %550 = vmatprep.subr.bf16.mxu0 0
  %551 = vmatpush1.bf16.msra.mxu0 0
  %552 = vmatprep.mubr.bf16.mxu0 0
  %553 = vmatmul.mubr.bf16.gmra.mrb[0].mxu0 %v514
  %v554 = vpop.f32.mrb[0].mxu0
  %v555 = vadd.f32 %v510, %v554
  %v556 = vpop.f32.mrb[0].mxu0
  %v557 = vpop.f32.mrb[0].mxu0
  %v558 = vpop.f32.mrb[0].mxu0
  %559 = vdwg.mxu0
  %v560 = vmul.f32 %v555, 0.5
  %v561 = vmul.f32 %v555, 0.044715
  %v562 = vmul.f32 %v561, %v555
  %v563 = vmul.f32 %v562, %v555
  %v564 = vadd.f32 %v555, %v563
  %v565 = vmul.f32 %v564, 0.7978846
  %v566 = vtanh.pop %v565
  %v567 = vadd.f32 %v566, 1.0
  %v568 = vmul.f32 %v560, %v567
  %v569 = vpack.c.bf16 %v568, %v568
  %v570 = vld [vmem:[%s17] sm:$0xf]
  %v571 = vld [vmem:[%s17 + $0x4] sm:$0xf]
  %v572 = vld [vmem:[%s17 + $0x8] sm:$0xf]
  %v573 = vld [vmem:[%s17 + $0xc] sm:$0xf]
  %v574 = vld [vmem:[%s17 + $0x10] sm:$0xf]
  %v575 = vld [vmem:[%s17 + $0x14] sm:$0xf]
  %v576 = vld [vmem:[%s17 + $0x18] sm:$0xf]
  %v577 = vld [vmem:[%s17 + $0x1c] sm:$0xf]
  %v586 = vunpack.c.l.b16 %v570
  %v587 = vunpack.c.l.b16 %v571
  %v588 = vunpack.c.l.b16 %v572
  %v589 = vunpack.c.l.b16 %v573
  %v590 = vunpack.c.l.b16 %v574
  %v591 = vunpack.c.l.b16 %v575
  %v592 = vunpack.c.l.b16 %v576
  %v593 = vunpack.c.l.b16 %v577
  %v594 = vpack.c.b16 %v587, %v586
  %v595 = vpack.c.b16 %v589, %v588
  %v596 = vpack.c.b16 %v591, %v590
  %v597 = vpack.c.b16 %v593, %v592
  %v603 = vsel %vm308, %v569, 0
  %605 = vmatprep.subr.bf16.mxu0 0
  %606 = vmatpush1.bf16.msra.mxu0 %v594
  %607 = vmatprep.subr.bf16.mxu0 0
  %608 = vmatpush1.bf16.msra.mxu0 %v595
  %609 = vmatprep.subr.bf16.mxu0 0
  %610 = vmatpush1.bf16.msra.mxu0 %v596
  %611 = vmatprep.subr.bf16.mxu0 0
  %612 = vmatpush1.bf16.msra.mxu0 %v597
  %613 = vmatprep.subr.bf16.mxu0 0
  %614 = vmatpush1.bf16.msra.mxu0 0
  %615 = vmatprep.subr.bf16.mxu0 0
  %616 = vmatpush1.bf16.msra.mxu0 0
  %617 = vmatprep.subr.bf16.mxu0 0
  %618 = vmatpush1.bf16.msra.mxu0 0
  %619 = vmatprep.subr.bf16.mxu0 0
  %620 = vmatpush1.bf16.msra.mxu0 0
  %621 = vmatprep.subr.bf16.mxu0 0
  %622 = vmatpush1.bf16.msra.mxu0 0
  %623 = vmatprep.subr.bf16.mxu0 0
  %624 = vmatpush1.bf16.msra.mxu0 0
  %625 = vmatprep.subr.bf16.mxu0 0
  %626 = vmatpush1.bf16.msra.mxu0 0
  %627 = vmatprep.subr.bf16.mxu0 0
  %628 = vmatpush1.bf16.msra.mxu0 0
  %629 = vmatprep.subr.bf16.mxu0 0
  %630 = vmatpush1.bf16.msra.mxu0 0
  %631 = vmatprep.subr.bf16.mxu0 0
  %632 = vmatpush1.bf16.msra.mxu0 0
  %633 = vmatprep.subr.bf16.mxu0 0
  %634 = vmatpush1.bf16.msra.mxu0 0
  %635 = vmatprep.subr.bf16.mxu0 0
  %636 = vmatpush1.bf16.msra.mxu0 0
  %637 = vmatprep.mubr.bf16.mxu0 0
  %638 = vmatmul.mubr.bf16.gmra.mrb[0].mxu0 %v603
  %v639 = vpop.f32.mrb[0].mxu0
  %v640 = vadd.f32 %v502, %v639
  %v641 = vpop.f32.mrb[0].mxu0
  %v642 = vpop.f32.mrb[0].mxu0
  %v643 = vpop.f32.mrb[0].mxu0
  %644 = vdwg.mxu0
  %v645 = vmul.f32 %v640, 0.5
  %v646 = vmul.f32 %v640, 0.044715
  %v647 = vmul.f32 %v646, %v640
  %v648 = vmul.f32 %v647, %v640
  %v649 = vadd.f32 %v640, %v648
  %v650 = vmul.f32 %v649, 0.7978846
  %v651 = vtanh.pop %v650
  %v652 = vadd.f32 %v651, 1.0
  %v653 = vmul.f32 %v645, %v652
  %v654 = vpack.c.bf16 %v653, %v653
  %v655 = vld [vmem:[%s18] sm:$0xf]
  %v656 = vld [vmem:[%s18 + $0x4] sm:$0xf]
  %v657 = vld [vmem:[%s18 + $0x8] sm:$0xf]
  %v658 = vld [vmem:[%s18 + $0xc] sm:$0xf]
  %v659 = vld [vmem:[%s18 + $0x10] sm:$0xf]
  %v660 = vld [vmem:[%s18 + $0x14] sm:$0xf]
  %v661 = vld [vmem:[%s18 + $0x18] sm:$0xf]
  %v662 = vld [vmem:[%s18 + $0x1c] sm:$0xf]
  %v663 = vld [vmem:[%s19] sm:$0x1]
  %v665 = vlaneseq
  %v666 = vshrl.u32 %v665, 7
  %v667 = vsub.s32 0, %v666
  %v668 = vrot.slane %v663, %v667
  %v678 = vunpack.c.l.b16 %v655
  %v679 = vunpack.c.l.b16 %v656
  %v680 = vunpack.c.l.b16 %v657
  %v681 = vunpack.c.l.b16 %v658
  %v682 = vunpack.c.l.b16 %v659
  %v683 = vunpack.c.l.b16 %v660
  %v684 = vunpack.c.l.b16 %v661
  %v685 = vunpack.c.l.b16 %v662
  %v686 = vpack.c.b16 %v679, %v678
  %v687 = vpack.c.b16 %v681, %v680
  %v688 = vpack.c.b16 %v683, %v682
  %v689 = vpack.c.b16 %v685, %v684
  %v695 = vsel %vm308, %v654, 0
  %697 = vmatprep.subr.bf16.mxu0 0
  %698 = vmatpush1.bf16.msra.mxu0 %v686
  %699 = vmatprep.subr.bf16.mxu0 0
  %700 = vmatpush1.bf16.msra.mxu0 %v687
  %701 = vmatprep.subr.bf16.mxu0 0
  %702 = vmatpush1.bf16.msra.mxu0 %v688
  %703 = vmatprep.subr.bf16.mxu0 0
  %704 = vmatpush1.bf16.msra.mxu0 %v689
  %705 = vmatprep.subr.bf16.mxu0 0
  %706 = vmatpush1.bf16.msra.mxu0 0
  %707 = vmatprep.subr.bf16.mxu0 0
  %708 = vmatpush1.bf16.msra.mxu0 0
  %709 = vmatprep.subr.bf16.mxu0 0
  %710 = vmatpush1.bf16.msra.mxu0 0
  %711 = vmatprep.subr.bf16.mxu0 0
  %712 = vmatpush1.bf16.msra.mxu0 0
  %713 = vmatprep.subr.bf16.mxu0 0
  %714 = vmatpush1.bf16.msra.mxu0 0
  %715 = vmatprep.subr.bf16.mxu0 0
  %716 = vmatpush1.bf16.msra.mxu0 0
  %717 = vmatprep.subr.bf16.mxu0 0
  %718 = vmatpush1.bf16.msra.mxu0 0
  %719 = vmatprep.subr.bf16.mxu0 0
  %720 = vmatpush1.bf16.msra.mxu0 0
  %721 = vmatprep.subr.bf16.mxu0 0
  %722 = vmatpush1.bf16.msra.mxu0 0
  %723 = vmatprep.subr.bf16.mxu0 0
  %724 = vmatpush1.bf16.msra.mxu0 0
  %725 = vmatprep.subr.bf16.mxu0 0
  %726 = vmatpush1.bf16.msra.mxu0 0
  %727 = vmatprep.subr.bf16.mxu0 0
  %728 = vmatpush1.bf16.msra.mxu0 0
  %729 = vmatprep.mubr.bf16.mxu0 0
  %730 = vmatmul.mubr.bf16.gmra.mrb[0].mxu0 %v695
  %v731 = vpop.f32.mrb[0].mxu0
  %v732 = vadd.f32 %v668, %v731
  %v733 = vpop.f32.mrb[0].mxu0
  %v734 = vpop.f32.mrb[0].mxu0
  %v735 = vpop.f32.mrb[0].mxu0
  %736 = vdwg.mxu0
  %v737 = vmul.f32 %v732, 0.5
  %v738 = vmul.f32 %v732, 0.044715
  %v739 = vmul.f32 %v738, %v732
  %v740 = vmul.f32 %v739, %v732
  %v741 = vadd.f32 %v732, %v740
  %v742 = vmul.f32 %v741, 0.7978846
  %v743 = vtanh.pop %v742
  %v744 = vadd.f32 %v743, 1.0
  %v745 = vmul.f32 %v737, %v744
  %v746 = vpack.c.bf16 %v745, %v745
  %v747 = vld [vmem:[%s20] sm:$0xf]
  %v748 = vld [vmem:[%s20 + $0x4] sm:$0xf]
  %v749 = vld [vmem:[%s20 + $0x8] sm:$0xf]
  %v750 = vld [vmem:[%s20 + $0xc] sm:$0xf]
  %v751 = vld [vmem:[%s20 + $0x10] sm:$0xf]
  %v752 = vld [vmem:[%s20 + $0x14] sm:$0xf]
  %v753 = vld [vmem:[%s20 + $0x18] sm:$0xf]
  %v754 = vld [vmem:[%s20 + $0x1c] sm:$0xf]
  %v755 = vld [vmem:[%s21] sm:$0x1]
  %v757 = vlaneseq
  %v758 = vshrl.u32 %v757, 7
  %v759 = vsub.s32 0, %v758
  %v760 = vrot.slane %v755, %v759
  %v770 = vunpack.c.l.b16 %v747
  %v771 = vunpack.c.l.b16 %v748
  %v772 = vunpack.c.l.b16 %v749
  %v773 = vunpack.c.l.b16 %v750
  %v774 = vunpack.c.l.b16 %v751
  %v775 = vunpack.c.l.b16 %v752
  %v776 = vunpack.c.l.b16 %v753
  %v777 = vunpack.c.l.b16 %v754
  %v778 = vpack.c.b16 %v771, %v770
  %v779 = vpack.c.b16 %v773, %v772
  %v780 = vpack.c.b16 %v775, %v774
  %v781 = vpack.c.b16 %v777, %v776
  %v787 = vsel %vm308, %v746, 0
  %789 = vmatprep.subr.bf16.mxu0 0
  %790 = vmatpush1.bf16.msra.mxu0 %v778
  %791 = vmatprep.subr.bf16.mxu0 0
  %792 = vmatpush1.bf16.msra.mxu0 %v779
  %793 = vmatprep.subr.bf16.mxu0 0
  %794 = vmatpush1.bf16.msra.mxu0 %v780
  %795 = vmatprep.subr.bf16.mxu0 0
  %796 = vmatpush1.bf16.msra.mxu0 %v781
  %797 = vmatprep.subr.bf16.mxu0 0
  %798 = vmatpush1.bf16.msra.mxu0 0
  %799 = vmatprep.subr.bf16.mxu0 0
  %800 = vmatpush1.bf16.msra.mxu0 0
  %801 = vmatprep.subr.bf16.mxu0 0
  %802 = vmatpush1.bf16.msra.mxu0 0
  %803 = vmatprep.subr.bf16.mxu0 0
  %804 = vmatpush1.bf16.msra.mxu0 0
  %805 = vmatprep.subr.bf16.mxu0 0
  %806 = vmatpush1.bf16.msra.mxu0 0
  %807 = vmatprep.subr.bf16.mxu0 0
  %808 = vmatpush1.bf16.msra.mxu0 0
  %809 = vmatprep.subr.bf16.mxu0 0
  %810 = vmatpush1.bf16.msra.mxu0 0
  %811 = vmatprep.subr.bf16.mxu0 0
  %812 = vmatpush1.bf16.msra.mxu0 0
  %813 = vmatprep.subr.bf16.mxu0 0
  %814 = vmatpush1.bf16.msra.mxu0 0
  %815 = vmatprep.subr.bf16.mxu0 0
  %816 = vmatpush1.bf16.msra.mxu0 0
  %817 = vmatprep.subr.bf16.mxu0 0
  %818 = vmatpush1.bf16.msra.mxu0 0
  %819 = vmatprep.subr.bf16.mxu0 0
  %820 = vmatpush1.bf16.msra.mxu0 0
  %821 = vmatprep.mubr.bf16.mxu0 0
  %822 = vmatmul.mubr.bf16.gmra.mrb[0].mxu0 %v787
  %v823 = vpop.f32.mrb[0].mxu0
  %v824 = vadd.f32 %v760, %v823
  %v825 = vpop.f32.mrb[0].mxu0
  %v826 = vpop.f32.mrb[0].mxu0
  %v827 = vpop.f32.mrb[0].mxu0
  %828 = vdwg.mxu0
  %v829 = vtanh.pop %v824
  %v830 = vmul.f32 %v829, 4.0
  %v831 = vadd.f32 %v830, 0.0
  %833 = vset.pattern.permute.xlu0 0
  %834 = vperm.xlu0 %833, %v501
  %v835 = vpop.permute.xlu0 %834
  %v837 = vmul.f32 %v835, %v824
  %v838 = vadd.f32 %v499, %v837
  %v839 = vld [vmem:[%s3] sm:$0xff]
  %v840 = vmul.f32 %v831, 0.5
  %v841 = vmul.f32 %v840, 1.442695
  %v842 = vpow.pop %v841
  %844 = vset.pattern.permute.xlu0 0
  %845 = vperm.xlu0 %844, %v839
  %v846 = vpop.permute.xlu0 %845
  %v848 = vmul.f32 %v846, %v842
  %850 = vrot.lane.b32.xlu0 %v500, 4
  %v851 = vpop.permute.xlu0 %850
  %v853 = vmul.f32 %v848, %v851
  %855 = vrot.lane.b32.xlu0 %v853, 124
  %v856 = vpop.permute.xlu0 %855
  %v858 = vadd.f32 %v838, %v856
  %v859 = vld [vmem:[%s4] sm:$0xff]
  %v860 = vmul.f32 %v500, %v500
  %862 = vrot.lane.b32.xlu0 %v831, 124
  %v863 = vpop.permute.xlu0 %862
  %v865 = vadd.f32 %v860, %v863
  %v866 = vsel %vm512, %v865, 0.0
  %867 = vadd.xlane.f32.xlu0 %v866
  %v868 = vpop.xlane.xlu0 %867
  %v869 = vmul.f32 %v868, 0.5
  %v870 = vsub.f32 %v859, %v869
  %872 = vrot.lane.b32.xlu0 %v870, 4
  %v873 = vpop.permute.xlu0 %872
  %v875 = vsel %vm512, %v858, %v873
  %vm876 = vcmask 39936
  %v877 = vsel %vm876, %v875, 0.0
  %vm878 = vcmask 48128
  %879 = vst.msk [vmem:[%s22] sm:$0xff] %vm878, %v877
  %s880 = scalar_lea.vmem %s1, 8
  %v881 = vld [vmem:[%s880] sm:$0xff]
  %s882 = scalar_lea.vmem %s2, 8
  %v883 = vld [vmem:[%s882] sm:$0xff]
  %v884 = vld [vmem:[#allocation2 + $0x8] sm:$0xff]
  %v885 = vpack.c.bf16 %v858, %v858
  %v886 = vld [vmem:[%s15] sm:$0x3]
  %v887 = vld [vmem:[%s16] sm:$0x1]
  %v889 = vlaneseq
  %v890 = vshrl.u32 %v889, 7
  %v891 = vsub.s32 0, %v890
  %v892 = vrot.slane %v887, %v891
  %v895 = vsel %vm512, %v885, 0
  %v898 = vsel %vm516, %v886, 0
  %900 = vmatprep.subr.bf16.mxu0 0
  %901 = vmatpush1.bf16.msra.mxu0 %v898
  %902 = vmatprep.subr.bf16.mxu0 0
  %903 = vmatpush1.bf16.msra.mxu0 0
  %904 = vmatprep.subr.bf16.mxu0 0
  %905 = vmatpush1.bf16.msra.mxu0 0
  %906 = vmatprep.subr.bf16.mxu0 0
  %907 = vmatpush1.bf16.msra.mxu0 0
  %908 = vmatprep.subr.bf16.mxu0 0
  %909 = vmatpush1.bf16.msra.mxu0 0
  %910 = vmatprep.subr.bf16.mxu0 0
  %911 = vmatpush1.bf16.msra.mxu0 0
  %912 = vmatprep.subr.bf16.mxu0 0
  %913 = vmatpush1.bf16.msra.mxu0 0
  %914 = vmatprep.subr.bf16.mxu0 0
  %915 = vmatpush1.bf16.msra.mxu0 0
  %916 = vmatprep.subr.bf16.mxu0 0
  %917 = vmatpush1.bf16.msra.mxu0 0
  %918 = vmatprep.subr.bf16.mxu0 0
  %919 = vmatpush1.bf16.msra.mxu0 0
  %920 = vmatprep.subr.bf16.mxu0 0
  %921 = vmatpush1.bf16.msra.mxu0 0
  %922 = vmatprep.subr.bf16.mxu0 0
  %923 = vmatpush1.bf16.msra.mxu0 0
  %924 = vmatprep.subr.bf16.mxu0 0
  %925 = vmatpush1.bf16.msra.mxu0 0
  %926 = vmatprep.subr.bf16.mxu0 0
  %927 = vmatpush1.bf16.msra.mxu0 0
  %928 = vmatprep.subr.bf16.mxu0 0
  %929 = vmatpush1.bf16.msra.mxu0 0
  %930 = vmatprep.subr.bf16.mxu0 0
  %931 = vmatpush1.bf16.msra.mxu0 0
  %932 = vmatprep.mubr.bf16.mxu0 0
  %933 = vmatmul.mubr.bf16.gmra.mrb[0].mxu0 %v895
  %v934 = vpop.f32.mrb[0].mxu0
  %v935 = vadd.f32 %v892, %v934
  %v936 = vpop.f32.mrb[0].mxu0
  %v937 = vpop.f32.mrb[0].mxu0
  %v938 = vpop.f32.mrb[0].mxu0
  %939 = vdwg.mxu0
  %v940 = vmul.f32 %v935, 0.5
  %v941 = vmul.f32 %v935, 0.044715
  %v942 = vmul.f32 %v941, %v935
  %v943 = vmul.f32 %v942, %v935
  %v944 = vadd.f32 %v935, %v943
  %v945 = vmul.f32 %v944, 0.7978846
  %v946 = vtanh.pop %v945
  %v947 = vadd.f32 %v946, 1.0
  %v948 = vmul.f32 %v940, %v947
  %v949 = vpack.c.bf16 %v948, %v948
  %v950 = vld [vmem:[%s17] sm:$0xf]
  %v951 = vld [vmem:[%s17 + $0x4] sm:$0xf]
  %v952 = vld [vmem:[%s17 + $0x8] sm:$0xf]
  %v953 = vld [vmem:[%s17 + $0xc] sm:$0xf]
  %v954 = vld [vmem:[%s17 + $0x10] sm:$0xf]
  %v955 = vld [vmem:[%s17 + $0x14] sm:$0xf]
  %v956 = vld [vmem:[%s17 + $0x18] sm:$0xf]
  %v957 = vld [vmem:[%s17 + $0x1c] sm:$0xf]
  %v966 = vunpack.c.l.b16 %v950
  %v967 = vunpack.c.l.b16 %v951
  %v968 = vunpack.c.l.b16 %v952
  %v969 = vunpack.c.l.b16 %v953
  %v970 = vunpack.c.l.b16 %v954
  %v971 = vunpack.c.l.b16 %v955
  %v972 = vunpack.c.l.b16 %v956
  %v973 = vunpack.c.l.b16 %v957
  %v974 = vpack.c.b16 %v967, %v966
  %v975 = vpack.c.b16 %v969, %v968
  %v976 = vpack.c.b16 %v971, %v970
  %v977 = vpack.c.b16 %v973, %v972
  %v983 = vsel %vm308, %v949, 0
  %985 = vmatprep.subr.bf16.mxu0 0
  %986 = vmatpush1.bf16.msra.mxu0 %v974
  %987 = vmatprep.subr.bf16.mxu0 0
  %988 = vmatpush1.bf16.msra.mxu0 %v975
  %989 = vmatprep.subr.bf16.mxu0 0
  %990 = vmatpush1.bf16.msra.mxu0 %v976
  %991 = vmatprep.subr.bf16.mxu0 0
  %992 = vmatpush1.bf16.msra.mxu0 %v977
  %993 = vmatprep.subr.bf16.mxu0 0
  %994 = vmatpush1.bf16.msra.mxu0 0
  %995 = vmatprep.subr.bf16.mxu0 0
  %996 = vmatpush1.bf16.msra.mxu0 0
  %997 = vmatprep.subr.bf16.mxu0 0
  %998 = vmatpush1.bf16.msra.mxu0 0
  %999 = vmatprep.subr.bf16.mxu0 0
  %1000 = vmatpush1.bf16.msra.mxu0 0
  %1001 = vmatprep.subr.bf16.mxu0 0
  %1002 = vmatpush1.bf16.msra.mxu0 0
  %1003 = vmatprep.subr.bf16.mxu0 0
  %1004 = vmatpush1.bf16.msra.mxu0 0
  %1005 = vmatprep.subr.bf16.mxu0 0
  %1006 = vmatpush1.bf16.msra.mxu0 0
  %1007 = vmatprep.subr.bf16.mxu0 0
  %1008 = vmatpush1.bf16.msra.mxu0 0
  %1009 = vmatprep.subr.bf16.mxu0 0
  %1010 = vmatpush1.bf16.msra.mxu0 0
  %1011 = vmatprep.subr.bf16.mxu0 0
  %1012 = vmatpush1.bf16.msra.mxu0 0
  %1013 = vmatprep.subr.bf16.mxu0 0
  %1014 = vmatpush1.bf16.msra.mxu0 0
  %1015 = vmatprep.subr.bf16.mxu0 0
  %1016 = vmatpush1.bf16.msra.mxu0 0
  %1017 = vmatprep.mubr.bf16.mxu0 0
  %1018 = vmatmul.mubr.bf16.gmra.mrb[0].mxu0 %v983
  %v1019 = vpop.f32.mrb[0].mxu0
  %v1020 = vadd.f32 %v884, %v1019
  %v1021 = vpop.f32.mrb[0].mxu0
  %v1022 = vpop.f32.mrb[0].mxu0
  %v1023 = vpop.f32.mrb[0].mxu0
  %1024 = vdwg.mxu0
  %v1025 = vmul.f32 %v1020, 0.5
  %v1026 = vmul.f32 %v1020, 0.044715
  %v1027 = vmul.f32 %v1026, %v1020
  %v1028 = vmul.f32 %v1027, %v1020
  %v1029 = vadd.f32 %v1020, %v1028
  %v1030 = vmul.f32 %v1029, 0.7978846
  %v1031 = vtanh.pop %v1030
  %v1032 = vadd.f32 %v1031, 1.0
  %v1033 = vmul.f32 %v1025, %v1032
  %v1034 = vpack.c.bf16 %v1033, %v1033
  %v1035 = vld [vmem:[%s18] sm:$0xf]
  %v1036 = vld [vmem:[%s18 + $0x4] sm:$0xf]
  %v1037 = vld [vmem:[%s18 + $0x8] sm:$0xf]
  %v1038 = vld [vmem:[%s18 + $0xc] sm:$0xf]
  %v1039 = vld [vmem:[%s18 + $0x10] sm:$0xf]
  %v1040 = vld [vmem:[%s18 + $0x14] sm:$0xf]
  %v1041 = vld [vmem:[%s18 + $0x18] sm:$0xf]
  %v1042 = vld [vmem:[%s18 + $0x1c] sm:$0xf]
  %v1043 = vld [vmem:[%s19] sm:$0x1]
  %v1045 = vlaneseq
  %v1046 = vshrl.u32 %v1045, 7
  %v1047 = vsub.s32 0, %v1046
  %v1048 = vrot.slane %v1043, %v1047
  %v1058 = vunpack.c.l.b16 %v1035
  %v1059 = vunpack.c.l.b16 %v1036
  %v1060 = vunpack.c.l.b16 %v1037
  %v1061 = vunpack.c.l.b16 %v1038
  %v1062 = vunpack.c.l.b16 %v1039
  %v1063 = vunpack.c.l.b16 %v1040
  %v1064 = vunpack.c.l.b16 %v1041
  %v1065 = vunpack.c.l.b16 %v1042
  %v1066 = vpack.c.b16 %v1059, %v1058
  %v1067 = vpack.c.b16 %v1061, %v1060
  %v1068 = vpack.c.b16 %v1063, %v1062
  %v1069 = vpack.c.b16 %v1065, %v1064
  %v1075 = vsel %vm308, %v1034, 0
  %1077 = vmatprep.subr.bf16.mxu0 0
  %1078 = vmatpush1.bf16.msra.mxu0 %v1066
  %1079 = vmatprep.subr.bf16.mxu0 0
  %1080 = vmatpush1.bf16.msra.mxu0 %v1067
  %1081 = vmatprep.subr.bf16.mxu0 0
  %1082 = vmatpush1.bf16.msra.mxu0 %v1068
  %1083 = vmatprep.subr.bf16.mxu0 0
  %1084 = vmatpush1.bf16.msra.mxu0 %v1069
  %1085 = vmatprep.subr.bf16.mxu0 0
  %1086 = vmatpush1.bf16.msra.mxu0 0
  %1087 = vmatprep.subr.bf16.mxu0 0
  %1088 = vmatpush1.bf16.msra.mxu0 0
  %1089 = vmatprep.subr.bf16.mxu0 0
  %1090 = vmatpush1.bf16.msra.mxu0 0
  %1091 = vmatprep.subr.bf16.mxu0 0
  %1092 = vmatpush1.bf16.msra.mxu0 0
  %1093 = vmatprep.subr.bf16.mxu0 0
  %1094 = vmatpush1.bf16.msra.mxu0 0
  %1095 = vmatprep.subr.bf16.mxu0 0
  %1096 = vmatpush1.bf16.msra.mxu0 0
  %1097 = vmatprep.subr.bf16.mxu0 0
  %1098 = vmatpush1.bf16.msra.mxu0 0
  %1099 = vmatprep.subr.bf16.mxu0 0
  %1100 = vmatpush1.bf16.msra.mxu0 0
  %1101 = vmatprep.subr.bf16.mxu0 0
  %1102 = vmatpush1.bf16.msra.mxu0 0
  %1103 = vmatprep.subr.bf16.mxu0 0
  %1104 = vmatpush1.bf16.msra.mxu0 0
  %1105 = vmatprep.subr.bf16.mxu0 0
  %1106 = vmatpush1.bf16.msra.mxu0 0
  %1107 = vmatprep.subr.bf16.mxu0 0
  %1108 = vmatpush1.bf16.msra.mxu0 0
  %1109 = vmatprep.mubr.bf16.mxu0 0
  %1110 = vmatmul.mubr.bf16.gmra.mrb[0].mxu0 %v1075
  %v1111 = vpop.f32.mrb[0].mxu0
  %v1112 = vadd.f32 %v1048, %v1111
  %v1113 = vpop.f32.mrb[0].mxu0
  %v1114 = vpop.f32.mrb[0].mxu0
  %v1115 = vpop.f32.mrb[0].mxu0
  %1116 = vdwg.mxu0
  %v1117 = vmul.f32 %v1112, 0.5
  %v1118 = vmul.f32 %v1112, 0.044715
  %v1119 = vmul.f32 %v1118, %v1112
  %v1120 = vmul.f32 %v1119, %v1112
  %v1121 = vadd.f32 %v1112, %v1120
  %v1122 = vmul.f32 %v1121, 0.7978846
  %v1123 = vtanh.pop %v1122
  %v1124 = vadd.f32 %v1123, 1.0
  %v1125 = vmul.f32 %v1117, %v1124
  %v1126 = vpack.c.bf16 %v1125, %v1125
  %v1127 = vld [vmem:[%s20] sm:$0xf]
  %v1128 = vld [vmem:[%s20 + $0x4] sm:$0xf]
  %v1129 = vld [vmem:[%s20 + $0x8] sm:$0xf]
  %v1130 = vld [vmem:[%s20 + $0xc] sm:$0xf]
  %v1131 = vld [vmem:[%s20 + $0x10] sm:$0xf]
  %v1132 = vld [vmem:[%s20 + $0x14] sm:$0xf]
  %v1133 = vld [vmem:[%s20 + $0x18] sm:$0xf]
  %v1134 = vld [vmem:[%s20 + $0x1c] sm:$0xf]
  %v1135 = vld [vmem:[%s21] sm:$0x1]
  %v1137 = vlaneseq
  %v1138 = vshrl.u32 %v1137, 7
  %v1139 = vsub.s32 0, %v1138
  %v1140 = vrot.slane %v1135, %v1139
  %v1150 = vunpack.c.l.b16 %v1127
  %v1151 = vunpack.c.l.b16 %v1128
  %v1152 = vunpack.c.l.b16 %v1129
  %v1153 = vunpack.c.l.b16 %v1130
  %v1154 = vunpack.c.l.b16 %v1131
  %v1155 = vunpack.c.l.b16 %v1132
  %v1156 = vunpack.c.l.b16 %v1133
  %v1157 = vunpack.c.l.b16 %v1134
  %v1158 = vpack.c.b16 %v1151, %v1150
  %v1159 = vpack.c.b16 %v1153, %v1152
  %v1160 = vpack.c.b16 %v1155, %v1154
  %v1161 = vpack.c.b16 %v1157, %v1156
  %v1167 = vsel %vm308, %v1126, 0
  %1169 = vmatprep.subr.bf16.mxu0 0
  %1170 = vmatpush1.bf16.msra.mxu0 %v1158
  %1171 = vmatprep.subr.bf16.mxu0 0
  %1172 = vmatpush1.bf16.msra.mxu0 %v1159
  %1173 = vmatprep.subr.bf16.mxu0 0
  %1174 = vmatpush1.bf16.msra.mxu0 %v1160
  %1175 = vmatprep.subr.bf16.mxu0 0
  %1176 = vmatpush1.bf16.msra.mxu0 %v1161
  %1177 = vmatprep.subr.bf16.mxu0 0
  %1178 = vmatpush1.bf16.msra.mxu0 0
  %1179 = vmatprep.subr.bf16.mxu0 0
  %1180 = vmatpush1.bf16.msra.mxu0 0
  %1181 = vmatprep.subr.bf16.mxu0 0
  %1182 = vmatpush1.bf16.msra.mxu0 0
  %1183 = vmatprep.subr.bf16.mxu0 0
  %1184 = vmatpush1.bf16.msra.mxu0 0
  %1185 = vmatprep.subr.bf16.mxu0 0
  %1186 = vmatpush1.bf16.msra.mxu0 0
  %1187 = vmatprep.subr.bf16.mxu0 0
  %1188 = vmatpush1.bf16.msra.mxu0 0
  %1189 = vmatprep.subr.bf16.mxu0 0
  %1190 = vmatpush1.bf16.msra.mxu0 0
  %1191 = vmatprep.subr.bf16.mxu0 0
  %1192 = vmatpush1.bf16.msra.mxu0 0
  %1193 = vmatprep.subr.bf16.mxu0 0
  %1194 = vmatpush1.bf16.msra.mxu0 0
  %1195 = vmatprep.subr.bf16.mxu0 0
  %1196 = vmatpush1.bf16.msra.mxu0 0
  %1197 = vmatprep.subr.bf16.mxu0 0
  %1198 = vmatpush1.bf16.msra.mxu0 0
  %1199 = vmatprep.subr.bf16.mxu0 0
  %1200 = vmatpush1.bf16.msra.mxu0 0
  %1201 = vmatprep.mubr.bf16.mxu0 0
  %1202 = vmatmul.mubr.bf16.gmra.mrb[0].mxu0 %v1167
  %v1203 = vpop.f32.mrb[0].mxu0
  %v1204 = vadd.f32 %v1140, %v1203
  %v1205 = vpop.f32.mrb[0].mxu0
  %v1206 = vpop.f32.mrb[0].mxu0
  %v1207 = vpop.f32.mrb[0].mxu0
  %1208 = vdwg.mxu0
  %v1209 = vtanh.pop %v1204
  %v1210 = vmul.f32 %v1209, 4.0
  %v1211 = vadd.f32 %v1210, 0.0
  %1213 = vset.pattern.permute.xlu0 0
  %1214 = vperm.xlu0 %1213, %v883
  %v1215 = vpop.permute.xlu0 %1214
  %v1217 = vmul.f32 %v1215, %v1204
  %v1218 = vadd.f32 %v858, %v1217
  %s1219 = scalar_lea.vmem %s3, 8
  %v1220 = vld [vmem:[%s1219] sm:$0xff]
  %v1221 = vmul.f32 %v1211, 0.5
  %v1222 = vmul.f32 %v1221, 1.442695
  %v1223 = vpow.pop %v1222
  %1225 = vset.pattern.permute.xlu0 0
  %1226 = vperm.xlu0 %1225, %v1220
  %v1227 = vpop.permute.xlu0 %1226
  %v1229 = vmul.f32 %v1227, %v1223
  %1231 = vrot.lane.b32.xlu0 %v881, 4
  %v1232 = vpop.permute.xlu0 %1231
  %v1234 = vmul.f32 %v1229, %v1232
  %1236 = vrot.lane.b32.xlu0 %v1234, 124
  %v1237 = vpop.permute.xlu0 %1236
  %v1239 = vadd.f32 %v1218, %v1237
  %s1240 = scalar_lea.vmem %s4, 8
  %v1241 = vld [vmem:[%s1240] sm:$0xff]
  %v1242 = vmul.f32 %v881, %v881
  %1244 = vrot.lane.b32.xlu0 %v1211, 124
  %v1245 = vpop.permute.xlu0 %1244
  %v1247 = vadd.f32 %v1242, %v1245
  %v1248 = vsel %vm512, %v1247, 0.0
  %1249 = vadd.xlane.f32.xlu0 %v1248
  %v1250 = vpop.xlane.xlu0 %1249
  %v1251 = vmul.f32 %v1250, 0.5
  %v1252 = vsub.f32 %v1241, %v1251
  %s1253 = scalar_lea.vmem %s5, 8
  %v1254 = vld [vmem:[%s1253] sm:$0xff]
  %1256 = vset.pattern.permute.xlu0 0
  %1257 = vperm.xlu0 %1256, %v1254
  %v1258 = vpop.permute.xlu0 %1257
  %v1260 = vmul.f32 %v1239, %v1258
  %v1261 = vsub.f32 %v858, %v1260
  %s1262 = scalar_lea.vmem %s6, 8
  %v1263 = vld [vmem:[%s1262] sm:$0xff]
  %1265 = vset.pattern.permute.xlu0 0
  %1266 = vperm.xlu0 %1265, %v1263
  %v1267 = vpop.permute.xlu0 %1266
  %v1269 = vmul.f32 %v1261, %v1267
  %s1270 = scalar_lea.vmem %s7, 8
  %v1271 = vld [vmem:[%s1270] sm:$0xff]
  %v1272 = vmul.f32 %v1269, %v1269
  %v1273 = vsel %vm512, %v1272, 0.0
  %1274 = vadd.xlane.f32.xlu0 %v1273
  %v1275 = vpop.xlane.xlu0 %1274
  %v1276 = vmul.f32 %v1275, 0.5
  %v1277 = vsub.f32 %v1271, %v1276
  %1279 = vrot.lane.b32.xlu0 %v1252, 4
  %v1280 = vpop.permute.xlu0 %1279
  %1283 = vrot.lane.b32.xlu0 %v1277, 5
  %v1284 = vpop.permute.xlu0 %1283
  %v1286 = vsel %vm512, %v1239, %v1280
  %v1287 = vsel %vm876, %v1286, %v1284
  %s1288 = scalar_lea.vmem %s22, 8
  %1289 = vst.msk [vmem:[%s1288] sm:$0xff] %vm878, %v1287
  %s1290 = scalar_lea.vmem %s1, 16
  %v1291 = vld [vmem:[%s1290] sm:$0xff]
  %s1292 = scalar_lea.vmem %s2, 16
  %v1293 = vld [vmem:[%s1292] sm:$0xff]
  %v1294 = vld [vmem:[#allocation2 + $0x10] sm:$0xff]
  %v1295 = vpack.c.bf16 %v1239, %v1239
  %v1296 = vld [vmem:[%s15] sm:$0x3]
  %v1297 = vld [vmem:[%s16] sm:$0x1]
  %v1299 = vlaneseq
  %v1300 = vshrl.u32 %v1299, 7
  %v1301 = vsub.s32 0, %v1300
  %v1302 = vrot.slane %v1297, %v1301
  %v1305 = vsel %vm512, %v1295, 0
  %v1308 = vsel %vm516, %v1296, 0
  %1310 = vmatprep.subr.bf16.mxu0 0
  %1311 = vmatpush1.bf16.msra.mxu0 %v1308
  %1312 = vmatprep.subr.bf16.mxu0 0
  %1313 = vmatpush1.bf16.msra.mxu0 0
  %1314 = vmatprep.subr.bf16.mxu0 0
  %1315 = vmatpush1.bf16.msra.mxu0 0
  %1316 = vmatprep.subr.bf16.mxu0 0
  %1317 = vmatpush1.bf16.msra.mxu0 0
  %1318 = vmatprep.subr.bf16.mxu0 0
  %1319 = vmatpush1.bf16.msra.mxu0 0
  %1320 = vmatprep.subr.bf16.mxu0 0
  %1321 = vmatpush1.bf16.msra.mxu0 0
  %1322 = vmatprep.subr.bf16.mxu0 0
  %1323 = vmatpush1.bf16.msra.mxu0 0
  %1324 = vmatprep.subr.bf16.mxu0 0
  %1325 = vmatpush1.bf16.msra.mxu0 0
  %1326 = vmatprep.subr.bf16.mxu0 0
  %1327 = vmatpush1.bf16.msra.mxu0 0
  %1328 = vmatprep.subr.bf16.mxu0 0
  %1329 = vmatpush1.bf16.msra.mxu0 0
  %1330 = vmatprep.subr.bf16.mxu0 0
  %1331 = vmatpush1.bf16.msra.mxu0 0
  %1332 = vmatprep.subr.bf16.mxu0 0
  %1333 = vmatpush1.bf16.msra.mxu0 0
  %1334 = vmatprep.subr.bf16.mxu0 0
  %1335 = vmatpush1.bf16.msra.mxu0 0
  %1336 = vmatprep.subr.bf16.mxu0 0
  %1337 = vmatpush1.bf16.msra.mxu0 0
  %1338 = vmatprep.subr.bf16.mxu0 0
  %1339 = vmatpush1.bf16.msra.mxu0 0
  %1340 = vmatprep.subr.bf16.mxu0 0
  %1341 = vmatpush1.bf16.msra.mxu0 0
  %1342 = vmatprep.mubr.bf16.mxu0 0
  %1343 = vmatmul.mubr.bf16.gmra.mrb[0].mxu0 %v1305
  %v1344 = vpop.f32.mrb[0].mxu0
  %v1345 = vadd.f32 %v1302, %v1344
  %v1346 = vpop.f32.mrb[0].mxu0
  %v1347 = vpop.f32.mrb[0].mxu0
  %v1348 = vpop.f32.mrb[0].mxu0
  %1349 = vdwg.mxu0
  %v1350 = vmul.f32 %v1345, 0.5
  %v1351 = vmul.f32 %v1345, 0.044715
  %v1352 = vmul.f32 %v1351, %v1345
  %v1353 = vmul.f32 %v1352, %v1345
  %v1354 = vadd.f32 %v1345, %v1353
  %v1355 = vmul.f32 %v1354, 0.7978846
  %v1356 = vtanh.pop %v1355
  %v1357 = vadd.f32 %v1356, 1.0
  %v1358 = vmul.f32 %v1350, %v1357
  %v1359 = vpack.c.bf16 %v1358, %v1358
  %v1360 = vld [vmem:[%s17] sm:$0xf]
  %v1361 = vld [vmem:[%s17 + $0x4] sm:$0xf]
  %v1362 = vld [vmem:[%s17 + $0x8] sm:$0xf]
  %v1363 = vld [vmem:[%s17 + $0xc] sm:$0xf]
  %v1364 = vld [vmem:[%s17 + $0x10] sm:$0xf]
  %v1365 = vld [vmem:[%s17 + $0x14] sm:$0xf]
  %v1366 = vld [vmem:[%s17 + $0x18] sm:$0xf]
  %v1367 = vld [vmem:[%s17 + $0x1c] sm:$0xf]
  %v1376 = vunpack.c.l.b16 %v1360
  %v1377 = vunpack.c.l.b16 %v1361
  %v1378 = vunpack.c.l.b16 %v1362
  %v1379 = vunpack.c.l.b16 %v1363
  %v1380 = vunpack.c.l.b16 %v1364
  %v1381 = vunpack.c.l.b16 %v1365
  %v1382 = vunpack.c.l.b16 %v1366
  %v1383 = vunpack.c.l.b16 %v1367
  %v1384 = vpack.c.b16 %v1377, %v1376
  %v1385 = vpack.c.b16 %v1379, %v1378
  %v1386 = vpack.c.b16 %v1381, %v1380
  %v1387 = vpack.c.b16 %v1383, %v1382
  %v1393 = vsel %vm308, %v1359, 0
  %1395 = vmatprep.subr.bf16.mxu0 0
  %1396 = vmatpush1.bf16.msra.mxu0 %v1384
  %1397 = vmatprep.subr.bf16.mxu0 0
  %1398 = vmatpush1.bf16.msra.mxu0 %v1385
  %1399 = vmatprep.subr.bf16.mxu0 0
  %1400 = vmatpush1.bf16.msra.mxu0 %v1386
  %1401 = vmatprep.subr.bf16.mxu0 0
  %1402 = vmatpush1.bf16.msra.mxu0 %v1387
  %1403 = vmatprep.subr.bf16.mxu0 0
  %1404 = vmatpush1.bf16.msra.mxu0 0
  %1405 = vmatprep.subr.bf16.mxu0 0
  %1406 = vmatpush1.bf16.msra.mxu0 0
  %1407 = vmatprep.subr.bf16.mxu0 0
  %1408 = vmatpush1.bf16.msra.mxu0 0
  %1409 = vmatprep.subr.bf16.mxu0 0
  %1410 = vmatpush1.bf16.msra.mxu0 0
  %1411 = vmatprep.subr.bf16.mxu0 0
  %1412 = vmatpush1.bf16.msra.mxu0 0
  %1413 = vmatprep.subr.bf16.mxu0 0
  %1414 = vmatpush1.bf16.msra.mxu0 0
  %1415 = vmatprep.subr.bf16.mxu0 0
  %1416 = vmatpush1.bf16.msra.mxu0 0
  %1417 = vmatprep.subr.bf16.mxu0 0
  %1418 = vmatpush1.bf16.msra.mxu0 0
  %1419 = vmatprep.subr.bf16.mxu0 0
  %1420 = vmatpush1.bf16.msra.mxu0 0
  %1421 = vmatprep.subr.bf16.mxu0 0
  %1422 = vmatpush1.bf16.msra.mxu0 0
  %1423 = vmatprep.subr.bf16.mxu0 0
  %1424 = vmatpush1.bf16.msra.mxu0 0
  %1425 = vmatprep.subr.bf16.mxu0 0
  %1426 = vmatpush1.bf16.msra.mxu0 0
  %1427 = vmatprep.mubr.bf16.mxu0 0
  %1428 = vmatmul.mubr.bf16.gmra.mrb[0].mxu0 %v1393
  %v1429 = vpop.f32.mrb[0].mxu0
  %v1430 = vadd.f32 %v1294, %v1429
  %v1431 = vpop.f32.mrb[0].mxu0
  %v1432 = vpop.f32.mrb[0].mxu0
  %v1433 = vpop.f32.mrb[0].mxu0
  %1434 = vdwg.mxu0
  %v1435 = vmul.f32 %v1430, 0.5
  %v1436 = vmul.f32 %v1430, 0.044715
  %v1437 = vmul.f32 %v1436, %v1430
  %v1438 = vmul.f32 %v1437, %v1430
  %v1439 = vadd.f32 %v1430, %v1438
  %v1440 = vmul.f32 %v1439, 0.7978846
  %v1441 = vtanh.pop %v1440
  %v1442 = vadd.f32 %v1441, 1.0
  %v1443 = vmul.f32 %v1435, %v1442
  %v1444 = vpack.c.bf16 %v1443, %v1443
  %v1445 = vld [vmem:[%s18] sm:$0xf]
  %v1446 = vld [vmem:[%s18 + $0x4] sm:$0xf]
  %v1447 = vld [vmem:[%s18 + $0x8] sm:$0xf]
  %v1448 = vld [vmem:[%s18 + $0xc] sm:$0xf]
  %v1449 = vld [vmem:[%s18 + $0x10] sm:$0xf]
  %v1450 = vld [vmem:[%s18 + $0x14] sm:$0xf]
  %v1451 = vld [vmem:[%s18 + $0x18] sm:$0xf]
  %v1452 = vld [vmem:[%s18 + $0x1c] sm:$0xf]
  %v1453 = vld [vmem:[%s19] sm:$0x1]
  %v1455 = vlaneseq
  %v1456 = vshrl.u32 %v1455, 7
  %v1457 = vsub.s32 0, %v1456
  %v1458 = vrot.slane %v1453, %v1457
  %v1468 = vunpack.c.l.b16 %v1445
  %v1469 = vunpack.c.l.b16 %v1446
  %v1470 = vunpack.c.l.b16 %v1447
  %v1471 = vunpack.c.l.b16 %v1448
  %v1472 = vunpack.c.l.b16 %v1449
  %v1473 = vunpack.c.l.b16 %v1450
  %v1474 = vunpack.c.l.b16 %v1451
  %v1475 = vunpack.c.l.b16 %v1452
  %v1476 = vpack.c.b16 %v1469, %v1468
  %v1477 = vpack.c.b16 %v1471, %v1470
  %v1478 = vpack.c.b16 %v1473, %v1472
  %v1479 = vpack.c.b16 %v1475, %v1474
  %v1485 = vsel %vm308, %v1444, 0
  %1487 = vmatprep.subr.bf16.mxu0 0
  %1488 = vmatpush1.bf16.msra.mxu0 %v1476
  %1489 = vmatprep.subr.bf16.mxu0 0
  %1490 = vmatpush1.bf16.msra.mxu0 %v1477
  %1491 = vmatprep.subr.bf16.mxu0 0
  %1492 = vmatpush1.bf16.msra.mxu0 %v1478
  %1493 = vmatprep.subr.bf16.mxu0 0
  %1494 = vmatpush1.bf16.msra.mxu0 %v1479
  %1495 = vmatprep.subr.bf16.mxu0 0
  %1496 = vmatpush1.bf16.msra.mxu0 0
  %1497 = vmatprep.subr.bf16.mxu0 0
  %1498 = vmatpush1.bf16.msra.mxu0 0
  %1499 = vmatprep.subr.bf16.mxu0 0
  %1500 = vmatpush1.bf16.msra.mxu0 0
  %1501 = vmatprep.subr.bf16.mxu0 0
  %1502 = vmatpush1.bf16.msra.mxu0 0
  %1503 = vmatprep.subr.bf16.mxu0 0
  %1504 = vmatpush1.bf16.msra.mxu0 0
  %1505 = vmatprep.subr.bf16.mxu0 0
  %1506 = vmatpush1.bf16.msra.mxu0 0
  %1507 = vmatprep.subr.bf16.mxu0 0
  %1508 = vmatpush1.bf16.msra.mxu0 0
  %1509 = vmatprep.subr.bf16.mxu0 0
  %1510 = vmatpush1.bf16.msra.mxu0 0
  %1511 = vmatprep.subr.bf16.mxu0 0
  %1512 = vmatpush1.bf16.msra.mxu0 0
  %1513 = vmatprep.subr.bf16.mxu0 0
  %1514 = vmatpush1.bf16.msra.mxu0 0
  %1515 = vmatprep.subr.bf16.mxu0 0
  %1516 = vmatpush1.bf16.msra.mxu0 0
  %1517 = vmatprep.subr.bf16.mxu0 0
  %1518 = vmatpush1.bf16.msra.mxu0 0
  %1519 = vmatprep.mubr.bf16.mxu0 0
  %1520 = vmatmul.mubr.bf16.gmra.mrb[0].mxu0 %v1485
  %v1521 = vpop.f32.mrb[0].mxu0
  %v1522 = vadd.f32 %v1458, %v1521
  %v1523 = vpop.f32.mrb[0].mxu0
  %v1524 = vpop.f32.mrb[0].mxu0
  %v1525 = vpop.f32.mrb[0].mxu0
  %1526 = vdwg.mxu0
  %v1527 = vmul.f32 %v1522, 0.5
  %v1528 = vmul.f32 %v1522, 0.044715
  %v1529 = vmul.f32 %v1528, %v1522
  %v1530 = vmul.f32 %v1529, %v1522
  %v1531 = vadd.f32 %v1522, %v1530
  %v1532 = vmul.f32 %v1531, 0.7978846
  %v1533 = vtanh.pop %v1532
  %v1534 = vadd.f32 %v1533, 1.0
  %v1535 = vmul.f32 %v1527, %v1534
  %v1536 = vpack.c.bf16 %v1535, %v1535
  %v1537 = vld [vmem:[%s20] sm:$0xf]
  %v1538 = vld [vmem:[%s20 + $0x4] sm:$0xf]
  %v1539 = vld [vmem:[%s20 + $0x8] sm:$0xf]
  %v1540 = vld [vmem:[%s20 + $0xc] sm:$0xf]
  %v1541 = vld [vmem:[%s20 + $0x10] sm:$0xf]
  %v1542 = vld [vmem:[%s20 + $0x14] sm:$0xf]
  %v1543 = vld [vmem:[%s20 + $0x18] sm:$0xf]
  %v1544 = vld [vmem:[%s20 + $0x1c] sm:$0xf]
  %v1545 = vld [vmem:[%s21] sm:$0x1]
  %v1547 = vlaneseq
  %v1548 = vshrl.u32 %v1547, 7
  %v1549 = vsub.s32 0, %v1548
  %v1550 = vrot.slane %v1545, %v1549
  %v1560 = vunpack.c.l.b16 %v1537
  %v1561 = vunpack.c.l.b16 %v1538
  %v1562 = vunpack.c.l.b16 %v1539
  %v1563 = vunpack.c.l.b16 %v1540
  %v1564 = vunpack.c.l.b16 %v1541
  %v1565 = vunpack.c.l.b16 %v1542
  %v1566 = vunpack.c.l.b16 %v1543
  %v1567 = vunpack.c.l.b16 %v1544
  %v1568 = vpack.c.b16 %v1561, %v1560
  %v1569 = vpack.c.b16 %v1563, %v1562
  %v1570 = vpack.c.b16 %v1565, %v1564
  %v1571 = vpack.c.b16 %v1567, %v1566
  %v1577 = vsel %vm308, %v1536, 0
  %1579 = vmatprep.subr.bf16.mxu0 0
  %1580 = vmatpush1.bf16.msra.mxu0 %v1568
  %1581 = vmatprep.subr.bf16.mxu0 0
  %1582 = vmatpush1.bf16.msra.mxu0 %v1569
  %1583 = vmatprep.subr.bf16.mxu0 0
  %1584 = vmatpush1.bf16.msra.mxu0 %v1570
  %1585 = vmatprep.subr.bf16.mxu0 0
  %1586 = vmatpush1.bf16.msra.mxu0 %v1571
  %1587 = vmatprep.subr.bf16.mxu0 0
  %1588 = vmatpush1.bf16.msra.mxu0 0
  %1589 = vmatprep.subr.bf16.mxu0 0
  %1590 = vmatpush1.bf16.msra.mxu0 0
  %1591 = vmatprep.subr.bf16.mxu0 0
  %1592 = vmatpush1.bf16.msra.mxu0 0
  %1593 = vmatprep.subr.bf16.mxu0 0
  %1594 = vmatpush1.bf16.msra.mxu0 0
  %1595 = vmatprep.subr.bf16.mxu0 0
  %1596 = vmatpush1.bf16.msra.mxu0 0
  %1597 = vmatprep.subr.bf16.mxu0 0
  %1598 = vmatpush1.bf16.msra.mxu0 0
  %1599 = vmatprep.subr.bf16.mxu0 0
  %1600 = vmatpush1.bf16.msra.mxu0 0
  %1601 = vmatprep.subr.bf16.mxu0 0
  %1602 = vmatpush1.bf16.msra.mxu0 0
  %1603 = vmatprep.subr.bf16.mxu0 0
  %1604 = vmatpush1.bf16.msra.mxu0 0
  %1605 = vmatprep.subr.bf16.mxu0 0
  %1606 = vmatpush1.bf16.msra.mxu0 0
  %1607 = vmatprep.subr.bf16.mxu0 0
  %1608 = vmatpush1.bf16.msra.mxu0 0
  %1609 = vmatprep.subr.bf16.mxu0 0
  %1610 = vmatpush1.bf16.msra.mxu0 0
  %1611 = vmatprep.mubr.bf16.mxu0 0
  %1612 = vmatmul.mubr.bf16.gmra.mrb[0].mxu0 %v1577
  %v1613 = vpop.f32.mrb[0].mxu0
  %v1614 = vadd.f32 %v1550, %v1613
  %v1615 = vpop.f32.mrb[0].mxu0
  %v1616 = vpop.f32.mrb[0].mxu0
  %v1617 = vpop.f32.mrb[0].mxu0
  %1618 = vdwg.mxu0
  %v1619 = vtanh.pop %v1614
  %v1620 = vmul.f32 %v1619, 4.0
  %v1621 = vadd.f32 %v1620, 0.0
  %1623 = vset.pattern.permute.xlu0 0
  %1624 = vperm.xlu0 %1623, %v1293
  %v1625 = vpop.permute.xlu0 %1624
  %v1627 = vmul.f32 %v1625, %v1614
  %v1628 = vadd.f32 %v1239, %v1627
  %s1629 = scalar_lea.vmem %s3, 16
  %v1630 = vld [vmem:[%s1629] sm:$0xff]
  %v1631 = vmul.f32 %v1621, 0.5
  %v1632 = vmul.f32 %v1631, 1.442695
  %v1633 = vpow.pop %v1632
  %1635 = vset.pattern.permute.xlu0 0
  %1636 = vperm.xlu0 %1635, %v1630
  %v1637 = vpop.permute.xlu0 %1636
  %v1639 = vmul.f32 %v1637, %v1633
  %1641 = vrot.lane.b32.xlu0 %v1291, 4
  %v1642 = vpop.permute.xlu0 %1641
  %v1644 = vmul.f32 %v1639, %v1642
  %1646 = vrot.lane.b32.xlu0 %v1644, 124
  %v1647 = vpop.permute.xlu0 %1646
  %v1649 = vadd.f32 %v1628, %v1647
  %s1650 = scalar_lea.vmem %s4, 16
  %v1651 = vld [vmem:[%s1650] sm:$0xff]
  %v1652 = vmul.f32 %v1291, %v1291
  %1654 = vrot.lane.b32.xlu0 %v1621, 124
  %v1655 = vpop.permute.xlu0 %1654
  %v1657 = vadd.f32 %v1652, %v1655
  %v1658 = vsel %vm512, %v1657, 0.0
  %1659 = vadd.xlane.f32.xlu0 %v1658
  %v1660 = vpop.xlane.xlu0 %1659
  %v1661 = vmul.f32 %v1660, 0.5
  %v1662 = vsub.f32 %v1651, %v1661
  %s1663 = scalar_lea.vmem %s5, 16
  %v1664 = vld [vmem:[%s1663] sm:$0xff]
  %1666 = vset.pattern.permute.xlu0 0
  %1667 = vperm.xlu0 %1666, %v1664
  %v1668 = vpop.permute.xlu0 %1667
  %v1670 = vmul.f32 %v1649, %v1668
  %v1671 = vsub.f32 %v1239, %v1670
  %s1672 = scalar_lea.vmem %s6, 16
  %v1673 = vld [vmem:[%s1672] sm:$0xff]
  %1675 = vset.pattern.permute.xlu0 0
  %1676 = vperm.xlu0 %1675, %v1673
  %v1677 = vpop.permute.xlu0 %1676
  %v1679 = vmul.f32 %v1671, %v1677
  %s1680 = scalar_lea.vmem %s7, 16
  %v1681 = vld [vmem:[%s1680] sm:$0xff]
  %v1682 = vmul.f32 %v1679, %v1679
  %v1683 = vsel %vm512, %v1682, 0.0
  %1684 = vadd.xlane.f32.xlu0 %v1683
  %v1685 = vpop.xlane.xlu0 %1684
  %v1686 = vmul.f32 %v1685, 0.5
  %v1687 = vsub.f32 %v1681, %v1686
  %1689 = vrot.lane.b32.xlu0 %v1662, 4
  %v1690 = vpop.permute.xlu0 %1689
  %1693 = vrot.lane.b32.xlu0 %v1687, 5
  %v1694 = vpop.permute.xlu0 %1693
  %v1696 = vsel %vm512, %v1649, %v1690
  %v1697 = vsel %vm876, %v1696, %v1694
  %s1698 = scalar_lea.vmem %s22, 16
  %1699 = vst.msk [vmem:[%s1698] sm:$0xff] %vm878, %v1697
  %s1700 = scalar_lea.vmem %s1, 24
  %v1701 = vld [vmem:[%s1700] sm:$0xff]
  %s1702 = scalar_lea.vmem %s2, 24
  %v1703 = vld [vmem:[%s1702] sm:$0xff]
  %v1704 = vld [vmem:[#allocation2 + $0x18] sm:$0xff]
  %v1705 = vpack.c.bf16 %v1649, %v1649
  %v1706 = vld [vmem:[%s15] sm:$0x3]
  %v1707 = vld [vmem:[%s16] sm:$0x1]
  %v1709 = vlaneseq
  %v1710 = vshrl.u32 %v1709, 7
  %v1711 = vsub.s32 0, %v1710
  %v1712 = vrot.slane %v1707, %v1711
  %v1715 = vsel %vm512, %v1705, 0
  %v1718 = vsel %vm516, %v1706, 0
  %1720 = vmatprep.subr.bf16.mxu0 0
  %1721 = vmatpush1.bf16.msra.mxu0 %v1718
  %1722 = vmatprep.subr.bf16.mxu0 0
  %1723 = vmatpush1.bf16.msra.mxu0 0
  %1724 = vmatprep.subr.bf16.mxu0 0
  %1725 = vmatpush1.bf16.msra.mxu0 0
  %1726 = vmatprep.subr.bf16.mxu0 0
  %1727 = vmatpush1.bf16.msra.mxu0 0
  %1728 = vmatprep.subr.bf16.mxu0 0
  %1729 = vmatpush1.bf16.msra.mxu0 0
  %1730 = vmatprep.subr.bf16.mxu0 0
  %1731 = vmatpush1.bf16.msra.mxu0 0
  %1732 = vmatprep.subr.bf16.mxu0 0
  %1733 = vmatpush1.bf16.msra.mxu0 0
  %1734 = vmatprep.subr.bf16.mxu0 0
  %1735 = vmatpush1.bf16.msra.mxu0 0
  %1736 = vmatprep.subr.bf16.mxu0 0
  %1737 = vmatpush1.bf16.msra.mxu0 0
  %1738 = vmatprep.subr.bf16.mxu0 0
  %1739 = vmatpush1.bf16.msra.mxu0 0
  %1740 = vmatprep.subr.bf16.mxu0 0
  %1741 = vmatpush1.bf16.msra.mxu0 0
  %1742 = vmatprep.subr.bf16.mxu0 0
  %1743 = vmatpush1.bf16.msra.mxu0 0
  %1744 = vmatprep.subr.bf16.mxu0 0
  %1745 = vmatpush1.bf16.msra.mxu0 0
  %1746 = vmatprep.subr.bf16.mxu0 0
  %1747 = vmatpush1.bf16.msra.mxu0 0
  %1748 = vmatprep.subr.bf16.mxu0 0
  %1749 = vmatpush1.bf16.msra.mxu0 0
  %1750 = vmatprep.subr.bf16.mxu0 0
  %1751 = vmatpush1.bf16.msra.mxu0 0
  %1752 = vmatprep.mubr.bf16.mxu0 0
  %1753 = vmatmul.mubr.bf16.gmra.mrb[0].mxu0 %v1715
  %v1754 = vpop.f32.mrb[0].mxu0
  %v1755 = vadd.f32 %v1712, %v1754
  %v1756 = vpop.f32.mrb[0].mxu0
  %v1757 = vpop.f32.mrb[0].mxu0
  %v1758 = vpop.f32.mrb[0].mxu0
  %1759 = vdwg.mxu0
  %v1760 = vmul.f32 %v1755, 0.5
  %v1761 = vmul.f32 %v1755, 0.044715
  %v1762 = vmul.f32 %v1761, %v1755
  %v1763 = vmul.f32 %v1762, %v1755
  %v1764 = vadd.f32 %v1755, %v1763
  %v1765 = vmul.f32 %v1764, 0.7978846
  %v1766 = vtanh.pop %v1765
  %v1767 = vadd.f32 %v1766, 1.0
  %v1768 = vmul.f32 %v1760, %v1767
  %v1769 = vpack.c.bf16 %v1768, %v1768
  %v1770 = vld [vmem:[%s17] sm:$0xf]
  %v1771 = vld [vmem:[%s17 + $0x4] sm:$0xf]
  %v1772 = vld [vmem:[%s17 + $0x8] sm:$0xf]
  %v1773 = vld [vmem:[%s17 + $0xc] sm:$0xf]
  %v1774 = vld [vmem:[%s17 + $0x10] sm:$0xf]
  %v1775 = vld [vmem:[%s17 + $0x14] sm:$0xf]
  %v1776 = vld [vmem:[%s17 + $0x18] sm:$0xf]
  %v1777 = vld [vmem:[%s17 + $0x1c] sm:$0xf]
  %v1786 = vunpack.c.l.b16 %v1770
  %v1787 = vunpack.c.l.b16 %v1771
  %v1788 = vunpack.c.l.b16 %v1772
  %v1789 = vunpack.c.l.b16 %v1773
  %v1790 = vunpack.c.l.b16 %v1774
  %v1791 = vunpack.c.l.b16 %v1775
  %v1792 = vunpack.c.l.b16 %v1776
  %v1793 = vunpack.c.l.b16 %v1777
  %v1794 = vpack.c.b16 %v1787, %v1786
  %v1795 = vpack.c.b16 %v1789, %v1788
  %v1796 = vpack.c.b16 %v1791, %v1790
  %v1797 = vpack.c.b16 %v1793, %v1792
  %v1803 = vsel %vm308, %v1769, 0
  %1805 = vmatprep.subr.bf16.mxu0 0
  %1806 = vmatpush1.bf16.msra.mxu0 %v1794
  %1807 = vmatprep.subr.bf16.mxu0 0
  %1808 = vmatpush1.bf16.msra.mxu0 %v1795
  %1809 = vmatprep.subr.bf16.mxu0 0
  %1810 = vmatpush1.bf16.msra.mxu0 %v1796
  %1811 = vmatprep.subr.bf16.mxu0 0
  %1812 = vmatpush1.bf16.msra.mxu0 %v1797
  %1813 = vmatprep.subr.bf16.mxu0 0
  %1814 = vmatpush1.bf16.msra.mxu0 0
  %1815 = vmatprep.subr.bf16.mxu0 0
  %1816 = vmatpush1.bf16.msra.mxu0 0
  %1817 = vmatprep.subr.bf16.mxu0 0
  %1818 = vmatpush1.bf16.msra.mxu0 0
  %1819 = vmatprep.subr.bf16.mxu0 0
  %1820 = vmatpush1.bf16.msra.mxu0 0
  %1821 = vmatprep.subr.bf16.mxu0 0
  %1822 = vmatpush1.bf16.msra.mxu0 0
  %1823 = vmatprep.subr.bf16.mxu0 0
  %1824 = vmatpush1.bf16.msra.mxu0 0
  %1825 = vmatprep.subr.bf16.mxu0 0
  %1826 = vmatpush1.bf16.msra.mxu0 0
  %1827 = vmatprep.subr.bf16.mxu0 0
  %1828 = vmatpush1.bf16.msra.mxu0 0
  %1829 = vmatprep.subr.bf16.mxu0 0
  %1830 = vmatpush1.bf16.msra.mxu0 0
  %1831 = vmatprep.subr.bf16.mxu0 0
  %1832 = vmatpush1.bf16.msra.mxu0 0
  %1833 = vmatprep.subr.bf16.mxu0 0
  %1834 = vmatpush1.bf16.msra.mxu0 0
  %1835 = vmatprep.subr.bf16.mxu0 0
  %1836 = vmatpush1.bf16.msra.mxu0 0
  %1837 = vmatprep.mubr.bf16.mxu0 0
  %1838 = vmatmul.mubr.bf16.gmra.mrb[0].mxu0 %v1803
  %v1839 = vpop.f32.mrb[0].mxu0
  %v1840 = vadd.f32 %v1704, %v1839
  %v1841 = vpop.f32.mrb[0].mxu0
  %v1842 = vpop.f32.mrb[0].mxu0
  %v1843 = vpop.f32.mrb[0].mxu0
  %1844 = vdwg.mxu0
  %v1845 = vmul.f32 %v1840, 0.5
  %v1846 = vmul.f32 %v1840, 0.044715
  %v1847 = vmul.f32 %v1846, %v1840
  %v1848 = vmul.f32 %v1847, %v1840
  %v1849 = vadd.f32 %v1840, %v1848
  %v1850 = vmul.f32 %v1849, 0.7978846
  %v1851 = vtanh.pop %v1850
  %v1852 = vadd.f32 %v1851, 1.0
  %v1853 = vmul.f32 %v1845, %v1852
  %v1854 = vpack.c.bf16 %v1853, %v1853
  %v1855 = vld [vmem:[%s18] sm:$0xf]
  %v1856 = vld [vmem:[%s18 + $0x4] sm:$0xf]
  %v1857 = vld [vmem:[%s18 + $0x8] sm:$0xf]
  %v1858 = vld [vmem:[%s18 + $0xc] sm:$0xf]
  %v1859 = vld [vmem:[%s18 + $0x10] sm:$0xf]
  %v1860 = vld [vmem:[%s18 + $0x14] sm:$0xf]
  %v1861 = vld [vmem:[%s18 + $0x18] sm:$0xf]
  %v1862 = vld [vmem:[%s18 + $0x1c] sm:$0xf]
  %v1863 = vld [vmem:[%s19] sm:$0x1]
  %v1865 = vlaneseq
  %v1866 = vshrl.u32 %v1865, 7
  %v1867 = vsub.s32 0, %v1866
  %v1868 = vrot.slane %v1863, %v1867
  %v1878 = vunpack.c.l.b16 %v1855
  %v1879 = vunpack.c.l.b16 %v1856
  %v1880 = vunpack.c.l.b16 %v1857
  %v1881 = vunpack.c.l.b16 %v1858
  %v1882 = vunpack.c.l.b16 %v1859
  %v1883 = vunpack.c.l.b16 %v1860
  %v1884 = vunpack.c.l.b16 %v1861
  %v1885 = vunpack.c.l.b16 %v1862
  %v1886 = vpack.c.b16 %v1879, %v1878
  %v1887 = vpack.c.b16 %v1881, %v1880
  %v1888 = vpack.c.b16 %v1883, %v1882
  %v1889 = vpack.c.b16 %v1885, %v1884
  %v1895 = vsel %vm308, %v1854, 0
  %1897 = vmatprep.subr.bf16.mxu0 0
  %1898 = vmatpush1.bf16.msra.mxu0 %v1886
  %1899 = vmatprep.subr.bf16.mxu0 0
  %1900 = vmatpush1.bf16.msra.mxu0 %v1887
  %1901 = vmatprep.subr.bf16.mxu0 0
  %1902 = vmatpush1.bf16.msra.mxu0 %v1888
  %1903 = vmatprep.subr.bf16.mxu0 0
  %1904 = vmatpush1.bf16.msra.mxu0 %v1889
  %1905 = vmatprep.subr.bf16.mxu0 0
  %1906 = vmatpush1.bf16.msra.mxu0 0
  %1907 = vmatprep.subr.bf16.mxu0 0
  %1908 = vmatpush1.bf16.msra.mxu0 0
  %1909 = vmatprep.subr.bf16.mxu0 0
  %1910 = vmatpush1.bf16.msra.mxu0 0
  %1911 = vmatprep.subr.bf16.mxu0 0
  %1912 = vmatpush1.bf16.msra.mxu0 0
  %1913 = vmatprep.subr.bf16.mxu0 0
  %1914 = vmatpush1.bf16.msra.mxu0 0
  %1915 = vmatprep.subr.bf16.mxu0 0
  %1916 = vmatpush1.bf16.msra.mxu0 0
  %1917 = vmatprep.subr.bf16.mxu0 0
  %1918 = vmatpush1.bf16.msra.mxu0 0
  %1919 = vmatprep.subr.bf16.mxu0 0
  %1920 = vmatpush1.bf16.msra.mxu0 0
  %1921 = vmatprep.subr.bf16.mxu0 0
  %1922 = vmatpush1.bf16.msra.mxu0 0
  %1923 = vmatprep.subr.bf16.mxu0 0
  %1924 = vmatpush1.bf16.msra.mxu0 0
  %1925 = vmatprep.subr.bf16.mxu0 0
  %1926 = vmatpush1.bf16.msra.mxu0 0
  %1927 = vmatprep.subr.bf16.mxu0 0
  %1928 = vmatpush1.bf16.msra.mxu0 0
  %1929 = vmatprep.mubr.bf16.mxu0 0
  %1930 = vmatmul.mubr.bf16.gmra.mrb[0].mxu0 %v1895
  %v1931 = vpop.f32.mrb[0].mxu0
  %v1932 = vadd.f32 %v1868, %v1931
  %v1933 = vpop.f32.mrb[0].mxu0
  %v1934 = vpop.f32.mrb[0].mxu0
  %v1935 = vpop.f32.mrb[0].mxu0
  %1936 = vdwg.mxu0
  %v1937 = vmul.f32 %v1932, 0.5
  %v1938 = vmul.f32 %v1932, 0.044715
  %v1939 = vmul.f32 %v1938, %v1932
  %v1940 = vmul.f32 %v1939, %v1932
  %v1941 = vadd.f32 %v1932, %v1940
  %v1942 = vmul.f32 %v1941, 0.7978846
  %v1943 = vtanh.pop %v1942
  %v1944 = vadd.f32 %v1943, 1.0
  %v1945 = vmul.f32 %v1937, %v1944
  %v1946 = vpack.c.bf16 %v1945, %v1945
  %v1947 = vld [vmem:[%s20] sm:$0xf]
  %v1948 = vld [vmem:[%s20 + $0x4] sm:$0xf]
  %v1949 = vld [vmem:[%s20 + $0x8] sm:$0xf]
  %v1950 = vld [vmem:[%s20 + $0xc] sm:$0xf]
  %v1951 = vld [vmem:[%s20 + $0x10] sm:$0xf]
  %v1952 = vld [vmem:[%s20 + $0x14] sm:$0xf]
  %v1953 = vld [vmem:[%s20 + $0x18] sm:$0xf]
  %v1954 = vld [vmem:[%s20 + $0x1c] sm:$0xf]
  %v1955 = vld [vmem:[%s21] sm:$0x1]
  %v1957 = vlaneseq
  %v1958 = vshrl.u32 %v1957, 7
  %v1959 = vsub.s32 0, %v1958
  %v1960 = vrot.slane %v1955, %v1959
  %v1970 = vunpack.c.l.b16 %v1947
  %v1971 = vunpack.c.l.b16 %v1948
  %v1972 = vunpack.c.l.b16 %v1949
  %v1973 = vunpack.c.l.b16 %v1950
  %v1974 = vunpack.c.l.b16 %v1951
  %v1975 = vunpack.c.l.b16 %v1952
  %v1976 = vunpack.c.l.b16 %v1953
  %v1977 = vunpack.c.l.b16 %v1954
  %v1978 = vpack.c.b16 %v1971, %v1970
  %v1979 = vpack.c.b16 %v1973, %v1972
  %v1980 = vpack.c.b16 %v1975, %v1974
  %v1981 = vpack.c.b16 %v1977, %v1976
  %v1987 = vsel %vm308, %v1946, 0
  %1989 = vmatprep.subr.bf16.mxu0 0
  %1990 = vmatpush1.bf16.msra.mxu0 %v1978
  %1991 = vmatprep.subr.bf16.mxu0 0
  %1992 = vmatpush1.bf16.msra.mxu0 %v1979
  %1993 = vmatprep.subr.bf16.mxu0 0
  %1994 = vmatpush1.bf16.msra.mxu0 %v1980
  %1995 = vmatprep.subr.bf16.mxu0 0
  %1996 = vmatpush1.bf16.msra.mxu0 %v1981
  %1997 = vmatprep.subr.bf16.mxu0 0
  %1998 = vmatpush1.bf16.msra.mxu0 0
  %1999 = vmatprep.subr.bf16.mxu0 0
  %2000 = vmatpush1.bf16.msra.mxu0 0
  %2001 = vmatprep.subr.bf16.mxu0 0
  %2002 = vmatpush1.bf16.msra.mxu0 0
  %2003 = vmatprep.subr.bf16.mxu0 0
  %2004 = vmatpush1.bf16.msra.mxu0 0
  %2005 = vmatprep.subr.bf16.mxu0 0
  %2006 = vmatpush1.bf16.msra.mxu0 0
  %2007 = vmatprep.subr.bf16.mxu0 0
  %2008 = vmatpush1.bf16.msra.mxu0 0
  %2009 = vmatprep.subr.bf16.mxu0 0
  %2010 = vmatpush1.bf16.msra.mxu0 0
  %2011 = vmatprep.subr.bf16.mxu0 0
  %2012 = vmatpush1.bf16.msra.mxu0 0
  %2013 = vmatprep.subr.bf16.mxu0 0
  %2014 = vmatpush1.bf16.msra.mxu0 0
  %2015 = vmatprep.subr.bf16.mxu0 0
  %2016 = vmatpush1.bf16.msra.mxu0 0
  %2017 = vmatprep.subr.bf16.mxu0 0
  %2018 = vmatpush1.bf16.msra.mxu0 0
  %2019 = vmatprep.subr.bf16.mxu0 0
  %2020 = vmatpush1.bf16.msra.mxu0 0
  %2021 = vmatprep.mubr.bf16.mxu0 0
  %2022 = vmatmul.mubr.bf16.gmra.mrb[0].mxu0 %v1987
  %v2023 = vpop.f32.mrb[0].mxu0
  %v2024 = vadd.f32 %v1960, %v2023
  %v2025 = vpop.f32.mrb[0].mxu0
  %v2026 = vpop.f32.mrb[0].mxu0
  %v2027 = vpop.f32.mrb[0].mxu0
  %2028 = vdwg.mxu0
  %v2029 = vtanh.pop %v2024
  %v2030 = vmul.f32 %v2029, 4.0
  %v2031 = vadd.f32 %v2030, 0.0
  %2033 = vset.pattern.permute.xlu0 0
  %2034 = vperm.xlu0 %2033, %v1703
  %v2035 = vpop.permute.xlu0 %2034
  %v2037 = vmul.f32 %v2035, %v2024
  %v2038 = vadd.f32 %v1649, %v2037
  %s2039 = scalar_lea.vmem %s3, 24
  %v2040 = vld [vmem:[%s2039] sm:$0xff]
  %v2041 = vmul.f32 %v2031, 0.5
  %v2042 = vmul.f32 %v2041, 1.442695
  %v2043 = vpow.pop %v2042
  %2045 = vset.pattern.permute.xlu0 0
  %2046 = vperm.xlu0 %2045, %v2040
  %v2047 = vpop.permute.xlu0 %2046
  %v2049 = vmul.f32 %v2047, %v2043
  %2051 = vrot.lane.b32.xlu0 %v1701, 4
  %v2052 = vpop.permute.xlu0 %2051
  %v2054 = vmul.f32 %v2049, %v2052
  %2056 = vrot.lane.b32.xlu0 %v2054, 124
  %v2057 = vpop.permute.xlu0 %2056
  %v2059 = vadd.f32 %v2038, %v2057
  %s2060 = scalar_lea.vmem %s4, 24
  %v2061 = vld [vmem:[%s2060] sm:$0xff]
  %v2062 = vmul.f32 %v1701, %v1701
  %2064 = vrot.lane.b32.xlu0 %v2031, 124
  %v2065 = vpop.permute.xlu0 %2064
  %v2067 = vadd.f32 %v2062, %v2065
  %v2068 = vsel %vm512, %v2067, 0.0
  %2069 = vadd.xlane.f32.xlu0 %v2068
  %v2070 = vpop.xlane.xlu0 %2069
  %v2071 = vmul.f32 %v2070, 0.5
  %v2072 = vsub.f32 %v2061, %v2071
  %s2073 = scalar_lea.vmem %s5, 24
  %v2074 = vld [vmem:[%s2073] sm:$0xff]
  %2076 = vset.pattern.permute.xlu0 0
  %2077 = vperm.xlu0 %2076, %v2074
  %v2078 = vpop.permute.xlu0 %2077
  %v2080 = vmul.f32 %v2059, %v2078
  %v2081 = vsub.f32 %v1649, %v2080
  %s2082 = scalar_lea.vmem %s6, 24
  %v2083 = vld [vmem:[%s2082] sm:$0xff]
  %2085 = vset.pattern.permute.xlu0 0
  %2086 = vperm.xlu0 %2085, %v2083
  %v2087 = vpop.permute.xlu0 %2086
  %v2089 = vmul.f32 %v2081, %v2087
  %s2090 = scalar_lea.vmem %s7, 24
  %v2091 = vld [vmem:[%s2090] sm:$0xff]
  %v2092 = vmul.f32 %v2089, %v2089
  %v2093 = vsel %vm512, %v2092, 0.0
  %2094 = vadd.xlane.f32.xlu0 %v2093
  %v2095 = vpop.xlane.xlu0 %2094
  %v2096 = vmul.f32 %v2095, 0.5
  %v2097 = vsub.f32 %v2091, %v2096
  %2099 = vrot.lane.b32.xlu0 %v2072, 4
  %v2100 = vpop.permute.xlu0 %2099
  %2103 = vrot.lane.b32.xlu0 %v2097, 5
  %v2104 = vpop.permute.xlu0 %2103
  %v2106 = vsel %vm512, %v2059, %v2100
  %v2107 = vsel %vm876, %v2106, %v2104
  %s2108 = scalar_lea.vmem %s22, 24
  %2109 = vst.msk [vmem:[%s2108] sm:$0xff] %vm878, %v2107
  %s2110 = scalar_lea.vmem %s1, 32
  %v2111 = vld [vmem:[%s2110] sm:$0xff]
  %s2112 = scalar_lea.vmem %s2, 32
  %v2113 = vld [vmem:[%s2112] sm:$0xff]
  %v2114 = vld [vmem:[#allocation2 + $0x20] sm:$0xff]
  %v2115 = vpack.c.bf16 %v2059, %v2059
  %v2116 = vld [vmem:[%s15] sm:$0x3]
  %v2117 = vld [vmem:[%s16] sm:$0x1]
  %v2119 = vlaneseq
  %v2120 = vshrl.u32 %v2119, 7
  %v2121 = vsub.s32 0, %v2120
  %v2122 = vrot.slane %v2117, %v2121
  %v2125 = vsel %vm512, %v2115, 0
  %v2128 = vsel %vm516, %v2116, 0
  %2130 = vmatprep.subr.bf16.mxu0 0
  %2131 = vmatpush1.bf16.msra.mxu0 %v2128
  %2132 = vmatprep.subr.bf16.mxu0 0
  %2133 = vmatpush1.bf16.msra.mxu0 0
  %2134 = vmatprep.subr.bf16.mxu0 0
  %2135 = vmatpush1.bf16.msra.mxu0 0
  %2136 = vmatprep.subr.bf16.mxu0 0
  %2137 = vmatpush1.bf16.msra.mxu0 0
  %2138 = vmatprep.subr.bf16.mxu0 0
  %2139 = vmatpush1.bf16.msra.mxu0 0
  %2140 = vmatprep.subr.bf16.mxu0 0
  %2141 = vmatpush1.bf16.msra.mxu0 0
  %2142 = vmatprep.subr.bf16.mxu0 0
  %2143 = vmatpush1.bf16.msra.mxu0 0
  %2144 = vmatprep.subr.bf16.mxu0 0
  %2145 = vmatpush1.bf16.msra.mxu0 0
  %2146 = vmatprep.subr.bf16.mxu0 0
  %2147 = vmatpush1.bf16.msra.mxu0 0
  %2148 = vmatprep.subr.bf16.mxu0 0
  %2149 = vmatpush1.bf16.msra.mxu0 0
  %2150 = vmatprep.subr.bf16.mxu0 0
  %2151 = vmatpush1.bf16.msra.mxu0 0
  %2152 = vmatprep.subr.bf16.mxu0 0
  %2153 = vmatpush1.bf16.msra.mxu0 0
  %2154 = vmatprep.subr.bf16.mxu0 0
  %2155 = vmatpush1.bf16.msra.mxu0 0
  %2156 = vmatprep.subr.bf16.mxu0 0
  %2157 = vmatpush1.bf16.msra.mxu0 0
  %2158 = vmatprep.subr.bf16.mxu0 0
  %2159 = vmatpush1.bf16.msra.mxu0 0
  %2160 = vmatprep.subr.bf16.mxu0 0
  %2161 = vmatpush1.bf16.msra.mxu0 0
  %2162 = vmatprep.mubr.bf16.mxu0 0
  %2163 = vmatmul.mubr.bf16.gmra.mrb[0].mxu0 %v2125
  %v2164 = vpop.f32.mrb[0].mxu0
  %v2165 = vadd.f32 %v2122, %v2164
  %v2166 = vpop.f32.mrb[0].mxu0
  %v2167 = vpop.f32.mrb[0].mxu0
  %v2168 = vpop.f32.mrb[0].mxu0
  %2169 = vdwg.mxu0
  %v2170 = vmul.f32 %v2165, 0.5
  %v2171 = vmul.f32 %v2165, 0.044715
  %v2172 = vmul.f32 %v2171, %v2165
  %v2173 = vmul.f32 %v2172, %v2165
  %v2174 = vadd.f32 %v2165, %v2173
  %v2175 = vmul.f32 %v2174, 0.7978846
  %v2176 = vtanh.pop %v2175
  %v2177 = vadd.f32 %v2176, 1.0
  %v2178 = vmul.f32 %v2170, %v2177
  %v2179 = vpack.c.bf16 %v2178, %v2178
  %v2180 = vld [vmem:[%s17] sm:$0xf]
  %v2181 = vld [vmem:[%s17 + $0x4] sm:$0xf]
  %v2182 = vld [vmem:[%s17 + $0x8] sm:$0xf]
  %v2183 = vld [vmem:[%s17 + $0xc] sm:$0xf]
  %v2184 = vld [vmem:[%s17 + $0x10] sm:$0xf]
  %v2185 = vld [vmem:[%s17 + $0x14] sm:$0xf]
  %v2186 = vld [vmem:[%s17 + $0x18] sm:$0xf]
  %v2187 = vld [vmem:[%s17 + $0x1c] sm:$0xf]
  %v2196 = vunpack.c.l.b16 %v2180
  %v2197 = vunpack.c.l.b16 %v2181
  %v2198 = vunpack.c.l.b16 %v2182
  %v2199 = vunpack.c.l.b16 %v2183
  %v2200 = vunpack.c.l.b16 %v2184
  %v2201 = vunpack.c.l.b16 %v2185
  %v2202 = vunpack.c.l.b16 %v2186
  %v2203 = vunpack.c.l.b16 %v2187
  %v2204 = vpack.c.b16 %v2197, %v2196
  %v2205 = vpack.c.b16 %v2199, %v2198
  %v2206 = vpack.c.b16 %v2201, %v2200
  %v2207 = vpack.c.b16 %v2203, %v2202
  %v2213 = vsel %vm308, %v2179, 0
  %2215 = vmatprep.subr.bf16.mxu0 0
  %2216 = vmatpush1.bf16.msra.mxu0 %v2204
  %2217 = vmatprep.subr.bf16.mxu0 0
  %2218 = vmatpush1.bf16.msra.mxu0 %v2205
  %2219 = vmatprep.subr.bf16.mxu0 0
  %2220 = vmatpush1.bf16.msra.mxu0 %v2206
  %2221 = vmatprep.subr.bf16.mxu0 0
  %2222 = vmatpush1.bf16.msra.mxu0 %v2207
  %2223 = vmatprep.subr.bf16.mxu0 0
  %2224 = vmatpush1.bf16.msra.mxu0 0
  %2225 = vmatprep.subr.bf16.mxu0 0
  %2226 = vmatpush1.bf16.msra.mxu0 0
  %2227 = vmatprep.subr.bf16.mxu0 0
  %2228 = vmatpush1.bf16.msra.mxu0 0
  %2229 = vmatprep.subr.bf16.mxu0 0
  %2230 = vmatpush1.bf16.msra.mxu0 0
  %2231 = vmatprep.subr.bf16.mxu0 0
  %2232 = vmatpush1.bf16.msra.mxu0 0
  %2233 = vmatprep.subr.bf16.mxu0 0
  %2234 = vmatpush1.bf16.msra.mxu0 0
  %2235 = vmatprep.subr.bf16.mxu0 0
  %2236 = vmatpush1.bf16.msra.mxu0 0
  %2237 = vmatprep.subr.bf16.mxu0 0
  %2238 = vmatpush1.bf16.msra.mxu0 0
  %2239 = vmatprep.subr.bf16.mxu0 0
  %2240 = vmatpush1.bf16.msra.mxu0 0
  %2241 = vmatprep.subr.bf16.mxu0 0
  %2242 = vmatpush1.bf16.msra.mxu0 0
  %2243 = vmatprep.subr.bf16.mxu0 0
  %2244 = vmatpush1.bf16.msra.mxu0 0
  %2245 = vmatprep.subr.bf16.mxu0 0
  %2246 = vmatpush1.bf16.msra.mxu0 0
  %2247 = vmatprep.mubr.bf16.mxu0 0
  %2248 = vmatmul.mubr.bf16.gmra.mrb[0].mxu0 %v2213
  %v2249 = vpop.f32.mrb[0].mxu0
  %v2250 = vadd.f32 %v2114, %v2249
  %v2251 = vpop.f32.mrb[0].mxu0
  %v2252 = vpop.f32.mrb[0].mxu0
  %v2253 = vpop.f32.mrb[0].mxu0
  %2254 = vdwg.mxu0
  %v2255 = vmul.f32 %v2250, 0.5
  %v2256 = vmul.f32 %v2250, 0.044715
  %v2257 = vmul.f32 %v2256, %v2250
  %v2258 = vmul.f32 %v2257, %v2250
  %v2259 = vadd.f32 %v2250, %v2258
  %v2260 = vmul.f32 %v2259, 0.7978846
  %v2261 = vtanh.pop %v2260
  %v2262 = vadd.f32 %v2261, 1.0
  %v2263 = vmul.f32 %v2255, %v2262
  %v2264 = vpack.c.bf16 %v2263, %v2263
  %v2265 = vld [vmem:[%s18] sm:$0xf]
  %v2266 = vld [vmem:[%s18 + $0x4] sm:$0xf]
  %v2267 = vld [vmem:[%s18 + $0x8] sm:$0xf]
  %v2268 = vld [vmem:[%s18 + $0xc] sm:$0xf]
  %v2269 = vld [vmem:[%s18 + $0x10] sm:$0xf]
  %v2270 = vld [vmem:[%s18 + $0x14] sm:$0xf]
  %v2271 = vld [vmem:[%s18 + $0x18] sm:$0xf]
  %v2272 = vld [vmem:[%s18 + $0x1c] sm:$0xf]
  %v2273 = vld [vmem:[%s19] sm:$0x1]
  %v2275 = vlaneseq
  %v2276 = vshrl.u32 %v2275, 7
  %v2277 = vsub.s32 0, %v2276
  %v2278 = vrot.slane %v2273, %v2277
  %v2288 = vunpack.c.l.b16 %v2265
  %v2289 = vunpack.c.l.b16 %v2266
  %v2290 = vunpack.c.l.b16 %v2267
  %v2291 = vunpack.c.l.b16 %v2268
  %v2292 = vunpack.c.l.b16 %v2269
  %v2293 = vunpack.c.l.b16 %v2270
  %v2294 = vunpack.c.l.b16 %v2271
  %v2295 = vunpack.c.l.b16 %v2272
  %v2296 = vpack.c.b16 %v2289, %v2288
  %v2297 = vpack.c.b16 %v2291, %v2290
  %v2298 = vpack.c.b16 %v2293, %v2292
  %v2299 = vpack.c.b16 %v2295, %v2294
  %v2305 = vsel %vm308, %v2264, 0
  %2307 = vmatprep.subr.bf16.mxu0 0
  %2308 = vmatpush1.bf16.msra.mxu0 %v2296
  %2309 = vmatprep.subr.bf16.mxu0 0
  %2310 = vmatpush1.bf16.msra.mxu0 %v2297
  %2311 = vmatprep.subr.bf16.mxu0 0
  %2312 = vmatpush1.bf16.msra.mxu0 %v2298
  %2313 = vmatprep.subr.bf16.mxu0 0
  %2314 = vmatpush1.bf16.msra.mxu0 %v2299
  %2315 = vmatprep.subr.bf16.mxu0 0
  %2316 = vmatpush1.bf16.msra.mxu0 0
  %2317 = vmatprep.subr.bf16.mxu0 0
  %2318 = vmatpush1.bf16.msra.mxu0 0
  %2319 = vmatprep.subr.bf16.mxu0 0
  %2320 = vmatpush1.bf16.msra.mxu0 0
  %2321 = vmatprep.subr.bf16.mxu0 0
  %2322 = vmatpush1.bf16.msra.mxu0 0
  %2323 = vmatprep.subr.bf16.mxu0 0
  %2324 = vmatpush1.bf16.msra.mxu0 0
  %2325 = vmatprep.subr.bf16.mxu0 0
  %2326 = vmatpush1.bf16.msra.mxu0 0
  %2327 = vmatprep.subr.bf16.mxu0 0
  %2328 = vmatpush1.bf16.msra.mxu0 0
  %2329 = vmatprep.subr.bf16.mxu0 0
  %2330 = vmatpush1.bf16.msra.mxu0 0
  %2331 = vmatprep.subr.bf16.mxu0 0
  %2332 = vmatpush1.bf16.msra.mxu0 0
  %2333 = vmatprep.subr.bf16.mxu0 0
  %2334 = vmatpush1.bf16.msra.mxu0 0
  %2335 = vmatprep.subr.bf16.mxu0 0
  %2336 = vmatpush1.bf16.msra.mxu0 0
  %2337 = vmatprep.subr.bf16.mxu0 0
  %2338 = vmatpush1.bf16.msra.mxu0 0
  %2339 = vmatprep.mubr.bf16.mxu0 0
  %2340 = vmatmul.mubr.bf16.gmra.mrb[0].mxu0 %v2305
  %v2341 = vpop.f32.mrb[0].mxu0
  %v2342 = vadd.f32 %v2278, %v2341
  %v2343 = vpop.f32.mrb[0].mxu0
  %v2344 = vpop.f32.mrb[0].mxu0
  %v2345 = vpop.f32.mrb[0].mxu0
  %2346 = vdwg.mxu0
  %v2347 = vmul.f32 %v2342, 0.5
  %v2348 = vmul.f32 %v2342, 0.044715
  %v2349 = vmul.f32 %v2348, %v2342
  %v2350 = vmul.f32 %v2349, %v2342
  %v2351 = vadd.f32 %v2342, %v2350
  %v2352 = vmul.f32 %v2351, 0.7978846
  %v2353 = vtanh.pop %v2352
  %v2354 = vadd.f32 %v2353, 1.0
  %v2355 = vmul.f32 %v2347, %v2354
  %v2356 = vpack.c.bf16 %v2355, %v2355
  %v2357 = vld [vmem:[%s20] sm:$0xf]
  %v2358 = vld [vmem:[%s20 + $0x4] sm:$0xf]
  %v2359 = vld [vmem:[%s20 + $0x8] sm:$0xf]
  %v2360 = vld [vmem:[%s20 + $0xc] sm:$0xf]
  %v2361 = vld [vmem:[%s20 + $0x10] sm:$0xf]
  %v2362 = vld [vmem:[%s20 + $0x14] sm:$0xf]
  %v2363 = vld [vmem:[%s20 + $0x18] sm:$0xf]
  %v2364 = vld [vmem:[%s20 + $0x1c] sm:$0xf]
  %v2365 = vld [vmem:[%s21] sm:$0x1]
  %v2367 = vlaneseq
  %v2368 = vshrl.u32 %v2367, 7
  %v2369 = vsub.s32 0, %v2368
  %v2370 = vrot.slane %v2365, %v2369
  %v2380 = vunpack.c.l.b16 %v2357
  %v2381 = vunpack.c.l.b16 %v2358
  %v2382 = vunpack.c.l.b16 %v2359
  %v2383 = vunpack.c.l.b16 %v2360
  %v2384 = vunpack.c.l.b16 %v2361
  %v2385 = vunpack.c.l.b16 %v2362
  %v2386 = vunpack.c.l.b16 %v2363
  %v2387 = vunpack.c.l.b16 %v2364
  %v2388 = vpack.c.b16 %v2381, %v2380
  %v2389 = vpack.c.b16 %v2383, %v2382
  %v2390 = vpack.c.b16 %v2385, %v2384
  %v2391 = vpack.c.b16 %v2387, %v2386
  %v2397 = vsel %vm308, %v2356, 0
  %2399 = vmatprep.subr.bf16.mxu0 0
  %2400 = vmatpush1.bf16.msra.mxu0 %v2388
  %2401 = vmatprep.subr.bf16.mxu0 0
  %2402 = vmatpush1.bf16.msra.mxu0 %v2389
  %2403 = vmatprep.subr.bf16.mxu0 0
  %2404 = vmatpush1.bf16.msra.mxu0 %v2390
  %2405 = vmatprep.subr.bf16.mxu0 0
  %2406 = vmatpush1.bf16.msra.mxu0 %v2391
  %2407 = vmatprep.subr.bf16.mxu0 0
  %2408 = vmatpush1.bf16.msra.mxu0 0
  %2409 = vmatprep.subr.bf16.mxu0 0
  %2410 = vmatpush1.bf16.msra.mxu0 0
  %2411 = vmatprep.subr.bf16.mxu0 0
  %2412 = vmatpush1.bf16.msra.mxu0 0
  %2413 = vmatprep.subr.bf16.mxu0 0
  %2414 = vmatpush1.bf16.msra.mxu0 0
  %2415 = vmatprep.subr.bf16.mxu0 0
  %2416 = vmatpush1.bf16.msra.mxu0 0
  %2417 = vmatprep.subr.bf16.mxu0 0
  %2418 = vmatpush1.bf16.msra.mxu0 0
  %2419 = vmatprep.subr.bf16.mxu0 0
  %2420 = vmatpush1.bf16.msra.mxu0 0
  %2421 = vmatprep.subr.bf16.mxu0 0
  %2422 = vmatpush1.bf16.msra.mxu0 0
  %2423 = vmatprep.subr.bf16.mxu0 0
  %2424 = vmatpush1.bf16.msra.mxu0 0
  %2425 = vmatprep.subr.bf16.mxu0 0
  %2426 = vmatpush1.bf16.msra.mxu0 0
  %2427 = vmatprep.subr.bf16.mxu0 0
  %2428 = vmatpush1.bf16.msra.mxu0 0
  %2429 = vmatprep.subr.bf16.mxu0 0
  %2430 = vmatpush1.bf16.msra.mxu0 0
  %2431 = vmatprep.mubr.bf16.mxu0 0
  %2432 = vmatmul.mubr.bf16.gmra.mrb[0].mxu0 %v2397
  %v2433 = vpop.f32.mrb[0].mxu0
  %v2434 = vadd.f32 %v2370, %v2433
  %v2435 = vpop.f32.mrb[0].mxu0
  %v2436 = vpop.f32.mrb[0].mxu0
  %v2437 = vpop.f32.mrb[0].mxu0
  %2438 = vdwg.mxu0
  %v2439 = vtanh.pop %v2434
  %v2440 = vmul.f32 %v2439, 4.0
  %v2441 = vadd.f32 %v2440, 0.0
  %2443 = vset.pattern.permute.xlu0 0
  %2444 = vperm.xlu0 %2443, %v2113
  %v2445 = vpop.permute.xlu0 %2444
  %v2447 = vmul.f32 %v2445, %v2434
  %v2448 = vadd.f32 %v2059, %v2447
  %s2449 = scalar_lea.vmem %s3, 32
  %v2450 = vld [vmem:[%s2449] sm:$0xff]
  %v2451 = vmul.f32 %v2441, 0.5
  %v2452 = vmul.f32 %v2451, 1.442695
  %v2453 = vpow.pop %v2452
  %2455 = vset.pattern.permute.xlu0 0
  %2456 = vperm.xlu0 %2455, %v2450
  %v2457 = vpop.permute.xlu0 %2456
  %v2459 = vmul.f32 %v2457, %v2453
  %2461 = vrot.lane.b32.xlu0 %v2111, 4
  %v2462 = vpop.permute.xlu0 %2461
  %v2464 = vmul.f32 %v2459, %v2462
  %2466 = vrot.lane.b32.xlu0 %v2464, 124
  %v2467 = vpop.permute.xlu0 %2466
  %v2469 = vadd.f32 %v2448, %v2467
  %s2470 = scalar_lea.vmem %s4, 32
  %v2471 = vld [vmem:[%s2470] sm:$0xff]
  %v2472 = vmul.f32 %v2111, %v2111
  %2474 = vrot.lane.b32.xlu0 %v2441, 124
  %v2475 = vpop.permute.xlu0 %2474
  %v2477 = vadd.f32 %v2472, %v2475
  %v2478 = vsel %vm512, %v2477, 0.0
  %2479 = vadd.xlane.f32.xlu0 %v2478
  %v2480 = vpop.xlane.xlu0 %2479
  %v2481 = vmul.f32 %v2480, 0.5
  %v2482 = vsub.f32 %v2471, %v2481
  %s2483 = scalar_lea.vmem %s5, 32
  %v2484 = vld [vmem:[%s2483] sm:$0xff]
  %2486 = vset.pattern.permute.xlu0 0
  %2487 = vperm.xlu0 %2486, %v2484
  %v2488 = vpop.permute.xlu0 %2487
  %v2490 = vmul.f32 %v2469, %v2488
  %v2491 = vsub.f32 %v2059, %v2490
  %s2492 = scalar_lea.vmem %s6, 32
  %v2493 = vld [vmem:[%s2492] sm:$0xff]
  %2495 = vset.pattern.permute.xlu0 0
  %2496 = vperm.xlu0 %2495, %v2493
  %v2497 = vpop.permute.xlu0 %2496
  %v2499 = vmul.f32 %v2491, %v2497
  %s2500 = scalar_lea.vmem %s7, 32
  %v2501 = vld [vmem:[%s2500] sm:$0xff]
  %v2502 = vmul.f32 %v2499, %v2499
  %v2503 = vsel %vm512, %v2502, 0.0
  %2504 = vadd.xlane.f32.xlu0 %v2503
  %v2505 = vpop.xlane.xlu0 %2504
  %v2506 = vmul.f32 %v2505, 0.5
  %v2507 = vsub.f32 %v2501, %v2506
  %2509 = vrot.lane.b32.xlu0 %v2482, 4
  %v2510 = vpop.permute.xlu0 %2509
  %2513 = vrot.lane.b32.xlu0 %v2507, 5
  %v2514 = vpop.permute.xlu0 %2513
  %v2516 = vsel %vm512, %v2469, %v2510
  %v2517 = vsel %vm876, %v2516, %v2514
  %s2518 = scalar_lea.vmem %s22, 32
  %2519 = vst.msk [vmem:[%s2518] sm:$0xff] %vm878, %v2517
  %s2520 = scalar_lea.vmem %s1, 40
  %v2521 = vld [vmem:[%s2520] sm:$0xff]
  %s2522 = scalar_lea.vmem %s2, 40
  %v2523 = vld [vmem:[%s2522] sm:$0xff]
  %v2524 = vld [vmem:[#allocation2 + $0x28] sm:$0xff]
  %v2525 = vpack.c.bf16 %v2469, %v2469
  %v2526 = vld [vmem:[%s15] sm:$0x3]
  %v2527 = vld [vmem:[%s16] sm:$0x1]
  %v2529 = vlaneseq
  %v2530 = vshrl.u32 %v2529, 7
  %v2531 = vsub.s32 0, %v2530
  %v2532 = vrot.slane %v2527, %v2531
  %v2535 = vsel %vm512, %v2525, 0
  %v2538 = vsel %vm516, %v2526, 0
  %2540 = vmatprep.subr.bf16.mxu0 0
  %2541 = vmatpush1.bf16.msra.mxu0 %v2538
  %2542 = vmatprep.subr.bf16.mxu0 0
  %2543 = vmatpush1.bf16.msra.mxu0 0
  %2544 = vmatprep.subr.bf16.mxu0 0
  %2545 = vmatpush1.bf16.msra.mxu0 0
  %2546 = vmatprep.subr.bf16.mxu0 0
  %2547 = vmatpush1.bf16.msra.mxu0 0
  %2548 = vmatprep.subr.bf16.mxu0 0
  %2549 = vmatpush1.bf16.msra.mxu0 0
  %2550 = vmatprep.subr.bf16.mxu0 0
  %2551 = vmatpush1.bf16.msra.mxu0 0
  %2552 = vmatprep.subr.bf16.mxu0 0
  %2553 = vmatpush1.bf16.msra.mxu0 0
  %2554 = vmatprep.subr.bf16.mxu0 0
  %2555 = vmatpush1.bf16.msra.mxu0 0
  %2556 = vmatprep.subr.bf16.mxu0 0
  %2557 = vmatpush1.bf16.msra.mxu0 0
  %2558 = vmatprep.subr.bf16.mxu0 0
  %2559 = vmatpush1.bf16.msra.mxu0 0
  %2560 = vmatprep.subr.bf16.mxu0 0
  %2561 = vmatpush1.bf16.msra.mxu0 0
  %2562 = vmatprep.subr.bf16.mxu0 0
  %2563 = vmatpush1.bf16.msra.mxu0 0
  %2564 = vmatprep.subr.bf16.mxu0 0
  %2565 = vmatpush1.bf16.msra.mxu0 0
  %2566 = vmatprep.subr.bf16.mxu0 0
  %2567 = vmatpush1.bf16.msra.mxu0 0
  %2568 = vmatprep.subr.bf16.mxu0 0
  %2569 = vmatpush1.bf16.msra.mxu0 0
  %2570 = vmatprep.subr.bf16.mxu0 0
  %2571 = vmatpush1.bf16.msra.mxu0 0
  %2572 = vmatprep.mubr.bf16.mxu0 0
  %2573 = vmatmul.mubr.bf16.gmra.mrb[0].mxu0 %v2535
  %v2574 = vpop.f32.mrb[0].mxu0
  %v2575 = vadd.f32 %v2532, %v2574
  %v2576 = vpop.f32.mrb[0].mxu0
  %v2577 = vpop.f32.mrb[0].mxu0
  %v2578 = vpop.f32.mrb[0].mxu0
  %2579 = vdwg.mxu0
  %v2580 = vmul.f32 %v2575, 0.5
  %v2581 = vmul.f32 %v2575, 0.044715
  %v2582 = vmul.f32 %v2581, %v2575
  %v2583 = vmul.f32 %v2582, %v2575
  %v2584 = vadd.f32 %v2575, %v2583
  %v2585 = vmul.f32 %v2584, 0.7978846
  %v2586 = vtanh.pop %v2585
  %v2587 = vadd.f32 %v2586, 1.0
  %v2588 = vmul.f32 %v2580, %v2587
  %v2589 = vpack.c.bf16 %v2588, %v2588
  %v2590 = vld [vmem:[%s17] sm:$0xf]
  %v2591 = vld [vmem:[%s17 + $0x4] sm:$0xf]
  %v2592 = vld [vmem:[%s17 + $0x8] sm:$0xf]
  %v2593 = vld [vmem:[%s17 + $0xc] sm:$0xf]
  %v2594 = vld [vmem:[%s17 + $0x10] sm:$0xf]
  %v2595 = vld [vmem:[%s17 + $0x14] sm:$0xf]
  %v2596 = vld [vmem:[%s17 + $0x18] sm:$0xf]
  %v2597 = vld [vmem:[%s17 + $0x1c] sm:$0xf]
  %v2606 = vunpack.c.l.b16 %v2590
  %v2607 = vunpack.c.l.b16 %v2591
  %v2608 = vunpack.c.l.b16 %v2592
  %v2609 = vunpack.c.l.b16 %v2593
  %v2610 = vunpack.c.l.b16 %v2594
  %v2611 = vunpack.c.l.b16 %v2595
  %v2612 = vunpack.c.l.b16 %v2596
  %v2613 = vunpack.c.l.b16 %v2597
  %v2614 = vpack.c.b16 %v2607, %v2606
  %v2615 = vpack.c.b16 %v2609, %v2608
  %v2616 = vpack.c.b16 %v2611, %v2610
  %v2617 = vpack.c.b16 %v2613, %v2612
  %v2623 = vsel %vm308, %v2589, 0
  %2625 = vmatprep.subr.bf16.mxu0 0
  %2626 = vmatpush1.bf16.msra.mxu0 %v2614
  %2627 = vmatprep.subr.bf16.mxu0 0
  %2628 = vmatpush1.bf16.msra.mxu0 %v2615
  %2629 = vmatprep.subr.bf16.mxu0 0
  %2630 = vmatpush1.bf16.msra.mxu0 %v2616
  %2631 = vmatprep.subr.bf16.mxu0 0
  %2632 = vmatpush1.bf16.msra.mxu0 %v2617
  %2633 = vmatprep.subr.bf16.mxu0 0
  %2634 = vmatpush1.bf16.msra.mxu0 0
  %2635 = vmatprep.subr.bf16.mxu0 0
  %2636 = vmatpush1.bf16.msra.mxu0 0
  %2637 = vmatprep.subr.bf16.mxu0 0
  %2638 = vmatpush1.bf16.msra.mxu0 0
  %2639 = vmatprep.subr.bf16.mxu0 0
  %2640 = vmatpush1.bf16.msra.mxu0 0
  %2641 = vmatprep.subr.bf16.mxu0 0
  %2642 = vmatpush1.bf16.msra.mxu0 0
  %2643 = vmatprep.subr.bf16.mxu0 0
  %2644 = vmatpush1.bf16.msra.mxu0 0
  %2645 = vmatprep.subr.bf16.mxu0 0
  %2646 = vmatpush1.bf16.msra.mxu0 0
  %2647 = vmatprep.subr.bf16.mxu0 0
  %2648 = vmatpush1.bf16.msra.mxu0 0
  %2649 = vmatprep.subr.bf16.mxu0 0
  %2650 = vmatpush1.bf16.msra.mxu0 0
  %2651 = vmatprep.subr.bf16.mxu0 0
  %2652 = vmatpush1.bf16.msra.mxu0 0
  %2653 = vmatprep.subr.bf16.mxu0 0
  %2654 = vmatpush1.bf16.msra.mxu0 0
  %2655 = vmatprep.subr.bf16.mxu0 0
  %2656 = vmatpush1.bf16.msra.mxu0 0
  %2657 = vmatprep.mubr.bf16.mxu0 0
  %2658 = vmatmul.mubr.bf16.gmra.mrb[0].mxu0 %v2623
  %v2659 = vpop.f32.mrb[0].mxu0
  %v2660 = vadd.f32 %v2524, %v2659
  %v2661 = vpop.f32.mrb[0].mxu0
  %v2662 = vpop.f32.mrb[0].mxu0
  %v2663 = vpop.f32.mrb[0].mxu0
  %2664 = vdwg.mxu0
  %v2665 = vmul.f32 %v2660, 0.5
  %v2666 = vmul.f32 %v2660, 0.044715
  %v2667 = vmul.f32 %v2666, %v2660
  %v2668 = vmul.f32 %v2667, %v2660
  %v2669 = vadd.f32 %v2660, %v2668
  %v2670 = vmul.f32 %v2669, 0.7978846
  %v2671 = vtanh.pop %v2670
  %v2672 = vadd.f32 %v2671, 1.0
  %v2673 = vmul.f32 %v2665, %v2672
  %v2674 = vpack.c.bf16 %v2673, %v2673
  %v2675 = vld [vmem:[%s18] sm:$0xf]
  %v2676 = vld [vmem:[%s18 + $0x4] sm:$0xf]
  %v2677 = vld [vmem:[%s18 + $0x8] sm:$0xf]
  %v2678 = vld [vmem:[%s18 + $0xc] sm:$0xf]
  %v2679 = vld [vmem:[%s18 + $0x10] sm:$0xf]
  %v2680 = vld [vmem:[%s18 + $0x14] sm:$0xf]
  %v2681 = vld [vmem:[%s18 + $0x18] sm:$0xf]
  %v2682 = vld [vmem:[%s18 + $0x1c] sm:$0xf]
  %v2683 = vld [vmem:[%s19] sm:$0x1]
  %v2685 = vlaneseq
  %v2686 = vshrl.u32 %v2685, 7
  %v2687 = vsub.s32 0, %v2686
  %v2688 = vrot.slane %v2683, %v2687
  %v2698 = vunpack.c.l.b16 %v2675
  %v2699 = vunpack.c.l.b16 %v2676
  %v2700 = vunpack.c.l.b16 %v2677
  %v2701 = vunpack.c.l.b16 %v2678
  %v2702 = vunpack.c.l.b16 %v2679
  %v2703 = vunpack.c.l.b16 %v2680
  %v2704 = vunpack.c.l.b16 %v2681
  %v2705 = vunpack.c.l.b16 %v2682
  %v2706 = vpack.c.b16 %v2699, %v2698
  %v2707 = vpack.c.b16 %v2701, %v2700
  %v2708 = vpack.c.b16 %v2703, %v2702
  %v2709 = vpack.c.b16 %v2705, %v2704
  %v2715 = vsel %vm308, %v2674, 0
  %2717 = vmatprep.subr.bf16.mxu0 0
  %2718 = vmatpush1.bf16.msra.mxu0 %v2706
  %2719 = vmatprep.subr.bf16.mxu0 0
  %2720 = vmatpush1.bf16.msra.mxu0 %v2707
  %2721 = vmatprep.subr.bf16.mxu0 0
  %2722 = vmatpush1.bf16.msra.mxu0 %v2708
  %2723 = vmatprep.subr.bf16.mxu0 0
  %2724 = vmatpush1.bf16.msra.mxu0 %v2709
  %2725 = vmatprep.subr.bf16.mxu0 0
  %2726 = vmatpush1.bf16.msra.mxu0 0
  %2727 = vmatprep.subr.bf16.mxu0 0
  %2728 = vmatpush1.bf16.msra.mxu0 0
  %2729 = vmatprep.subr.bf16.mxu0 0
  %2730 = vmatpush1.bf16.msra.mxu0 0
  %2731 = vmatprep.subr.bf16.mxu0 0
  %2732 = vmatpush1.bf16.msra.mxu0 0
  %2733 = vmatprep.subr.bf16.mxu0 0
  %2734 = vmatpush1.bf16.msra.mxu0 0
  %2735 = vmatprep.subr.bf16.mxu0 0
  %2736 = vmatpush1.bf16.msra.mxu0 0
  %2737 = vmatprep.subr.bf16.mxu0 0
  %2738 = vmatpush1.bf16.msra.mxu0 0
  %2739 = vmatprep.subr.bf16.mxu0 0
  %2740 = vmatpush1.bf16.msra.mxu0 0
  %2741 = vmatprep.subr.bf16.mxu0 0
  %2742 = vmatpush1.bf16.msra.mxu0 0
  %2743 = vmatprep.subr.bf16.mxu0 0
  %2744 = vmatpush1.bf16.msra.mxu0 0
  %2745 = vmatprep.subr.bf16.mxu0 0
  %2746 = vmatpush1.bf16.msra.mxu0 0
  %2747 = vmatprep.subr.bf16.mxu0 0
  %2748 = vmatpush1.bf16.msra.mxu0 0
  %2749 = vmatprep.mubr.bf16.mxu0 0
  %2750 = vmatmul.mubr.bf16.gmra.mrb[0].mxu0 %v2715
  %v2751 = vpop.f32.mrb[0].mxu0
  %v2752 = vadd.f32 %v2688, %v2751
  %v2753 = vpop.f32.mrb[0].mxu0
  %v2754 = vpop.f32.mrb[0].mxu0
  %v2755 = vpop.f32.mrb[0].mxu0
  %2756 = vdwg.mxu0
  %v2757 = vmul.f32 %v2752, 0.5
  %v2758 = vmul.f32 %v2752, 0.044715
  %v2759 = vmul.f32 %v2758, %v2752
  %v2760 = vmul.f32 %v2759, %v2752
  %v2761 = vadd.f32 %v2752, %v2760
  %v2762 = vmul.f32 %v2761, 0.7978846
  %v2763 = vtanh.pop %v2762
  %v2764 = vadd.f32 %v2763, 1.0
  %v2765 = vmul.f32 %v2757, %v2764
  %v2766 = vpack.c.bf16 %v2765, %v2765
  %v2767 = vld [vmem:[%s20] sm:$0xf]
  %v2768 = vld [vmem:[%s20 + $0x4] sm:$0xf]
  %v2769 = vld [vmem:[%s20 + $0x8] sm:$0xf]
  %v2770 = vld [vmem:[%s20 + $0xc] sm:$0xf]
  %v2771 = vld [vmem:[%s20 + $0x10] sm:$0xf]
  %v2772 = vld [vmem:[%s20 + $0x14] sm:$0xf]
  %v2773 = vld [vmem:[%s20 + $0x18] sm:$0xf]
  %v2774 = vld [vmem:[%s20 + $0x1c] sm:$0xf]
  %v2775 = vld [vmem:[%s21] sm:$0x1]
  %v2777 = vlaneseq
  %v2778 = vshrl.u32 %v2777, 7
  %v2779 = vsub.s32 0, %v2778
  %v2780 = vrot.slane %v2775, %v2779
  %v2790 = vunpack.c.l.b16 %v2767
  %v2791 = vunpack.c.l.b16 %v2768
  %v2792 = vunpack.c.l.b16 %v2769
  %v2793 = vunpack.c.l.b16 %v2770
  %v2794 = vunpack.c.l.b16 %v2771
  %v2795 = vunpack.c.l.b16 %v2772
  %v2796 = vunpack.c.l.b16 %v2773
  %v2797 = vunpack.c.l.b16 %v2774
  %v2798 = vpack.c.b16 %v2791, %v2790
  %v2799 = vpack.c.b16 %v2793, %v2792
  %v2800 = vpack.c.b16 %v2795, %v2794
  %v2801 = vpack.c.b16 %v2797, %v2796
  %v2807 = vsel %vm308, %v2766, 0
  %2809 = vmatprep.subr.bf16.mxu0 0
  %2810 = vmatpush1.bf16.msra.mxu0 %v2798
  %2811 = vmatprep.subr.bf16.mxu0 0
  %2812 = vmatpush1.bf16.msra.mxu0 %v2799
  %2813 = vmatprep.subr.bf16.mxu0 0
  %2814 = vmatpush1.bf16.msra.mxu0 %v2800
  %2815 = vmatprep.subr.bf16.mxu0 0
  %2816 = vmatpush1.bf16.msra.mxu0 %v2801
  %2817 = vmatprep.subr.bf16.mxu0 0
  %2818 = vmatpush1.bf16.msra.mxu0 0
  %2819 = vmatprep.subr.bf16.mxu0 0
  %2820 = vmatpush1.bf16.msra.mxu0 0
  %2821 = vmatprep.subr.bf16.mxu0 0
  %2822 = vmatpush1.bf16.msra.mxu0 0
  %2823 = vmatprep.subr.bf16.mxu0 0
  %2824 = vmatpush1.bf16.msra.mxu0 0
  %2825 = vmatprep.subr.bf16.mxu0 0
  %2826 = vmatpush1.bf16.msra.mxu0 0
  %2827 = vmatprep.subr.bf16.mxu0 0
  %2828 = vmatpush1.bf16.msra.mxu0 0
  %2829 = vmatprep.subr.bf16.mxu0 0
  %2830 = vmatpush1.bf16.msra.mxu0 0
  %2831 = vmatprep.subr.bf16.mxu0 0
  %2832 = vmatpush1.bf16.msra.mxu0 0
  %2833 = vmatprep.subr.bf16.mxu0 0
  %2834 = vmatpush1.bf16.msra.mxu0 0
  %2835 = vmatprep.subr.bf16.mxu0 0
  %2836 = vmatpush1.bf16.msra.mxu0 0
  %2837 = vmatprep.subr.bf16.mxu0 0
  %2838 = vmatpush1.bf16.msra.mxu0 0
  %2839 = vmatprep.subr.bf16.mxu0 0
  %2840 = vmatpush1.bf16.msra.mxu0 0
  %2841 = vmatprep.mubr.bf16.mxu0 0
  %2842 = vmatmul.mubr.bf16.gmra.mrb[0].mxu0 %v2807
  %v2843 = vpop.f32.mrb[0].mxu0
  %v2844 = vadd.f32 %v2780, %v2843
  %v2845 = vpop.f32.mrb[0].mxu0
  %v2846 = vpop.f32.mrb[0].mxu0
  %v2847 = vpop.f32.mrb[0].mxu0
  %2848 = vdwg.mxu0
  %v2849 = vtanh.pop %v2844
  %v2850 = vmul.f32 %v2849, 4.0
  %v2851 = vadd.f32 %v2850, 0.0
  %2853 = vset.pattern.permute.xlu0 0
  %2854 = vperm.xlu0 %2853, %v2523
  %v2855 = vpop.permute.xlu0 %2854
  %v2857 = vmul.f32 %v2855, %v2844
  %v2858 = vadd.f32 %v2469, %v2857
  %s2859 = scalar_lea.vmem %s3, 40
  %v2860 = vld [vmem:[%s2859] sm:$0xff]
  %v2861 = vmul.f32 %v2851, 0.5
  %v2862 = vmul.f32 %v2861, 1.442695
  %v2863 = vpow.pop %v2862
  %2865 = vset.pattern.permute.xlu0 0
  %2866 = vperm.xlu0 %2865, %v2860
  %v2867 = vpop.permute.xlu0 %2866
  %v2869 = vmul.f32 %v2867, %v2863
  %2871 = vrot.lane.b32.xlu0 %v2521, 4
  %v2872 = vpop.permute.xlu0 %2871
  %v2874 = vmul.f32 %v2869, %v2872
  %2876 = vrot.lane.b32.xlu0 %v2874, 124
  %v2877 = vpop.permute.xlu0 %2876
  %v2879 = vadd.f32 %v2858, %v2877
  %s2880 = scalar_lea.vmem %s4, 40
  %v2881 = vld [vmem:[%s2880] sm:$0xff]
  %v2882 = vmul.f32 %v2521, %v2521
  %2884 = vrot.lane.b32.xlu0 %v2851, 124
  %v2885 = vpop.permute.xlu0 %2884
  %v2887 = vadd.f32 %v2882, %v2885
  %v2888 = vsel %vm512, %v2887, 0.0
  %2889 = vadd.xlane.f32.xlu0 %v2888
  %v2890 = vpop.xlane.xlu0 %2889
  %v2891 = vmul.f32 %v2890, 0.5
  %v2892 = vsub.f32 %v2881, %v2891
  %s2893 = scalar_lea.vmem %s5, 40
  %v2894 = vld [vmem:[%s2893] sm:$0xff]
  %2896 = vset.pattern.permute.xlu0 0
  %2897 = vperm.xlu0 %2896, %v2894
  %v2898 = vpop.permute.xlu0 %2897
  %v2900 = vmul.f32 %v2879, %v2898
  %v2901 = vsub.f32 %v2469, %v2900
  %s2902 = scalar_lea.vmem %s6, 40
  %v2903 = vld [vmem:[%s2902] sm:$0xff]
  %2905 = vset.pattern.permute.xlu0 0
  %2906 = vperm.xlu0 %2905, %v2903
  %v2907 = vpop.permute.xlu0 %2906
  %v2909 = vmul.f32 %v2901, %v2907
  %s2910 = scalar_lea.vmem %s7, 40
  %v2911 = vld [vmem:[%s2910] sm:$0xff]
  %v2912 = vmul.f32 %v2909, %v2909
  %v2913 = vsel %vm512, %v2912, 0.0
  %2914 = vadd.xlane.f32.xlu0 %v2913
  %v2915 = vpop.xlane.xlu0 %2914
  %v2916 = vmul.f32 %v2915, 0.5
  %v2917 = vsub.f32 %v2911, %v2916
  %2919 = vrot.lane.b32.xlu0 %v2892, 4
  %v2920 = vpop.permute.xlu0 %2919
  %2923 = vrot.lane.b32.xlu0 %v2917, 5
  %v2924 = vpop.permute.xlu0 %2923
  %v2926 = vsel %vm512, %v2879, %v2920
  %v2927 = vsel %vm876, %v2926, %v2924
  %s2928 = scalar_lea.vmem %s22, 40
  %2929 = vst.msk [vmem:[%s2928] sm:$0xff] %vm878, %v2927
  %s2930 = scalar_lea.vmem %s1, 48
  %v2931 = vld [vmem:[%s2930] sm:$0xff]
  %s2932 = scalar_lea.vmem %s2, 48
  %v2933 = vld [vmem:[%s2932] sm:$0xff]
  %v2934 = vld [vmem:[#allocation2 + $0x30] sm:$0xff]
  %v2935 = vpack.c.bf16 %v2879, %v2879
  %v2936 = vld [vmem:[%s15] sm:$0x3]
  %v2937 = vld [vmem:[%s16] sm:$0x1]
  %v2939 = vlaneseq
  %v2940 = vshrl.u32 %v2939, 7
  %v2941 = vsub.s32 0, %v2940
  %v2942 = vrot.slane %v2937, %v2941
  %v2945 = vsel %vm512, %v2935, 0
  %v2948 = vsel %vm516, %v2936, 0
  %2950 = vmatprep.subr.bf16.mxu0 0
  %2951 = vmatpush1.bf16.msra.mxu0 %v2948
  %2952 = vmatprep.subr.bf16.mxu0 0
  %2953 = vmatpush1.bf16.msra.mxu0 0
  %2954 = vmatprep.subr.bf16.mxu0 0
  %2955 = vmatpush1.bf16.msra.mxu0 0
  %2956 = vmatprep.subr.bf16.mxu0 0
  %2957 = vmatpush1.bf16.msra.mxu0 0
  %2958 = vmatprep.subr.bf16.mxu0 0
  %2959 = vmatpush1.bf16.msra.mxu0 0
  %2960 = vmatprep.subr.bf16.mxu0 0
  %2961 = vmatpush1.bf16.msra.mxu0 0
  %2962 = vmatprep.subr.bf16.mxu0 0
  %2963 = vmatpush1.bf16.msra.mxu0 0
  %2964 = vmatprep.subr.bf16.mxu0 0
  %2965 = vmatpush1.bf16.msra.mxu0 0
  %2966 = vmatprep.subr.bf16.mxu0 0
  %2967 = vmatpush1.bf16.msra.mxu0 0
  %2968 = vmatprep.subr.bf16.mxu0 0
  %2969 = vmatpush1.bf16.msra.mxu0 0
  %2970 = vmatprep.subr.bf16.mxu0 0
  %2971 = vmatpush1.bf16.msra.mxu0 0
  %2972 = vmatprep.subr.bf16.mxu0 0
  %2973 = vmatpush1.bf16.msra.mxu0 0
  %2974 = vmatprep.subr.bf16.mxu0 0
  %2975 = vmatpush1.bf16.msra.mxu0 0
  %2976 = vmatprep.subr.bf16.mxu0 0
  %2977 = vmatpush1.bf16.msra.mxu0 0
  %2978 = vmatprep.subr.bf16.mxu0 0
  %2979 = vmatpush1.bf16.msra.mxu0 0
  %2980 = vmatprep.subr.bf16.mxu0 0
  %2981 = vmatpush1.bf16.msra.mxu0 0
  %2982 = vmatprep.mubr.bf16.mxu0 0
  %2983 = vmatmul.mubr.bf16.gmra.mrb[0].mxu0 %v2945
  %v2984 = vpop.f32.mrb[0].mxu0
  %v2985 = vadd.f32 %v2942, %v2984
  %v2986 = vpop.f32.mrb[0].mxu0
  %v2987 = vpop.f32.mrb[0].mxu0
  %v2988 = vpop.f32.mrb[0].mxu0
  %2989 = vdwg.mxu0
  %v2990 = vmul.f32 %v2985, 0.5
  %v2991 = vmul.f32 %v2985, 0.044715
  %v2992 = vmul.f32 %v2991, %v2985
  %v2993 = vmul.f32 %v2992, %v2985
  %v2994 = vadd.f32 %v2985, %v2993
  %v2995 = vmul.f32 %v2994, 0.7978846
  %v2996 = vtanh.pop %v2995
  %v2997 = vadd.f32 %v2996, 1.0
  %v2998 = vmul.f32 %v2990, %v2997
  %v2999 = vpack.c.bf16 %v2998, %v2998
  %v3000 = vld [vmem:[%s17] sm:$0xf]
  %v3001 = vld [vmem:[%s17 + $0x4] sm:$0xf]
  %v3002 = vld [vmem:[%s17 + $0x8] sm:$0xf]
  %v3003 = vld [vmem:[%s17 + $0xc] sm:$0xf]
  %v3004 = vld [vmem:[%s17 + $0x10] sm:$0xf]
  %v3005 = vld [vmem:[%s17 + $0x14] sm:$0xf]
  %v3006 = vld [vmem:[%s17 + $0x18] sm:$0xf]
  %v3007 = vld [vmem:[%s17 + $0x1c] sm:$0xf]
  %v3016 = vunpack.c.l.b16 %v3000
  %v3017 = vunpack.c.l.b16 %v3001
  %v3018 = vunpack.c.l.b16 %v3002
  %v3019 = vunpack.c.l.b16 %v3003
  %v3020 = vunpack.c.l.b16 %v3004
  %v3021 = vunpack.c.l.b16 %v3005
  %v3022 = vunpack.c.l.b16 %v3006
  %v3023 = vunpack.c.l.b16 %v3007
  %v3024 = vpack.c.b16 %v3017, %v3016
  %v3025 = vpack.c.b16 %v3019, %v3018
  %v3026 = vpack.c.b16 %v3021, %v3020
  %v3027 = vpack.c.b16 %v3023, %v3022
  %v3033 = vsel %vm308, %v2999, 0
  %3035 = vmatprep.subr.bf16.mxu0 0
  %3036 = vmatpush1.bf16.msra.mxu0 %v3024
  %3037 = vmatprep.subr.bf16.mxu0 0
  %3038 = vmatpush1.bf16.msra.mxu0 %v3025
  %3039 = vmatprep.subr.bf16.mxu0 0
  %3040 = vmatpush1.bf16.msra.mxu0 %v3026
  %3041 = vmatprep.subr.bf16.mxu0 0
  %3042 = vmatpush1.bf16.msra.mxu0 %v3027
  %3043 = vmatprep.subr.bf16.mxu0 0
  %3044 = vmatpush1.bf16.msra.mxu0 0
  %3045 = vmatprep.subr.bf16.mxu0 0
  %3046 = vmatpush1.bf16.msra.mxu0 0
  %3047 = vmatprep.subr.bf16.mxu0 0
  %3048 = vmatpush1.bf16.msra.mxu0 0
  %3049 = vmatprep.subr.bf16.mxu0 0
  %3050 = vmatpush1.bf16.msra.mxu0 0
  %3051 = vmatprep.subr.bf16.mxu0 0
  %3052 = vmatpush1.bf16.msra.mxu0 0
  %3053 = vmatprep.subr.bf16.mxu0 0
  %3054 = vmatpush1.bf16.msra.mxu0 0
  %3055 = vmatprep.subr.bf16.mxu0 0
  %3056 = vmatpush1.bf16.msra.mxu0 0
  %3057 = vmatprep.subr.bf16.mxu0 0
  %3058 = vmatpush1.bf16.msra.mxu0 0
  %3059 = vmatprep.subr.bf16.mxu0 0
  %3060 = vmatpush1.bf16.msra.mxu0 0
  %3061 = vmatprep.subr.bf16.mxu0 0
  %3062 = vmatpush1.bf16.msra.mxu0 0
  %3063 = vmatprep.subr.bf16.mxu0 0
  %3064 = vmatpush1.bf16.msra.mxu0 0
  %3065 = vmatprep.subr.bf16.mxu0 0
  %3066 = vmatpush1.bf16.msra.mxu0 0
  %3067 = vmatprep.mubr.bf16.mxu0 0
  %3068 = vmatmul.mubr.bf16.gmra.mrb[0].mxu0 %v3033
  %v3069 = vpop.f32.mrb[0].mxu0
  %v3070 = vadd.f32 %v2934, %v3069
  %v3071 = vpop.f32.mrb[0].mxu0
  %v3072 = vpop.f32.mrb[0].mxu0
  %v3073 = vpop.f32.mrb[0].mxu0
  %3074 = vdwg.mxu0
  %v3075 = vmul.f32 %v3070, 0.5
  %v3076 = vmul.f32 %v3070, 0.044715
  %v3077 = vmul.f32 %v3076, %v3070
  %v3078 = vmul.f32 %v3077, %v3070
  %v3079 = vadd.f32 %v3070, %v3078
  %v3080 = vmul.f32 %v3079, 0.7978846
  %v3081 = vtanh.pop %v3080
  %v3082 = vadd.f32 %v3081, 1.0
  %v3083 = vmul.f32 %v3075, %v3082
  %v3084 = vpack.c.bf16 %v3083, %v3083
  %v3085 = vld [vmem:[%s18] sm:$0xf]
  %v3086 = vld [vmem:[%s18 + $0x4] sm:$0xf]
  %v3087 = vld [vmem:[%s18 + $0x8] sm:$0xf]
  %v3088 = vld [vmem:[%s18 + $0xc] sm:$0xf]
  %v3089 = vld [vmem:[%s18 + $0x10] sm:$0xf]
  %v3090 = vld [vmem:[%s18 + $0x14] sm:$0xf]
  %v3091 = vld [vmem:[%s18 + $0x18] sm:$0xf]
  %v3092 = vld [vmem:[%s18 + $0x1c] sm:$0xf]
  %v3093 = vld [vmem:[%s19] sm:$0x1]
  %v3095 = vlaneseq
  %v3096 = vshrl.u32 %v3095, 7
  %v3097 = vsub.s32 0, %v3096
  %v3098 = vrot.slane %v3093, %v3097
  %v3108 = vunpack.c.l.b16 %v3085
  %v3109 = vunpack.c.l.b16 %v3086
  %v3110 = vunpack.c.l.b16 %v3087
  %v3111 = vunpack.c.l.b16 %v3088
  %v3112 = vunpack.c.l.b16 %v3089
  %v3113 = vunpack.c.l.b16 %v3090
  %v3114 = vunpack.c.l.b16 %v3091
  %v3115 = vunpack.c.l.b16 %v3092
  %v3116 = vpack.c.b16 %v3109, %v3108
  %v3117 = vpack.c.b16 %v3111, %v3110
  %v3118 = vpack.c.b16 %v3113, %v3112
  %v3119 = vpack.c.b16 %v3115, %v3114
  %v3125 = vsel %vm308, %v3084, 0
  %3127 = vmatprep.subr.bf16.mxu0 0
  %3128 = vmatpush1.bf16.msra.mxu0 %v3116
  %3129 = vmatprep.subr.bf16.mxu0 0
  %3130 = vmatpush1.bf16.msra.mxu0 %v3117
  %3131 = vmatprep.subr.bf16.mxu0 0
  %3132 = vmatpush1.bf16.msra.mxu0 %v3118
  %3133 = vmatprep.subr.bf16.mxu0 0
  %3134 = vmatpush1.bf16.msra.mxu0 %v3119
  %3135 = vmatprep.subr.bf16.mxu0 0
  %3136 = vmatpush1.bf16.msra.mxu0 0
  %3137 = vmatprep.subr.bf16.mxu0 0
  %3138 = vmatpush1.bf16.msra.mxu0 0
  %3139 = vmatprep.subr.bf16.mxu0 0
  %3140 = vmatpush1.bf16.msra.mxu0 0
  %3141 = vmatprep.subr.bf16.mxu0 0
  %3142 = vmatpush1.bf16.msra.mxu0 0
  %3143 = vmatprep.subr.bf16.mxu0 0
  %3144 = vmatpush1.bf16.msra.mxu0 0
  %3145 = vmatprep.subr.bf16.mxu0 0
  %3146 = vmatpush1.bf16.msra.mxu0 0
  %3147 = vmatprep.subr.bf16.mxu0 0
  %3148 = vmatpush1.bf16.msra.mxu0 0
  %3149 = vmatprep.subr.bf16.mxu0 0
  %3150 = vmatpush1.bf16.msra.mxu0 0
  %3151 = vmatprep.subr.bf16.mxu0 0
  %3152 = vmatpush1.bf16.msra.mxu0 0
  %3153 = vmatprep.subr.bf16.mxu0 0
  %3154 = vmatpush1.bf16.msra.mxu0 0
  %3155 = vmatprep.subr.bf16.mxu0 0
  %3156 = vmatpush1.bf16.msra.mxu0 0
  %3157 = vmatprep.subr.bf16.mxu0 0
  %3158 = vmatpush1.bf16.msra.mxu0 0
  %3159 = vmatprep.mubr.bf16.mxu0 0
  %3160 = vmatmul.mubr.bf16.gmra.mrb[0].mxu0 %v3125
  %v3161 = vpop.f32.mrb[0].mxu0
  %v3162 = vadd.f32 %v3098, %v3161
  %v3163 = vpop.f32.mrb[0].mxu0
  %v3164 = vpop.f32.mrb[0].mxu0
  %v3165 = vpop.f32.mrb[0].mxu0
  %3166 = vdwg.mxu0
  %v3167 = vmul.f32 %v3162, 0.5
  %v3168 = vmul.f32 %v3162, 0.044715
  %v3169 = vmul.f32 %v3168, %v3162
  %v3170 = vmul.f32 %v3169, %v3162
  %v3171 = vadd.f32 %v3162, %v3170
  %v3172 = vmul.f32 %v3171, 0.7978846
  %v3173 = vtanh.pop %v3172
  %v3174 = vadd.f32 %v3173, 1.0
  %v3175 = vmul.f32 %v3167, %v3174
  %v3176 = vpack.c.bf16 %v3175, %v3175
  %v3177 = vld [vmem:[%s20] sm:$0xf]
  %v3178 = vld [vmem:[%s20 + $0x4] sm:$0xf]
  %v3179 = vld [vmem:[%s20 + $0x8] sm:$0xf]
  %v3180 = vld [vmem:[%s20 + $0xc] sm:$0xf]
  %v3181 = vld [vmem:[%s20 + $0x10] sm:$0xf]
  %v3182 = vld [vmem:[%s20 + $0x14] sm:$0xf]
  %v3183 = vld [vmem:[%s20 + $0x18] sm:$0xf]
  %v3184 = vld [vmem:[%s20 + $0x1c] sm:$0xf]
  %v3185 = vld [vmem:[%s21] sm:$0x1]
  %v3187 = vlaneseq
  %v3188 = vshrl.u32 %v3187, 7
  %v3189 = vsub.s32 0, %v3188
  %v3190 = vrot.slane %v3185, %v3189
  %v3200 = vunpack.c.l.b16 %v3177
  %v3201 = vunpack.c.l.b16 %v3178
  %v3202 = vunpack.c.l.b16 %v3179
  %v3203 = vunpack.c.l.b16 %v3180
  %v3204 = vunpack.c.l.b16 %v3181
  %v3205 = vunpack.c.l.b16 %v3182
  %v3206 = vunpack.c.l.b16 %v3183
  %v3207 = vunpack.c.l.b16 %v3184
  %v3208 = vpack.c.b16 %v3201, %v3200
  %v3209 = vpack.c.b16 %v3203, %v3202
  %v3210 = vpack.c.b16 %v3205, %v3204
  %v3211 = vpack.c.b16 %v3207, %v3206
  %v3217 = vsel %vm308, %v3176, 0
  %3219 = vmatprep.subr.bf16.mxu0 0
  %3220 = vmatpush1.bf16.msra.mxu0 %v3208
  %3221 = vmatprep.subr.bf16.mxu0 0
  %3222 = vmatpush1.bf16.msra.mxu0 %v3209
  %3223 = vmatprep.subr.bf16.mxu0 0
  %3224 = vmatpush1.bf16.msra.mxu0 %v3210
  %3225 = vmatprep.subr.bf16.mxu0 0
  %3226 = vmatpush1.bf16.msra.mxu0 %v3211
  %3227 = vmatprep.subr.bf16.mxu0 0
  %3228 = vmatpush1.bf16.msra.mxu0 0
  %3229 = vmatprep.subr.bf16.mxu0 0
  %3230 = vmatpush1.bf16.msra.mxu0 0
  %3231 = vmatprep.subr.bf16.mxu0 0
  %3232 = vmatpush1.bf16.msra.mxu0 0
  %3233 = vmatprep.subr.bf16.mxu0 0
  %3234 = vmatpush1.bf16.msra.mxu0 0
  %3235 = vmatprep.subr.bf16.mxu0 0
  %3236 = vmatpush1.bf16.msra.mxu0 0
  %3237 = vmatprep.subr.bf16.mxu0 0
  %3238 = vmatpush1.bf16.msra.mxu0 0
  %3239 = vmatprep.subr.bf16.mxu0 0
  %3240 = vmatpush1.bf16.msra.mxu0 0
  %3241 = vmatprep.subr.bf16.mxu0 0
  %3242 = vmatpush1.bf16.msra.mxu0 0
  %3243 = vmatprep.subr.bf16.mxu0 0
  %3244 = vmatpush1.bf16.msra.mxu0 0
  %3245 = vmatprep.subr.bf16.mxu0 0
  %3246 = vmatpush1.bf16.msra.mxu0 0
  %3247 = vmatprep.subr.bf16.mxu0 0
  %3248 = vmatpush1.bf16.msra.mxu0 0
  %3249 = vmatprep.subr.bf16.mxu0 0
  %3250 = vmatpush1.bf16.msra.mxu0 0
  %3251 = vmatprep.mubr.bf16.mxu0 0
  %3252 = vmatmul.mubr.bf16.gmra.mrb[0].mxu0 %v3217
  %v3253 = vpop.f32.mrb[0].mxu0
  %v3254 = vadd.f32 %v3190, %v3253
  %v3255 = vpop.f32.mrb[0].mxu0
  %v3256 = vpop.f32.mrb[0].mxu0
  %v3257 = vpop.f32.mrb[0].mxu0
  %3258 = vdwg.mxu0
  %v3259 = vtanh.pop %v3254
  %v3260 = vmul.f32 %v3259, 4.0
  %v3261 = vadd.f32 %v3260, 0.0
  %3263 = vset.pattern.permute.xlu0 0
  %3264 = vperm.xlu0 %3263, %v2933
  %v3265 = vpop.permute.xlu0 %3264
  %v3267 = vmul.f32 %v3265, %v3254
  %v3268 = vadd.f32 %v2879, %v3267
  %s3269 = scalar_lea.vmem %s3, 48
  %v3270 = vld [vmem:[%s3269] sm:$0xff]
  %v3271 = vmul.f32 %v3261, 0.5
  %v3272 = vmul.f32 %v3271, 1.442695
  %v3273 = vpow.pop %v3272
  %3275 = vset.pattern.permute.xlu0 0
  %3276 = vperm.xlu0 %3275, %v3270
  %v3277 = vpop.permute.xlu0 %3276
  %v3279 = vmul.f32 %v3277, %v3273
  %3281 = vrot.lane.b32.xlu0 %v2931, 4
  %v3282 = vpop.permute.xlu0 %3281
  %v3284 = vmul.f32 %v3279, %v3282
  %3286 = vrot.lane.b32.xlu0 %v3284, 124
  %v3287 = vpop.permute.xlu0 %3286
  %v3289 = vadd.f32 %v3268, %v3287
  %s3290 = scalar_lea.vmem %s4, 48
  %v3291 = vld [vmem:[%s3290] sm:$0xff]
  %v3292 = vmul.f32 %v2931, %v2931
  %3294 = vrot.lane.b32.xlu0 %v3261, 124
  %v3295 = vpop.permute.xlu0 %3294
  %v3297 = vadd.f32 %v3292, %v3295
  %v3298 = vsel %vm512, %v3297, 0.0
  %3299 = vadd.xlane.f32.xlu0 %v3298
  %v3300 = vpop.xlane.xlu0 %3299
  %v3301 = vmul.f32 %v3300, 0.5
  %v3302 = vsub.f32 %v3291, %v3301
  %s3303 = scalar_lea.vmem %s5, 48
  %v3304 = vld [vmem:[%s3303] sm:$0xff]
  %3306 = vset.pattern.permute.xlu0 0
  %3307 = vperm.xlu0 %3306, %v3304
  %v3308 = vpop.permute.xlu0 %3307
  %v3310 = vmul.f32 %v3289, %v3308
  %v3311 = vsub.f32 %v2879, %v3310
  %s3312 = scalar_lea.vmem %s6, 48
  %v3313 = vld [vmem:[%s3312] sm:$0xff]
  %3315 = vset.pattern.permute.xlu0 0
  %3316 = vperm.xlu0 %3315, %v3313
  %v3317 = vpop.permute.xlu0 %3316
  %v3319 = vmul.f32 %v3311, %v3317
  %s3320 = scalar_lea.vmem %s7, 48
  %v3321 = vld [vmem:[%s3320] sm:$0xff]
  %v3322 = vmul.f32 %v3319, %v3319
  %v3323 = vsel %vm512, %v3322, 0.0
  %3324 = vadd.xlane.f32.xlu0 %v3323
  %v3325 = vpop.xlane.xlu0 %3324
  %v3326 = vmul.f32 %v3325, 0.5
  %v3327 = vsub.f32 %v3321, %v3326
  %3329 = vrot.lane.b32.xlu0 %v3302, 4
  %v3330 = vpop.permute.xlu0 %3329
  %3333 = vrot.lane.b32.xlu0 %v3327, 5
  %v3334 = vpop.permute.xlu0 %3333
  %v3336 = vsel %vm512, %v3289, %v3330
  %v3337 = vsel %vm876, %v3336, %v3334
  %s3338 = scalar_lea.vmem %s22, 48
  %3339 = vst.msk [vmem:[%s3338] sm:$0xff] %vm878, %v3337
  %s3340 = scalar_lea.vmem %s1, 56
  %v3341 = vld [vmem:[%s3340] sm:$0xff]
  %s3342 = scalar_lea.vmem %s2, 56
  %v3343 = vld [vmem:[%s3342] sm:$0xff]
  %v3344 = vld [vmem:[#allocation2 + $0x38] sm:$0xff]
  %v3345 = vpack.c.bf16 %v3289, %v3289
  %v3346 = vld [vmem:[%s15] sm:$0x3]
  %v3347 = vld [vmem:[%s16] sm:$0x1]
  %v3349 = vlaneseq
  %v3350 = vshrl.u32 %v3349, 7
  %v3351 = vsub.s32 0, %v3350
  %v3352 = vrot.slane %v3347, %v3351
  %v3355 = vsel %vm512, %v3345, 0
  %v3358 = vsel %vm516, %v3346, 0
  %3360 = vmatprep.subr.bf16.mxu0 0
  %3361 = vmatpush1.bf16.msra.mxu0 %v3358
  %3362 = vmatprep.subr.bf16.mxu0 0
  %3363 = vmatpush1.bf16.msra.mxu0 0
  %3364 = vmatprep.subr.bf16.mxu0 0
  %3365 = vmatpush1.bf16.msra.mxu0 0
  %3366 = vmatprep.subr.bf16.mxu0 0
  %3367 = vmatpush1.bf16.msra.mxu0 0
  %3368 = vmatprep.subr.bf16.mxu0 0
  %3369 = vmatpush1.bf16.msra.mxu0 0
  %3370 = vmatprep.subr.bf16.mxu0 0
  %3371 = vmatpush1.bf16.msra.mxu0 0
  %3372 = vmatprep.subr.bf16.mxu0 0
  %3373 = vmatpush1.bf16.msra.mxu0 0
  %3374 = vmatprep.subr.bf16.mxu0 0
  %3375 = vmatpush1.bf16.msra.mxu0 0
  %3376 = vmatprep.subr.bf16.mxu0 0
  %3377 = vmatpush1.bf16.msra.mxu0 0
  %3378 = vmatprep.subr.bf16.mxu0 0
  %3379 = vmatpush1.bf16.msra.mxu0 0
  %3380 = vmatprep.subr.bf16.mxu0 0
  %3381 = vmatpush1.bf16.msra.mxu0 0
  %3382 = vmatprep.subr.bf16.mxu0 0
  %3383 = vmatpush1.bf16.msra.mxu0 0
  %3384 = vmatprep.subr.bf16.mxu0 0
  %3385 = vmatpush1.bf16.msra.mxu0 0
  %3386 = vmatprep.subr.bf16.mxu0 0
  %3387 = vmatpush1.bf16.msra.mxu0 0
  %3388 = vmatprep.subr.bf16.mxu0 0
  %3389 = vmatpush1.bf16.msra.mxu0 0
  %3390 = vmatprep.subr.bf16.mxu0 0
  %3391 = vmatpush1.bf16.msra.mxu0 0
  %3392 = vmatprep.mubr.bf16.mxu0 0
  %3393 = vmatmul.mubr.bf16.gmra.mrb[0].mxu0 %v3355
  %v3394 = vpop.f32.mrb[0].mxu0
  %v3395 = vadd.f32 %v3352, %v3394
  %v3396 = vpop.f32.mrb[0].mxu0
  %v3397 = vpop.f32.mrb[0].mxu0
  %v3398 = vpop.f32.mrb[0].mxu0
  %3399 = vdwg.mxu0
  %v3400 = vmul.f32 %v3395, 0.5
  %v3401 = vmul.f32 %v3395, 0.044715
  %v3402 = vmul.f32 %v3401, %v3395
  %v3403 = vmul.f32 %v3402, %v3395
  %v3404 = vadd.f32 %v3395, %v3403
  %v3405 = vmul.f32 %v3404, 0.7978846
  %v3406 = vtanh.pop %v3405
  %v3407 = vadd.f32 %v3406, 1.0
  %v3408 = vmul.f32 %v3400, %v3407
  %v3409 = vpack.c.bf16 %v3408, %v3408
  %v3410 = vld [vmem:[%s17] sm:$0xf]
  %v3411 = vld [vmem:[%s17 + $0x4] sm:$0xf]
  %v3412 = vld [vmem:[%s17 + $0x8] sm:$0xf]
  %v3413 = vld [vmem:[%s17 + $0xc] sm:$0xf]
  %v3414 = vld [vmem:[%s17 + $0x10] sm:$0xf]
  %v3415 = vld [vmem:[%s17 + $0x14] sm:$0xf]
  %v3416 = vld [vmem:[%s17 + $0x18] sm:$0xf]
  %v3417 = vld [vmem:[%s17 + $0x1c] sm:$0xf]
  %v3426 = vunpack.c.l.b16 %v3410
  %v3427 = vunpack.c.l.b16 %v3411
  %v3428 = vunpack.c.l.b16 %v3412
  %v3429 = vunpack.c.l.b16 %v3413
  %v3430 = vunpack.c.l.b16 %v3414
  %v3431 = vunpack.c.l.b16 %v3415
  %v3432 = vunpack.c.l.b16 %v3416
  %v3433 = vunpack.c.l.b16 %v3417
  %v3434 = vpack.c.b16 %v3427, %v3426
  %v3435 = vpack.c.b16 %v3429, %v3428
  %v3436 = vpack.c.b16 %v3431, %v3430
  %v3437 = vpack.c.b16 %v3433, %v3432
  %v3443 = vsel %vm308, %v3409, 0
  %3445 = vmatprep.subr.bf16.mxu0 0
  %3446 = vmatpush1.bf16.msra.mxu0 %v3434
  %3447 = vmatprep.subr.bf16.mxu0 0
  %3448 = vmatpush1.bf16.msra.mxu0 %v3435
  %3449 = vmatprep.subr.bf16.mxu0 0
  %3450 = vmatpush1.bf16.msra.mxu0 %v3436
  %3451 = vmatprep.subr.bf16.mxu0 0
  %3452 = vmatpush1.bf16.msra.mxu0 %v3437
  %3453 = vmatprep.subr.bf16.mxu0 0
  %3454 = vmatpush1.bf16.msra.mxu0 0
  %3455 = vmatprep.subr.bf16.mxu0 0
  %3456 = vmatpush1.bf16.msra.mxu0 0
  %3457 = vmatprep.subr.bf16.mxu0 0
  %3458 = vmatpush1.bf16.msra.mxu0 0
  %3459 = vmatprep.subr.bf16.mxu0 0
  %3460 = vmatpush1.bf16.msra.mxu0 0
  %3461 = vmatprep.subr.bf16.mxu0 0
  %3462 = vmatpush1.bf16.msra.mxu0 0
  %3463 = vmatprep.subr.bf16.mxu0 0
  %3464 = vmatpush1.bf16.msra.mxu0 0
  %3465 = vmatprep.subr.bf16.mxu0 0
  %3466 = vmatpush1.bf16.msra.mxu0 0
  %3467 = vmatprep.subr.bf16.mxu0 0
  %3468 = vmatpush1.bf16.msra.mxu0 0
  %3469 = vmatprep.subr.bf16.mxu0 0
  %3470 = vmatpush1.bf16.msra.mxu0 0
  %3471 = vmatprep.subr.bf16.mxu0 0
  %3472 = vmatpush1.bf16.msra.mxu0 0
  %3473 = vmatprep.subr.bf16.mxu0 0
  %3474 = vmatpush1.bf16.msra.mxu0 0
  %3475 = vmatprep.subr.bf16.mxu0 0
  %3476 = vmatpush1.bf16.msra.mxu0 0
  %3477 = vmatprep.mubr.bf16.mxu0 0
  %3478 = vmatmul.mubr.bf16.gmra.mrb[0].mxu0 %v3443
  %v3479 = vpop.f32.mrb[0].mxu0
  %v3480 = vadd.f32 %v3344, %v3479
  %v3481 = vpop.f32.mrb[0].mxu0
  %v3482 = vpop.f32.mrb[0].mxu0
  %v3483 = vpop.f32.mrb[0].mxu0
  %3484 = vdwg.mxu0
  %v3485 = vmul.f32 %v3480, 0.5
  %v3486 = vmul.f32 %v3480, 0.044715
  %v3487 = vmul.f32 %v3486, %v3480
  %v3488 = vmul.f32 %v3487, %v3480
  %v3489 = vadd.f32 %v3480, %v3488
  %v3490 = vmul.f32 %v3489, 0.7978846
  %v3491 = vtanh.pop %v3490
  %v3492 = vadd.f32 %v3491, 1.0
  %v3493 = vmul.f32 %v3485, %v3492
  %v3494 = vpack.c.bf16 %v3493, %v3493
  %v3495 = vld [vmem:[%s18] sm:$0xf]
  %v3496 = vld [vmem:[%s18 + $0x4] sm:$0xf]
  %v3497 = vld [vmem:[%s18 + $0x8] sm:$0xf]
  %v3498 = vld [vmem:[%s18 + $0xc] sm:$0xf]
  %v3499 = vld [vmem:[%s18 + $0x10] sm:$0xf]
  %v3500 = vld [vmem:[%s18 + $0x14] sm:$0xf]
  %v3501 = vld [vmem:[%s18 + $0x18] sm:$0xf]
  %v3502 = vld [vmem:[%s18 + $0x1c] sm:$0xf]
  %v3503 = vld [vmem:[%s19] sm:$0x1]
  %v3505 = vlaneseq
  %v3506 = vshrl.u32 %v3505, 7
  %v3507 = vsub.s32 0, %v3506
  %v3508 = vrot.slane %v3503, %v3507
  %v3518 = vunpack.c.l.b16 %v3495
  %v3519 = vunpack.c.l.b16 %v3496
  %v3520 = vunpack.c.l.b16 %v3497
  %v3521 = vunpack.c.l.b16 %v3498
  %v3522 = vunpack.c.l.b16 %v3499
  %v3523 = vunpack.c.l.b16 %v3500
  %v3524 = vunpack.c.l.b16 %v3501
  %v3525 = vunpack.c.l.b16 %v3502
  %v3526 = vpack.c.b16 %v3519, %v3518
  %v3527 = vpack.c.b16 %v3521, %v3520
  %v3528 = vpack.c.b16 %v3523, %v3522
  %v3529 = vpack.c.b16 %v3525, %v3524
  %v3535 = vsel %vm308, %v3494, 0
  %3537 = vmatprep.subr.bf16.mxu0 0
  %3538 = vmatpush1.bf16.msra.mxu0 %v3526
  %3539 = vmatprep.subr.bf16.mxu0 0
  %3540 = vmatpush1.bf16.msra.mxu0 %v3527
  %3541 = vmatprep.subr.bf16.mxu0 0
  %3542 = vmatpush1.bf16.msra.mxu0 %v3528
  %3543 = vmatprep.subr.bf16.mxu0 0
  %3544 = vmatpush1.bf16.msra.mxu0 %v3529
  %3545 = vmatprep.subr.bf16.mxu0 0
  %3546 = vmatpush1.bf16.msra.mxu0 0
  %3547 = vmatprep.subr.bf16.mxu0 0
  %3548 = vmatpush1.bf16.msra.mxu0 0
  %3549 = vmatprep.subr.bf16.mxu0 0
  %3550 = vmatpush1.bf16.msra.mxu0 0
  %3551 = vmatprep.subr.bf16.mxu0 0
  %3552 = vmatpush1.bf16.msra.mxu0 0
  %3553 = vmatprep.subr.bf16.mxu0 0
  %3554 = vmatpush1.bf16.msra.mxu0 0
  %3555 = vmatprep.subr.bf16.mxu0 0
  %3556 = vmatpush1.bf16.msra.mxu0 0
  %3557 = vmatprep.subr.bf16.mxu0 0
  %3558 = vmatpush1.bf16.msra.mxu0 0
  %3559 = vmatprep.subr.bf16.mxu0 0
  %3560 = vmatpush1.bf16.msra.mxu0 0
  %3561 = vmatprep.subr.bf16.mxu0 0
  %3562 = vmatpush1.bf16.msra.mxu0 0
  %3563 = vmatprep.subr.bf16.mxu0 0
  %3564 = vmatpush1.bf16.msra.mxu0 0
  %3565 = vmatprep.subr.bf16.mxu0 0
  %3566 = vmatpush1.bf16.msra.mxu0 0
  %3567 = vmatprep.subr.bf16.mxu0 0
  %3568 = vmatpush1.bf16.msra.mxu0 0
  %3569 = vmatprep.mubr.bf16.mxu0 0
  %3570 = vmatmul.mubr.bf16.gmra.mrb[0].mxu0 %v3535
  %v3571 = vpop.f32.mrb[0].mxu0
  %v3572 = vadd.f32 %v3508, %v3571
  %v3573 = vpop.f32.mrb[0].mxu0
  %v3574 = vpop.f32.mrb[0].mxu0
  %v3575 = vpop.f32.mrb[0].mxu0
  %3576 = vdwg.mxu0
  %v3577 = vmul.f32 %v3572, 0.5
  %v3578 = vmul.f32 %v3572, 0.044715
  %v3579 = vmul.f32 %v3578, %v3572
  %v3580 = vmul.f32 %v3579, %v3572
  %v3581 = vadd.f32 %v3572, %v3580
  %v3582 = vmul.f32 %v3581, 0.7978846
  %v3583 = vtanh.pop %v3582
  %v3584 = vadd.f32 %v3583, 1.0
  %v3585 = vmul.f32 %v3577, %v3584
  %v3586 = vpack.c.bf16 %v3585, %v3585
  %v3587 = vld [vmem:[%s20] sm:$0xf]
  %v3588 = vld [vmem:[%s20 + $0x4] sm:$0xf]
  %v3589 = vld [vmem:[%s20 + $0x8] sm:$0xf]
  %v3590 = vld [vmem:[%s20 + $0xc] sm:$0xf]
  %v3591 = vld [vmem:[%s20 + $0x10] sm:$0xf]
  %v3592 = vld [vmem:[%s20 + $0x14] sm:$0xf]
  %v3593 = vld [vmem:[%s20 + $0x18] sm:$0xf]
  %v3594 = vld [vmem:[%s20 + $0x1c] sm:$0xf]
  %v3595 = vld [vmem:[%s21] sm:$0x1]
  %v3597 = vlaneseq
  %v3598 = vshrl.u32 %v3597, 7
  %v3599 = vsub.s32 0, %v3598
  %v3600 = vrot.slane %v3595, %v3599
  %v3610 = vunpack.c.l.b16 %v3587
  %v3611 = vunpack.c.l.b16 %v3588
  %v3612 = vunpack.c.l.b16 %v3589
  %v3613 = vunpack.c.l.b16 %v3590
  %v3614 = vunpack.c.l.b16 %v3591
  %v3615 = vunpack.c.l.b16 %v3592
  %v3616 = vunpack.c.l.b16 %v3593
  %v3617 = vunpack.c.l.b16 %v3594
  %v3618 = vpack.c.b16 %v3611, %v3610
  %v3619 = vpack.c.b16 %v3613, %v3612
  %v3620 = vpack.c.b16 %v3615, %v3614
  %v3621 = vpack.c.b16 %v3617, %v3616
  %v3627 = vsel %vm308, %v3586, 0
  %3629 = vmatprep.subr.bf16.mxu0 0
  %3630 = vmatpush1.bf16.msra.mxu0 %v3618
  %3631 = vmatprep.subr.bf16.mxu0 0
  %3632 = vmatpush1.bf16.msra.mxu0 %v3619
  %3633 = vmatprep.subr.bf16.mxu0 0
  %3634 = vmatpush1.bf16.msra.mxu0 %v3620
  %3635 = vmatprep.subr.bf16.mxu0 0
  %3636 = vmatpush1.bf16.msra.mxu0 %v3621
  %3637 = vmatprep.subr.bf16.mxu0 0
  %3638 = vmatpush1.bf16.msra.mxu0 0
  %3639 = vmatprep.subr.bf16.mxu0 0
  %3640 = vmatpush1.bf16.msra.mxu0 0
  %3641 = vmatprep.subr.bf16.mxu0 0
  %3642 = vmatpush1.bf16.msra.mxu0 0
  %3643 = vmatprep.subr.bf16.mxu0 0
  %3644 = vmatpush1.bf16.msra.mxu0 0
  %3645 = vmatprep.subr.bf16.mxu0 0
  %3646 = vmatpush1.bf16.msra.mxu0 0
  %3647 = vmatprep.subr.bf16.mxu0 0
  %3648 = vmatpush1.bf16.msra.mxu0 0
  %3649 = vmatprep.subr.bf16.mxu0 0
  %3650 = vmatpush1.bf16.msra.mxu0 0
  %3651 = vmatprep.subr.bf16.mxu0 0
  %3652 = vmatpush1.bf16.msra.mxu0 0
  %3653 = vmatprep.subr.bf16.mxu0 0
  %3654 = vmatpush1.bf16.msra.mxu0 0
  %3655 = vmatprep.subr.bf16.mxu0 0
  %3656 = vmatpush1.bf16.msra.mxu0 0
  %3657 = vmatprep.subr.bf16.mxu0 0
  %3658 = vmatpush1.bf16.msra.mxu0 0
  %3659 = vmatprep.subr.bf16.mxu0 0
  %3660 = vmatpush1.bf16.msra.mxu0 0
  %3661 = vmatprep.mubr.bf16.mxu0 0
  %3662 = vmatmul.mubr.bf16.gmra.mrb[0].mxu0 %v3627
  %v3663 = vpop.f32.mrb[0].mxu0
  %v3664 = vadd.f32 %v3600, %v3663
  %v3665 = vpop.f32.mrb[0].mxu0
  %v3666 = vpop.f32.mrb[0].mxu0
  %v3667 = vpop.f32.mrb[0].mxu0
  %3668 = vdwg.mxu0
  %v3669 = vtanh.pop %v3664
  %v3670 = vmul.f32 %v3669, 4.0
  %v3671 = vadd.f32 %v3670, 0.0
  %3673 = vset.pattern.permute.xlu0 0
  %3674 = vperm.xlu0 %3673, %v3343
  %v3675 = vpop.permute.xlu0 %3674
  %v3677 = vmul.f32 %v3675, %v3664
  %v3678 = vadd.f32 %v3289, %v3677
  %s3679 = scalar_lea.vmem %s3, 56
  %v3680 = vld [vmem:[%s3679] sm:$0xff]
  %v3681 = vmul.f32 %v3671, 0.5
  %v3682 = vmul.f32 %v3681, 1.442695
  %v3683 = vpow.pop %v3682
  %3685 = vset.pattern.permute.xlu0 0
  %3686 = vperm.xlu0 %3685, %v3680
  %v3687 = vpop.permute.xlu0 %3686
  %v3689 = vmul.f32 %v3687, %v3683
  %3691 = vrot.lane.b32.xlu0 %v3341, 4
  %v3692 = vpop.permute.xlu0 %3691
  %v3694 = vmul.f32 %v3689, %v3692
  %3696 = vrot.lane.b32.xlu0 %v3694, 124
  %v3697 = vpop.permute.xlu0 %3696
  %v3699 = vadd.f32 %v3678, %v3697
  %s3700 = scalar_lea.vmem %s4, 56
  %v3701 = vld [vmem:[%s3700] sm:$0xff]
  %v3702 = vmul.f32 %v3341, %v3341
  %3704 = vrot.lane.b32.xlu0 %v3671, 124
  %v3705 = vpop.permute.xlu0 %3704
  %v3707 = vadd.f32 %v3702, %v3705
  %v3708 = vsel %vm512, %v3707, 0.0
  %3709 = vadd.xlane.f32.xlu0 %v3708
  %v3710 = vpop.xlane.xlu0 %3709
  %v3711 = vmul.f32 %v3710, 0.5
  %v3712 = vsub.f32 %v3701, %v3711
  %s3713 = scalar_lea.vmem %s5, 56
  %v3714 = vld [vmem:[%s3713] sm:$0xff]
  %3716 = vset.pattern.permute.xlu0 0
  %3717 = vperm.xlu0 %3716, %v3714
  %v3718 = vpop.permute.xlu0 %3717
  %v3720 = vmul.f32 %v3699, %v3718
  %v3721 = vsub.f32 %v3289, %v3720
  %s3722 = scalar_lea.vmem %s6, 56
  %v3723 = vld [vmem:[%s3722] sm:$0xff]
  %3725 = vset.pattern.permute.xlu0 0
  %3726 = vperm.xlu0 %3725, %v3723
  %v3727 = vpop.permute.xlu0 %3726
  %v3729 = vmul.f32 %v3721, %v3727
  %s3730 = scalar_lea.vmem %s7, 56
  %v3731 = vld [vmem:[%s3730] sm:$0xff]
  %v3732 = vmul.f32 %v3729, %v3729
  %v3733 = vsel %vm512, %v3732, 0.0
  %3734 = vadd.xlane.f32.xlu0 %v3733
  %v3735 = vpop.xlane.xlu0 %3734
  %v3736 = vmul.f32 %v3735, 0.5
  %v3737 = vsub.f32 %v3731, %v3736
  %3739 = vrot.lane.b32.xlu0 %v3712, 4
  %v3740 = vpop.permute.xlu0 %3739
  %3743 = vrot.lane.b32.xlu0 %v3737, 5
  %v3744 = vpop.permute.xlu0 %3743
  %v3746 = vsel %vm512, %v3699, %v3740
  %v3747 = vsel %vm876, %v3746, %v3744
  %s3748 = scalar_lea.vmem %s22, 56
  %3749 = vst.msk [vmem:[%s3748] sm:$0xff] %vm878, %v3747
  // Predicated region
  $region90: #{tpu_custom_call.1} parent=0 // pred_check
    _
  $region91: #{tpu_custom_call.1} parent=0 // pred_check_branch
    %3751 = sbr.rel (0) target = $region93
  $region92: #{tpu_custom_call.1} parent=0 // pred_region
    _
  $region93: #{tpu_custom_call.1} parent=0 // pred_fallthru
    _
  // Predicated region
  $region94: #{tpu_custom_call.1} parent=0 // pred_check
    _
  $region95: #{tpu_custom_call.1} parent=0 // pred_check_branch
    %3753 = sbr.rel (0) target = $region97
  $region96: #{tpu_custom_call.1} parent=0 // pred_region
    _
  $region97: #{tpu_custom_call.1} parent=0 // pred_fallthru
    _

</llo_original>
